<compile_context>
chip_gen: v5e
topology: v5e:2x2
jax: 0.10.0
libtpu: 0.0.40
codegen_flags: <defaults>
</compile_context>

<pallas_src>
import jax
import jax.numpy as jnp
from jax import lax
from jax.experimental import pallas as pl
from jax.experimental.pallas import tpu as pltpu

D_MODEL = 128
N_HEAD = 4
HEAD_DIM = D_MODEL // N_HEAD
D_FF = 2048            # nn.TransformerEncoderLayer default dim_feedforward
NUM_LAYERS = 2
LN_EPS = 1e-5          # nn.LayerNorm default eps


def _layer_norm(x, gamma, beta):
    mu = jnp.mean(x, axis=-1, keepdims=True)
    var = jnp.mean((x - mu) ** 2, axis=-1, keepdims=True)
    return (x - mu) * jax.lax.rsqrt(var + LN_EPS) * gamma + beta


# ---------------------------------------------------------------------------
# Fused Pallas kernel: grid=(NUM_LAYERS,); one (B*S, D) token slab carried in VMEM
# ---------------------------------------------------------------------------
def _make_kernel(B, S):
    T = B * S

    def kernel(ids_ref,                    # scalar-prefetch (SMEM): (T,) int32 token ids
               emb_ref,                    # (V, D) f32 embedding table (VMEM, loaded once)
               wqkv_ref, bqkv_ref,         # (D, 3D) bf16 / (1, 3D) f32   (per layer)
               wo_ref, bo_ref,             # (D, D) bf16 / (1, D) f32
               ln1g_ref, ln1b_ref,         # (1, D) f32
               w1_ref, b1_ref,             # (D, F) bf16 / (1, F) f32
               w2_ref, b2_ref,             # (F, D) bf16 / (1, D) f32
               ln2g_ref, ln2b_ref,         # (1, D) f32
               fcw_ref, fcb_ref,           # (D, V) bf16 / (1, V) f32 (loaded once)
               out_ref,                    # (T, V) f32, written at last layer step
               x_scr):                     # (T, D) f32 activation carried across layers
        l = pl.program_id(0)

        # --- embedding gather (only on the first layer step) --------------------
        @pl.when(l == 0)
        def _():
            for t in range(T):            # static unroll over 16 tokens
                row = emb_ref[pl.ds(ids_ref[t], 1), :]          # (1, D) dynamic row
                x_scr[pl.ds(t, 1), :] = row

        x = x_scr[...]                                          # (T, D) f32

        # --- fused QKV projection (1/sqrt(head_dim) folded into Q columns) ------
        qkv = jnp.dot(x.astype(jnp.bfloat16), wqkv_ref[...],
                      preferred_element_type=jnp.float32) + bqkv_ref[...]   # (T, 3D)

        # --- attention, per-sequence (sublane-aligned 8-row blocks), bf16 MXU ---
        seq_ctx = []
        for b in range(B):                                      # static unroll
            rs = b * S
            heads = []
            for h in range(N_HEAD):                             # static unroll
                cs = h * HEAD_DIM
                qh = qkv[rs:rs + S, cs:cs + HEAD_DIM].astype(jnp.bfloat16)
                kh = qkv[rs:rs + S, D_MODEL + cs:D_MODEL + cs + HEAD_DIM].astype(jnp.bfloat16)
                vh = qkv[rs:rs + S, 2 * D_MODEL + cs:2 * D_MODEL + cs + HEAD_DIM].astype(jnp.bfloat16)
                # q @ k^T without materializing the transpose (contract last dims)
                s = lax.dot_general(qh, kh, (((1,), (1,)), ((), ())),
                                    preferred_element_type=jnp.float32)     # (S, S)
                s = s - jnp.max(s, axis=-1, keepdims=True)
                p = jnp.exp(s)
                p = p * pl.reciprocal(jnp.sum(p, axis=-1, keepdims=True), approx=True)
                heads.append(jnp.dot(p.astype(jnp.bfloat16), vh,
                                     preferred_element_type=jnp.float32))   # (S, Dh)
            seq_ctx.append(jnp.concatenate(heads, axis=1))      # (S, D) lane concat
        ctx = jnp.concatenate(seq_ctx, axis=0)                  # (T, D)

        # single out-projection matmul for all heads / all sequences
        attn = jnp.dot(ctx.astype(jnp.bfloat16), wo_ref[...],
                       preferred_element_type=jnp.float32) + bo_ref[...]

        # residual + norm1 (post-norm)
        x = _layer_norm(x + attn, ln1g_ref[...], ln1b_ref[...])

        # feed-forward: linear1 -> ReLU -> linear2
        h1 = jnp.dot(x.astype(jnp.bfloat16), w1_ref[...],
                     preferred_element_type=jnp.float32) + b1_ref[...]
        h1 = jnp.maximum(h1, 0.0)
        h2 = jnp.dot(h1.astype(jnp.bfloat16), w2_ref[...],
                     preferred_element_type=jnp.float32) + b2_ref[...]

        # residual + norm2; carry activation to the next layer step
        x = _layer_norm(x + h2, ln2g_ref[...], ln2b_ref[...])
        x_scr[...] = x

        # --- final projection on the last layer step -----------------------------
        @pl.when(l == NUM_LAYERS - 1)
        def _():
            out_ref[...] = (jnp.dot(x.astype(jnp.bfloat16), fcw_ref[...],
                                    preferred_element_type=jnp.float32)
                            + fcb_ref[...])

    return kernel


def fused_forward_pallas(ids_flat, prepped, B, S):
    """ids_flat: (B*S,) int32; prepped: dict from prep_params. Returns (B, S, V) logits."""
    T = B * S
    emb = prepped["embed"]
    layer_stacks = prepped["layers"]            # 12 arrays, each with leading L axis
    fc_w, fc_b = prepped["fc_w"], prepped["fc_b"]
    V = fc_w.shape[1]

    def const_spec(a):                          # loaded once (constant block index)
        return pl.BlockSpec(a.shape, lambda l, ids: (0,) * a.ndim)

    def layer_spec(a):                          # streamed per layer step (double-buffered)
        return pl.BlockSpec((None,) + a.shape[1:], lambda l, ids: (l, 0, 0))

    grid_spec = pltpu.PrefetchScalarGridSpec(
        num_scalar_prefetch=1,
        grid=(NUM_LAYERS,),
        in_specs=[const_spec(emb)]
                 + [layer_spec(w) for w in layer_stacks]
                 + [const_spec(fc_w), const_spec(fc_b)],
        out_specs=pl.BlockSpec((T, V), lambda l, ids: (0, 0)),
        scratch_shapes=[pltpu.VMEM((T, D_MODEL), jnp.float32)],
    )
    out = pl.pallas_call(
        _make_kernel(B, S),
        out_shape=jax.ShapeDtypeStruct((T, V), jnp.float32),
        grid_spec=grid_spec,
        compiler_params=pltpu.CompilerParams(
            dimension_semantics=("arbitrary",)),   # layer axis carries a dependency
    )(ids_flat, emb, *layer_stacks, fc_w, fc_b)
    return out.reshape(B, S, V)


# ---------------------------------------------------------------------------
# Parameters (deterministic, PyTorch shapes) + one-time host-side weight prep
# ---------------------------------------------------------------------------
def init_params(key, vocab_size):
    ks = iter(jax.random.split(key, 32))

    def nrm(shape, scale=0.02):
        return (scale * jax.random.normal(next(ks), shape)).astype(jnp.float32)

    params = {}
    emb = nrm((vocab_size, D_MODEL))
    params["embed_weight"] = emb.at[0].set(0.0)          # padding_idx=0
    layers = []
    for _ in range(NUM_LAYERS):
        layers.append({
            "in_proj_weight": nrm((3 * D_MODEL, D_MODEL)),
            "in_proj_bias": nrm((3 * D_MODEL,)),
            "out_proj_weight": nrm((D_MODEL, D_MODEL)),
            "out_proj_bias": nrm((D_MODEL,)),
            "linear1_weight": nrm((D_FF, D_MODEL)),
            "linear1_bias": nrm((D_FF,)),
            "linear2_weight": nrm((D_MODEL, D_FF)),
            "linear2_bias": nrm((D_MODEL,)),
            "norm1_weight": jnp.ones((D_MODEL,), jnp.float32),
            "norm1_bias": jnp.zeros((D_MODEL,), jnp.float32),
            "norm2_weight": jnp.ones((D_MODEL,), jnp.float32),
            "norm2_bias": jnp.zeros((D_MODEL,), jnp.float32),
        })
    params["layers"] = layers
    params["fc_out_weight"] = nrm((vocab_size, D_MODEL))
    params["fc_out_bias"] = nrm((vocab_size,))
    return params


def prep_params(params):
    """Split/transpose/fuse PyTorch-shaped weights; fold softmax scale into Q; cast matmul
    weights to bf16; stack per-layer weights with a leading L axis for streaming."""
    scale = 1.0 / (HEAD_DIM ** 0.5)
    names = ("wqkv", "bqkv", "wo", "bo", "ln1g", "ln1b",
             "w1", "b1", "w2", "b2", "ln2g", "ln2b")
    acc = {n: [] for n in names}
    r = lambda v: v.reshape(1, -1).astype(jnp.float32)
    for p in params["layers"]:
        wq, wk, wv = jnp.split(p["in_proj_weight"], 3, axis=0)
        bq, bk, bv = jnp.split(p["in_proj_bias"], 3)
        acc["wqkv"].append(jnp.concatenate([wq.T * scale, wk.T, wv.T], axis=1)
                           .astype(jnp.bfloat16))
        acc["bqkv"].append(jnp.concatenate([bq * scale, bk, bv]).reshape(1, -1)
                           .astype(jnp.float32))
        acc["wo"].append(p["out_proj_weight"].T.astype(jnp.bfloat16))
        acc["bo"].append(r(p["out_proj_bias"]))
        acc["ln1g"].append(r(p["norm1_weight"]))
        acc["ln1b"].append(r(p["norm1_bias"]))
        acc["w1"].append(p["linear1_weight"].T.astype(jnp.bfloat16))
        acc["b1"].append(r(p["linear1_bias"]))
        acc["w2"].append(p["linear2_weight"].T.astype(jnp.bfloat16))
        acc["b2"].append(r(p["linear2_bias"]))
        acc["ln2g"].append(r(p["norm2_weight"]))
        acc["ln2b"].append(r(p["norm2_bias"]))
    layer_stacks = tuple(jnp.stack(acc[n], axis=0) for n in names)
    return {
        "embed": params["embed_weight"].astype(jnp.float32),
        "layers": layer_stacks,
        "fc_w": params["fc_out_weight"].T.astype(jnp.bfloat16),
        "fc_b": params["fc_out_bias"].reshape(1, -1).astype(jnp.float32),
    }


@jax.jit
def tiny_transformer_forward(token_ids, prepped):
    B, S = token_ids.shape
    return fused_forward_pallas(token_ids.reshape(-1).astype(jnp.int32), prepped, B, S)


# ---------------------------------------------------------------------------
# Pure-JAX f32 reference (mirrors PyTorch math) for a sanity check
# ---------------------------------------------------------------------------
def _ref_forward(token_ids, params):
    x = jnp.take(params["embed_weight"], token_ids, axis=0)
    B, S, D = x.shape
    for p in params["layers"]:
        wq, wk, wv = jnp.split(p["in_proj_weight"], 3, axis=0)
        bq, bk, bv = jnp.split(p["in_proj_bias"], 3, axis=0)
        q = (x @ wq.T + bq).reshape(B, S, N_HEAD, HEAD_DIM).transpose(0, 2, 1, 3)
        k = (x @ wk.T + bk).reshape(B, S, N_HEAD, HEAD_DIM).transpose(0, 2, 1, 3)
        v = (x @ wv.T + bv).reshape(B, S, N_HEAD, HEAD_DIM).transpose(0, 2, 1, 3)
        s = jnp.einsum("bhqd,bhkd->bhqk", q, k) / (HEAD_DIM ** 0.5)
        a = jax.nn.softmax(s, axis=-1)
        o = jnp.einsum("bhqk,bhkd->bhqd", a, v).transpose(0, 2, 1, 3).reshape(B, S, D)
        o = o @ p["out_proj_weight"].T + p["out_proj_bias"]
        x = _layer_norm(x + o, p["norm1_weight"], p["norm1_bias"])
        h1 = jnp.maximum(x @ p["linear1_weight"].T + p["linear1_bias"], 0.0)
        h2 = h1 @ p["linear2_weight"].T + p["linear2_bias"]
        x = _layer_norm(x + h2, p["norm2_weight"], p["norm2_bias"])
    return x @ params["fc_out_weight"].T + params["fc_out_bias"]


if __name__ == "__main__":
    VOCAB = 128
    B, S = 2, 8
    key = jax.random.PRNGKey(0)
    k_tok, k_par = jax.random.split(key)
    params = init_params(k_par, VOCAB)
    token_ids = jax.random.randint(k_tok, (B, S), 0, VOCAB, dtype=jnp.int32)

    prepped = prep_params(params)                 # one-time host-side weight prep
    logits = tiny_transformer_forward(token_ids, prepped)
    logits = jax.block_until_ready(logits)
    assert logits.shape == (B, S, VOCAB)

    ref = _ref_forward(token_ids, params)
    err = float(jnp.max(jnp.abs(logits - ref)))
    # Tolerance accounts for bf16 matmul weights + bf16 attention operands (f32 accumulation).
    assert err < 2.5e-2, f"mismatch vs f32 reference: {err}"
    print("KERNEL_OK")
</pallas_src>

<mosaic_0001>
module attributes {stable_mosaic.version = 11 : i64} {
  func.func @kernel(%arg0: i32, %arg1: memref<16xi32, #tpu.memory_space<smem>>, %arg2: memref<128x128xf32, #tpu.memory_space<vmem>>, %arg3: memref<1x128x384xbf16, #tpu.memory_space<vmem>>, %arg4: memref<1x1x384xf32, #tpu.memory_space<vmem>>, %arg5: memref<1x128x128xbf16, #tpu.memory_space<vmem>>, %arg6: memref<1x1x128xf32, #tpu.memory_space<vmem>>, %arg7: memref<1x1x128xf32, #tpu.memory_space<vmem>>, %arg8: memref<1x1x128xf32, #tpu.memory_space<vmem>>, %arg9: memref<1x128x2048xbf16, #tpu.memory_space<vmem>>, %arg10: memref<1x1x2048xf32, #tpu.memory_space<vmem>>, %arg11: memref<1x2048x128xbf16, #tpu.memory_space<vmem>>, %arg12: memref<1x1x128xf32, #tpu.memory_space<vmem>>, %arg13: memref<1x1x128xf32, #tpu.memory_space<vmem>>, %arg14: memref<1x1x128xf32, #tpu.memory_space<vmem>>, %arg15: memref<128x128xbf16, #tpu.memory_space<vmem>>, %arg16: memref<1x128xf32, #tpu.memory_space<vmem>>, %arg17: memref<16x128xf32, #tpu.memory_space<vmem>>, %arg18: memref<16x128xf32, #tpu.memory_space<vmem>>) attributes {dimension_semantics = [#tpu.dimension_semantics<arbitrary>], iteration_bounds = array<i64: 2>, scalar_prefetch = 1 : i64, scratch_operands = 1 : i64, tpu.core_type = #tpu.core_type<tc>, window_params = [{pipeline_mode = #tpu.pipeline_mode<synchronous>, transform_indices = @transform_0, window_bounds = array<i64: 128, 128>}, {transform_indices = @transform_1, window_bounds = array<i64: 1, 128, 384>}, {transform_indices = @transform_2, window_bounds = array<i64: 1, 1, 384>}, {transform_indices = @transform_3, window_bounds = array<i64: 1, 128, 128>}, {transform_indices = @transform_4, window_bounds = array<i64: 1, 1, 128>}, {transform_indices = @transform_5, window_bounds = array<i64: 1, 1, 128>}, {transform_indices = @transform_6, window_bounds = array<i64: 1, 1, 128>}, {transform_indices = @transform_7, window_bounds = array<i64: 1, 128, 2048>}, {transform_indices = @transform_8, window_bounds = array<i64: 1, 1, 2048>}, {transform_indices = @transform_9, window_bounds = array<i64: 1, 2048, 128>}, {transform_indices = @transform_10, window_bounds = array<i64: 1, 1, 128>}, {transform_indices = @transform_11, window_bounds = array<i64: 1, 1, 128>}, {transform_indices = @transform_12, window_bounds = array<i64: 1, 1, 128>}, {pipeline_mode = #tpu.pipeline_mode<synchronous>, transform_indices = @transform_13, window_bounds = array<i64: 128, 128>}, {pipeline_mode = #tpu.pipeline_mode<synchronous>, transform_indices = @transform_14, window_bounds = array<i64: 1, 128>}, {pipeline_mode = #tpu.pipeline_mode<synchronous>, transform_indices = @transform_15, window_bounds = array<i64: 16, 128>}]} {
    %c0_i32 = arith.constant 0 : i32
    %0 = arith.cmpi eq, %arg0, %c0_i32 : i32
    %1 = arith.extui %0 : i1 to i32
    %c0_i32_0 = arith.constant 0 : i32
    %2 = arith.cmpi ne, %1, %c0_i32_0 : i32
    scf.if %2 {
      %c0_87 = arith.constant 0 : index
      %251 = memref.load %arg1[%c0_87] : memref<16xi32, #tpu.memory_space<smem>>
      %252 = arith.index_cast %251 : i32 to index
      %c0_88 = arith.constant 0 : index
      %253 = vector.load %arg2[%252, %c0_88] : memref<128x128xf32, #tpu.memory_space<vmem>>, vector<1x128xf32>
      %c0_89 = arith.constant 0 : index
      %c0_90 = arith.constant 0 : index
      %254 = vector.load %arg18[%c0_89, %c0_90] : memref<16x128xf32, #tpu.memory_space<vmem>>, vector<1x128xf32>
      tpu.vector_store %arg18[%c0_89, %c0_90], %253 {strides = array<i32>} : memref<16x128xf32, #tpu.memory_space<vmem>>, vector<1x128xf32>,
      %c1 = arith.constant 1 : index
      %255 = memref.load %arg1[%c1] : memref<16xi32, #tpu.memory_space<smem>>
      %256 = arith.index_cast %255 : i32 to index
      %c0_91 = arith.constant 0 : index
      %257 = vector.load %arg2[%256, %c0_91] : memref<128x128xf32, #tpu.memory_space<vmem>>, vector<1x128xf32>
      %c1_92 = arith.constant 1 : index
      %c0_93 = arith.constant 0 : index
      %258 = vector.load %arg18[%c1_92, %c0_93] : memref<16x128xf32, #tpu.memory_space<vmem>>, vector<1x128xf32>
      tpu.vector_store %arg18[%c1_92, %c0_93], %257 {strides = array<i32>} : memref<16x128xf32, #tpu.memory_space<vmem>>, vector<1x128xf32>,
      %c2 = arith.constant 2 : index
      %259 = memref.load %arg1[%c2] : memref<16xi32, #tpu.memory_space<smem>>
      %260 = arith.index_cast %259 : i32 to index
      %c0_94 = arith.constant 0 : index
      %261 = vector.load %arg2[%260, %c0_94] : memref<128x128xf32, #tpu.memory_space<vmem>>, vector<1x128xf32>
      %c2_95 = arith.constant 2 : index
      %c0_96 = arith.constant 0 : index
      %262 = vector.load %arg18[%c2_95, %c0_96] : memref<16x128xf32, #tpu.memory_space<vmem>>, vector<1x128xf32>
      tpu.vector_store %arg18[%c2_95, %c0_96], %261 {strides = array<i32>} : memref<16x128xf32, #tpu.memory_space<vmem>>, vector<1x128xf32>,
      %c3 = arith.constant 3 : index
      %263 = memref.load %arg1[%c3] : memref<16xi32, #tpu.memory_space<smem>>
      %264 = arith.index_cast %263 : i32 to index
      %c0_97 = arith.constant 0 : index
      %265 = vector.load %arg2[%264, %c0_97] : memref<128x128xf32, #tpu.memory_space<vmem>>, vector<1x128xf32>
      %c3_98 = arith.constant 3 : index
      %c0_99 = arith.constant 0 : index
      %266 = vector.load %arg18[%c3_98, %c0_99] : memref<16x128xf32, #tpu.memory_space<vmem>>, vector<1x128xf32>
      tpu.vector_store %arg18[%c3_98, %c0_99], %265 {strides = array<i32>} : memref<16x128xf32, #tpu.memory_space<vmem>>, vector<1x128xf32>,
      %c4 = arith.constant 4 : index
      %267 = memref.load %arg1[%c4] : memref<16xi32, #tpu.memory_space<smem>>
      %268 = arith.index_cast %267 : i32 to index
      %c0_100 = arith.constant 0 : index
      %269 = vector.load %arg2[%268, %c0_100] : memref<128x128xf32, #tpu.memory_space<vmem>>, vector<1x128xf32>
      %c4_101 = arith.constant 4 : index
      %c0_102 = arith.constant 0 : index
      %270 = vector.load %arg18[%c4_101, %c0_102] : memref<16x128xf32, #tpu.memory_space<vmem>>, vector<1x128xf32>
      tpu.vector_store %arg18[%c4_101, %c0_102], %269 {strides = array<i32>} : memref<16x128xf32, #tpu.memory_space<vmem>>, vector<1x128xf32>,
      %c5 = arith.constant 5 : index
      %271 = memref.load %arg1[%c5] : memref<16xi32, #tpu.memory_space<smem>>
      %272 = arith.index_cast %271 : i32 to index
      %c0_103 = arith.constant 0 : index
      %273 = vector.load %arg2[%272, %c0_103] : memref<128x128xf32, #tpu.memory_space<vmem>>, vector<1x128xf32>
      %c5_104 = arith.constant 5 : index
      %c0_105 = arith.constant 0 : index
      %274 = vector.load %arg18[%c5_104, %c0_105] : memref<16x128xf32, #tpu.memory_space<vmem>>, vector<1x128xf32>
      tpu.vector_store %arg18[%c5_104, %c0_105], %273 {strides = array<i32>} : memref<16x128xf32, #tpu.memory_space<vmem>>, vector<1x128xf32>,
      %c6 = arith.constant 6 : index
      %275 = memref.load %arg1[%c6] : memref<16xi32, #tpu.memory_space<smem>>
      %276 = arith.index_cast %275 : i32 to index
      %c0_106 = arith.constant 0 : index
      %277 = vector.load %arg2[%276, %c0_106] : memref<128x128xf32, #tpu.memory_space<vmem>>, vector<1x128xf32>
      %c6_107 = arith.constant 6 : index
      %c0_108 = arith.constant 0 : index
      %278 = vector.load %arg18[%c6_107, %c0_108] : memref<16x128xf32, #tpu.memory_space<vmem>>, vector<1x128xf32>
      tpu.vector_store %arg18[%c6_107, %c0_108], %277 {strides = array<i32>} : memref<16x128xf32, #tpu.memory_space<vmem>>, vector<1x128xf32>,
      %c7 = arith.constant 7 : index
      %279 = memref.load %arg1[%c7] : memref<16xi32, #tpu.memory_space<smem>>
      %280 = arith.index_cast %279 : i32 to index
      %c0_109 = arith.constant 0 : index
      %281 = vector.load %arg2[%280, %c0_109] : memref<128x128xf32, #tpu.memory_space<vmem>>, vector<1x128xf32>
      %c7_110 = arith.constant 7 : index
      %c0_111 = arith.constant 0 : index
      %282 = vector.load %arg18[%c7_110, %c0_111] : memref<16x128xf32, #tpu.memory_space<vmem>>, vector<1x128xf32>
      tpu.vector_store %arg18[%c7_110, %c0_111], %281 {strides = array<i32>} : memref<16x128xf32, #tpu.memory_space<vmem>>, vector<1x128xf32>,
      %c8 = arith.constant 8 : index
      %283 = memref.load %arg1[%c8] : memref<16xi32, #tpu.memory_space<smem>>
      %284 = arith.index_cast %283 : i32 to index
      %c0_112 = arith.constant 0 : index
      %285 = vector.load %arg2[%284, %c0_112] : memref<128x128xf32, #tpu.memory_space<vmem>>, vector<1x128xf32>
      %c8_113 = arith.constant 8 : index
      %c0_114 = arith.constant 0 : index
      %286 = vector.load %arg18[%c8_113, %c0_114] : memref<16x128xf32, #tpu.memory_space<vmem>>, vector<1x128xf32>
      tpu.vector_store %arg18[%c8_113, %c0_114], %285 {strides = array<i32>} : memref<16x128xf32, #tpu.memory_space<vmem>>, vector<1x128xf32>,
      %c9 = arith.constant 9 : index
      %287 = memref.load %arg1[%c9] : memref<16xi32, #tpu.memory_space<smem>>
      %288 = arith.index_cast %287 : i32 to index
      %c0_115 = arith.constant 0 : index
      %289 = vector.load %arg2[%288, %c0_115] : memref<128x128xf32, #tpu.memory_space<vmem>>, vector<1x128xf32>
      %c9_116 = arith.constant 9 : index
      %c0_117 = arith.constant 0 : index
      %290 = vector.load %arg18[%c9_116, %c0_117] : memref<16x128xf32, #tpu.memory_space<vmem>>, vector<1x128xf32>
      tpu.vector_store %arg18[%c9_116, %c0_117], %289 {strides = array<i32>} : memref<16x128xf32, #tpu.memory_space<vmem>>, vector<1x128xf32>,
      %c10 = arith.constant 10 : index
      %291 = memref.load %arg1[%c10] : memref<16xi32, #tpu.memory_space<smem>>
      %292 = arith.index_cast %291 : i32 to index
      %c0_118 = arith.constant 0 : index
      %293 = vector.load %arg2[%292, %c0_118] : memref<128x128xf32, #tpu.memory_space<vmem>>, vector<1x128xf32>
      %c10_119 = arith.constant 10 : index
      %c0_120 = arith.constant 0 : index
      %294 = vector.load %arg18[%c10_119, %c0_120] : memref<16x128xf32, #tpu.memory_space<vmem>>, vector<1x128xf32>
      tpu.vector_store %arg18[%c10_119, %c0_120], %293 {strides = array<i32>} : memref<16x128xf32, #tpu.memory_space<vmem>>, vector<1x128xf32>,
      %c11 = arith.constant 11 : index
      %295 = memref.load %arg1[%c11] : memref<16xi32, #tpu.memory_space<smem>>
      %296 = arith.index_cast %295 : i32 to index
      %c0_121 = arith.constant 0 : index
      %297 = vector.load %arg2[%296, %c0_121] : memref<128x128xf32, #tpu.memory_space<vmem>>, vector<1x128xf32>
      %c11_122 = arith.constant 11 : index
      %c0_123 = arith.constant 0 : index
      %298 = vector.load %arg18[%c11_122, %c0_123] : memref<16x128xf32, #tpu.memory_space<vmem>>, vector<1x128xf32>
      tpu.vector_store %arg18[%c11_122, %c0_123], %297 {strides = array<i32>} : memref<16x128xf32, #tpu.memory_space<vmem>>, vector<1x128xf32>,
      %c12 = arith.constant 12 : index
      %299 = memref.load %arg1[%c12] : memref<16xi32, #tpu.memory_space<smem>>
      %300 = arith.index_cast %299 : i32 to index
      %c0_124 = arith.constant 0 : index
      %301 = vector.load %arg2[%300, %c0_124] : memref<128x128xf32, #tpu.memory_space<vmem>>, vector<1x128xf32>
      %c12_125 = arith.constant 12 : index
      %c0_126 = arith.constant 0 : index
      %302 = vector.load %arg18[%c12_125, %c0_126] : memref<16x128xf32, #tpu.memory_space<vmem>>, vector<1x128xf32>
      tpu.vector_store %arg18[%c12_125, %c0_126], %301 {strides = array<i32>} : memref<16x128xf32, #tpu.memory_space<vmem>>, vector<1x128xf32>,
      %c13 = arith.constant 13 : index
      %303 = memref.load %arg1[%c13] : memref<16xi32, #tpu.memory_space<smem>>
      %304 = arith.index_cast %303 : i32 to index
      %c0_127 = arith.constant 0 : index
      %305 = vector.load %arg2[%304, %c0_127] : memref<128x128xf32, #tpu.memory_space<vmem>>, vector<1x128xf32>
      %c13_128 = arith.constant 13 : index
      %c0_129 = arith.constant 0 : index
      %306 = vector.load %arg18[%c13_128, %c0_129] : memref<16x128xf32, #tpu.memory_space<vmem>>, vector<1x128xf32>
      tpu.vector_store %arg18[%c13_128, %c0_129], %305 {strides = array<i32>} : memref<16x128xf32, #tpu.memory_space<vmem>>, vector<1x128xf32>,
      %c14 = arith.constant 14 : index
      %307 = memref.load %arg1[%c14] : memref<16xi32, #tpu.memory_space<smem>>
      %308 = arith.index_cast %307 : i32 to index
      %c0_130 = arith.constant 0 : index
      %309 = vector.load %arg2[%308, %c0_130] : memref<128x128xf32, #tpu.memory_space<vmem>>, vector<1x128xf32>
      %c14_131 = arith.constant 14 : index
      %c0_132 = arith.constant 0 : index
      %310 = vector.load %arg18[%c14_131, %c0_132] : memref<16x128xf32, #tpu.memory_space<vmem>>, vector<1x128xf32>
      tpu.vector_store %arg18[%c14_131, %c0_132], %309 {strides = array<i32>} : memref<16x128xf32, #tpu.memory_space<vmem>>, vector<1x128xf32>,
      %c15 = arith.constant 15 : index
      %311 = memref.load %arg1[%c15] : memref<16xi32, #tpu.memory_space<smem>>
      %312 = arith.index_cast %311 : i32 to index
      %c0_133 = arith.constant 0 : index
      %313 = vector.load %arg2[%312, %c0_133] : memref<128x128xf32, #tpu.memory_space<vmem>>, vector<1x128xf32>
      %c15_134 = arith.constant 15 : index
      %c0_135 = arith.constant 0 : index
      %314 = vector.load %arg18[%c15_134, %c0_135] : memref<16x128xf32, #tpu.memory_space<vmem>>, vector<1x128xf32>
      tpu.vector_store %arg18[%c15_134, %c0_135], %313 {strides = array<i32>} : memref<16x128xf32, #tpu.memory_space<vmem>>, vector<1x128xf32>,
    } else {
    }
    %c0 = arith.constant 0 : index
    %c0_1 = arith.constant 0 : index
    %3 = vector.load %arg18[%c0, %c0_1] : memref<16x128xf32, #tpu.memory_space<vmem>>, vector<16x128xf32>
    %4 = arith.truncf %3 : vector<16x128xf32> to vector<16x128xbf16>
    %c0_2 = arith.constant 0 : index
    %c0_3 = arith.constant 0 : index
    %c0_4 = arith.constant 0 : index
    %5 = vector.load %arg3[%c0_2, %c0_3, %c0_4] : memref<1x128x384xbf16, #tpu.memory_space<vmem>>, vector<1x128x384xbf16>
    %6 = vector.shape_cast %5 : vector<1x128x384xbf16> to vector<128x384xbf16>
    %cst = arith.constant dense<0.000000e+00> : vector<16x384xf32>
    %7 = tpu.matmul %4, %6, %cst {dimension_numbers = #tpu.dot_dimension_numbers<[1], [0], [0], [1], [0, 0, 1, 1], [], []>} : vector<16x128xbf16>, vector<128x384xbf16>, vector<16x384xf32> -> vector<16x384xf32>
    %c0_5 = arith.constant 0 : index
    %c0_6 = arith.constant 0 : index
    %c0_7 = arith.constant 0 : index
    %8 = vector.load %arg4[%c0_5, %c0_6, %c0_7] : memref<1x1x384xf32, #tpu.memory_space<vmem>>, vector<1x1x384xf32>
    %9 = vector.shape_cast %8 : vector<1x1x384xf32> to vector<1x384xf32>
    %10 = vector.broadcast %9 : vector<1x384xf32> to vector<16x384xf32>
    %11 = arith.addf %7, %10 : vector<16x384xf32>
    %12 = vector.extract_strided_slice %11 {offsets = [0, 0], sizes = [8, 32], strides = [1, 1]} : vector<16x384xf32> to vector<8x32xf32>
    %13 = arith.truncf %12 : vector<8x32xf32> to vector<8x32xbf16>
    %14 = vector.extract_strided_slice %11 {offsets = [0, 128], sizes = [8, 32], strides = [1, 1]} : vector<16x384xf32> to vector<8x32xf32>
    %15 = arith.truncf %14 : vector<8x32xf32> to vector<8x32xbf16>
    %16 = vector.extract_strided_slice %11 {offsets = [0, 256], sizes = [8, 32], strides = [1, 1]} : vector<16x384xf32> to vector<8x32xf32>
    %17 = arith.truncf %16 : vector<8x32xf32> to vector<8x32xbf16>
    %cst_8 = arith.constant dense<0.000000e+00> : vector<8x8xf32>
    %18 = tpu.matmul %13, %15, %cst_8 {dimension_numbers = #tpu.dot_dimension_numbers<[1], [1], [0], [0], [0, 0, 1, 0], [], []>} : vector<8x32xbf16>, vector<8x32xbf16>, vector<8x8xf32> -> vector<8x8xf32>
    %cst_9 = arith.constant dense<0xFF800000> : vector<8xf32>
    %19 = vector.multi_reduction <maximumf>, %18, %cst_9 [1] : vector<8x8xf32> to vector<8xf32>
    %20 = vector.shape_cast %19 : vector<8xf32> to vector<8x1xf32>
    %21 = vector.broadcast %20 : vector<8x1xf32> to vector<8x8xf32>
    %22 = arith.subf %18, %21 : vector<8x8xf32>
    %23 = math.exp %22 : vector<8x8xf32>
    %cst_10 = arith.constant dense<0.000000e+00> : vector<8xf32>
    %24 = vector.multi_reduction <add>, %23, %cst_10 [1] : vector<8x8xf32> to vector<8xf32>
    %25 = vector.shape_cast %24 : vector<8xf32> to vector<8x1xf32>
    %26 = tpu.reciprocal %25 {approx = true} : vector<8x1xf32> -> vector<8x1xf32>
    %27 = vector.broadcast %26 : vector<8x1xf32> to vector<8x8xf32>
    %28 = arith.mulf %23, %27 : vector<8x8xf32>
    %29 = arith.truncf %28 : vector<8x8xf32> to vector<8x8xbf16>
    %cst_11 = arith.constant dense<0.000000e+00> : vector<8x32xf32>
    %30 = tpu.matmul %29, %17, %cst_11 {dimension_numbers = #tpu.dot_dimension_numbers<[1], [0], [0], [1], [0, 0, 1, 1], [], []>} : vector<8x8xbf16>, vector<8x32xbf16>, vector<8x32xf32> -> vector<8x32xf32>
    %31 = vector.extract_strided_slice %11 {offsets = [0, 32], sizes = [8, 32], strides = [1, 1]} : vector<16x384xf32> to vector<8x32xf32>
    %32 = arith.truncf %31 : vector<8x32xf32> to vector<8x32xbf16>
    %33 = vector.extract_strided_slice %11 {offsets = [0, 160], sizes = [8, 32], strides = [1, 1]} : vector<16x384xf32> to vector<8x32xf32>
    %34 = arith.truncf %33 : vector<8x32xf32> to vector<8x32xbf16>
    %35 = vector.extract_strided_slice %11 {offsets = [0, 288], sizes = [8, 32], strides = [1, 1]} : vector<16x384xf32> to vector<8x32xf32>
    %36 = arith.truncf %35 : vector<8x32xf32> to vector<8x32xbf16>
    %cst_12 = arith.constant dense<0.000000e+00> : vector<8x8xf32>
    %37 = tpu.matmul %32, %34, %cst_12 {dimension_numbers = #tpu.dot_dimension_numbers<[1], [1], [0], [0], [0, 0, 1, 0], [], []>} : vector<8x32xbf16>, vector<8x32xbf16>, vector<8x8xf32> -> vector<8x8xf32>
    %cst_13 = arith.constant dense<0xFF800000> : vector<8xf32>
    %38 = vector.multi_reduction <maximumf>, %37, %cst_13 [1] : vector<8x8xf32> to vector<8xf32>
    %39 = vector.shape_cast %38 : vector<8xf32> to vector<8x1xf32>
    %40 = vector.broadcast %39 : vector<8x1xf32> to vector<8x8xf32>
    %41 = arith.subf %37, %40 : vector<8x8xf32>
    %42 = math.exp %41 : vector<8x8xf32>
    %cst_14 = arith.constant dense<0.000000e+00> : vector<8xf32>
    %43 = vector.multi_reduction <add>, %42, %cst_14 [1] : vector<8x8xf32> to vector<8xf32>
    %44 = vector.shape_cast %43 : vector<8xf32> to vector<8x1xf32>
    %45 = tpu.reciprocal %44 {approx = true} : vector<8x1xf32> -> vector<8x1xf32>
    %46 = vector.broadcast %45 : vector<8x1xf32> to vector<8x8xf32>
    %47 = arith.mulf %42, %46 : vector<8x8xf32>
    %48 = arith.truncf %47 : vector<8x8xf32> to vector<8x8xbf16>
    %cst_15 = arith.constant dense<0.000000e+00> : vector<8x32xf32>
    %49 = tpu.matmul %48, %36, %cst_15 {dimension_numbers = #tpu.dot_dimension_numbers<[1], [0], [0], [1], [0, 0, 1, 1], [], []>} : vector<8x8xbf16>, vector<8x32xbf16>, vector<8x32xf32> -> vector<8x32xf32>
    %50 = vector.extract_strided_slice %11 {offsets = [0, 64], sizes = [8, 32], strides = [1, 1]} : vector<16x384xf32> to vector<8x32xf32>
    %51 = arith.truncf %50 : vector<8x32xf32> to vector<8x32xbf16>
    %52 = vector.extract_strided_slice %11 {offsets = [0, 192], sizes = [8, 32], strides = [1, 1]} : vector<16x384xf32> to vector<8x32xf32>
    %53 = arith.truncf %52 : vector<8x32xf32> to vector<8x32xbf16>
    %54 = vector.extract_strided_slice %11 {offsets = [0, 320], sizes = [8, 32], strides = [1, 1]} : vector<16x384xf32> to vector<8x32xf32>
    %55 = arith.truncf %54 : vector<8x32xf32> to vector<8x32xbf16>
    %cst_16 = arith.constant dense<0.000000e+00> : vector<8x8xf32>
    %56 = tpu.matmul %51, %53, %cst_16 {dimension_numbers = #tpu.dot_dimension_numbers<[1], [1], [0], [0], [0, 0, 1, 0], [], []>} : vector<8x32xbf16>, vector<8x32xbf16>, vector<8x8xf32> -> vector<8x8xf32>
    %cst_17 = arith.constant dense<0xFF800000> : vector<8xf32>
    %57 = vector.multi_reduction <maximumf>, %56, %cst_17 [1] : vector<8x8xf32> to vector<8xf32>
    %58 = vector.shape_cast %57 : vector<8xf32> to vector<8x1xf32>
    %59 = vector.broadcast %58 : vector<8x1xf32> to vector<8x8xf32>
    %60 = arith.subf %56, %59 : vector<8x8xf32>
    %61 = math.exp %60 : vector<8x8xf32>
    %cst_18 = arith.constant dense<0.000000e+00> : vector<8xf32>
    %62 = vector.multi_reduction <add>, %61, %cst_18 [1] : vector<8x8xf32> to vector<8xf32>
    %63 = vector.shape_cast %62 : vector<8xf32> to vector<8x1xf32>
    %64 = tpu.reciprocal %63 {approx = true} : vector<8x1xf32> -> vector<8x1xf32>
    %65 = vector.broadcast %64 : vector<8x1xf32> to vector<8x8xf32>
    %66 = arith.mulf %61, %65 : vector<8x8xf32>
    %67 = arith.truncf %66 : vector<8x8xf32> to vector<8x8xbf16>
    %cst_19 = arith.constant dense<0.000000e+00> : vector<8x32xf32>
    %68 = tpu.matmul %67, %55, %cst_19 {dimension_numbers = #tpu.dot_dimension_numbers<[1], [0], [0], [1], [0, 0, 1, 1], [], []>} : vector<8x8xbf16>, vector<8x32xbf16>, vector<8x32xf32> -> vector<8x32xf32>
    %69 = vector.extract_strided_slice %11 {offsets = [0, 96], sizes = [8, 32], strides = [1, 1]} : vector<16x384xf32> to vector<8x32xf32>
    %70 = arith.truncf %69 : vector<8x32xf32> to vector<8x32xbf16>
    %71 = vector.extract_strided_slice %11 {offsets = [0, 224], sizes = [8, 32], strides = [1, 1]} : vector<16x384xf32> to vector<8x32xf32>
    %72 = arith.truncf %71 : vector<8x32xf32> to vector<8x32xbf16>
    %73 = vector.extract_strided_slice %11 {offsets = [0, 352], sizes = [8, 32], strides = [1, 1]} : vector<16x384xf32> to vector<8x32xf32>
    %74 = arith.truncf %73 : vector<8x32xf32> to vector<8x32xbf16>
    %cst_20 = arith.constant dense<0.000000e+00> : vector<8x8xf32>
    %75 = tpu.matmul %70, %72, %cst_20 {dimension_numbers = #tpu.dot_dimension_numbers<[1], [1], [0], [0], [0, 0, 1, 0], [], []>} : vector<8x32xbf16>, vector<8x32xbf16>, vector<8x8xf32> -> vector<8x8xf32>
    %cst_21 = arith.constant dense<0xFF800000> : vector<8xf32>
    %76 = vector.multi_reduction <maximumf>, %75, %cst_21 [1] : vector<8x8xf32> to vector<8xf32>
    %77 = vector.shape_cast %76 : vector<8xf32> to vector<8x1xf32>
    %78 = vector.broadcast %77 : vector<8x1xf32> to vector<8x8xf32>
    %79 = arith.subf %75, %78 : vector<8x8xf32>
    %80 = math.exp %79 : vector<8x8xf32>
    %cst_22 = arith.constant dense<0.000000e+00> : vector<8xf32>
    %81 = vector.multi_reduction <add>, %80, %cst_22 [1] : vector<8x8xf32> to vector<8xf32>
    %82 = vector.shape_cast %81 : vector<8xf32> to vector<8x1xf32>
    %83 = tpu.reciprocal %82 {approx = true} : vector<8x1xf32> -> vector<8x1xf32>
    %84 = vector.broadcast %83 : vector<8x1xf32> to vector<8x8xf32>
    %85 = arith.mulf %80, %84 : vector<8x8xf32>
    %86 = arith.truncf %85 : vector<8x8xf32> to vector<8x8xbf16>
    %cst_23 = arith.constant dense<0.000000e+00> : vector<8x32xf32>
    %87 = tpu.matmul %86, %74, %cst_23 {dimension_numbers = #tpu.dot_dimension_numbers<[1], [0], [0], [1], [0, 0, 1, 1], [], []>} : vector<8x8xbf16>, vector<8x32xbf16>, vector<8x32xf32> -> vector<8x32xf32>
    %88 = tpu.concatenate %30, %49, %68, %87 in 1 : vector<8x32xf32>, vector<8x32xf32>, vector<8x32xf32>, vector<8x32xf32> -> vector<8x128xf32>
    %89 = vector.extract_strided_slice %11 {offsets = [8, 0], sizes = [8, 32], strides = [1, 1]} : vector<16x384xf32> to vector<8x32xf32>
    %90 = arith.truncf %89 : vector<8x32xf32> to vector<8x32xbf16>
    %91 = vector.extract_strided_slice %11 {offsets = [8, 128], sizes = [8, 32], strides = [1, 1]} : vector<16x384xf32> to vector<8x32xf32>
    %92 = arith.truncf %91 : vector<8x32xf32> to vector<8x32xbf16>
    %93 = vector.extract_strided_slice %11 {offsets = [8, 256], sizes = [8, 32], strides = [1, 1]} : vector<16x384xf32> to vector<8x32xf32>
    %94 = arith.truncf %93 : vector<8x32xf32> to vector<8x32xbf16>
    %cst_24 = arith.constant dense<0.000000e+00> : vector<8x8xf32>
    %95 = tpu.matmul %90, %92, %cst_24 {dimension_numbers = #tpu.dot_dimension_numbers<[1], [1], [0], [0], [0, 0, 1, 0], [], []>} : vector<8x32xbf16>, vector<8x32xbf16>, vector<8x8xf32> -> vector<8x8xf32>
    %cst_25 = arith.constant dense<0xFF800000> : vector<8xf32>
    %96 = vector.multi_reduction <maximumf>, %95, %cst_25 [1] : vector<8x8xf32> to vector<8xf32>
    %97 = vector.shape_cast %96 : vector<8xf32> to vector<8x1xf32>
    %98 = vector.broadcast %97 : vector<8x1xf32> to vector<8x8xf32>
    %99 = arith.subf %95, %98 : vector<8x8xf32>
    %100 = math.exp %99 : vector<8x8xf32>
    %cst_26 = arith.constant dense<0.000000e+00> : vector<8xf32>
    %101 = vector.multi_reduction <add>, %100, %cst_26 [1] : vector<8x8xf32> to vector<8xf32>
    %102 = vector.shape_cast %101 : vector<8xf32> to vector<8x1xf32>
    %103 = tpu.reciprocal %102 {approx = true} : vector<8x1xf32> -> vector<8x1xf32>
    %104 = vector.broadcast %103 : vector<8x1xf32> to vector<8x8xf32>
    %105 = arith.mulf %100, %104 : vector<8x8xf32>
    %106 = arith.truncf %105 : vector<8x8xf32> to vector<8x8xbf16>
    %cst_27 = arith.constant dense<0.000000e+00> : vector<8x32xf32>
    %107 = tpu.matmul %106, %94, %cst_27 {dimension_numbers = #tpu.dot_dimension_numbers<[1], [0], [0], [1], [0, 0, 1, 1], [], []>} : vector<8x8xbf16>, vector<8x32xbf16>, vector<8x32xf32> -> vector<8x32xf32>
    %108 = vector.extract_strided_slice %11 {offsets = [8, 32], sizes = [8, 32], strides = [1, 1]} : vector<16x384xf32> to vector<8x32xf32>
    %109 = arith.truncf %108 : vector<8x32xf32> to vector<8x32xbf16>
    %110 = vector.extract_strided_slice %11 {offsets = [8, 160], sizes = [8, 32], strides = [1, 1]} : vector<16x384xf32> to vector<8x32xf32>
    %111 = arith.truncf %110 : vector<8x32xf32> to vector<8x32xbf16>
    %112 = vector.extract_strided_slice %11 {offsets = [8, 288], sizes = [8, 32], strides = [1, 1]} : vector<16x384xf32> to vector<8x32xf32>
    %113 = arith.truncf %112 : vector<8x32xf32> to vector<8x32xbf16>
    %cst_28 = arith.constant dense<0.000000e+00> : vector<8x8xf32>
    %114 = tpu.matmul %109, %111, %cst_28 {dimension_numbers = #tpu.dot_dimension_numbers<[1], [1], [0], [0], [0, 0, 1, 0], [], []>} : vector<8x32xbf16>, vector<8x32xbf16>, vector<8x8xf32> -> vector<8x8xf32>
    %cst_29 = arith.constant dense<0xFF800000> : vector<8xf32>
    %115 = vector.multi_reduction <maximumf>, %114, %cst_29 [1] : vector<8x8xf32> to vector<8xf32>
    %116 = vector.shape_cast %115 : vector<8xf32> to vector<8x1xf32>
    %117 = vector.broadcast %116 : vector<8x1xf32> to vector<8x8xf32>
    %118 = arith.subf %114, %117 : vector<8x8xf32>
    %119 = math.exp %118 : vector<8x8xf32>
    %cst_30 = arith.constant dense<0.000000e+00> : vector<8xf32>
    %120 = vector.multi_reduction <add>, %119, %cst_30 [1] : vector<8x8xf32> to vector<8xf32>
    %121 = vector.shape_cast %120 : vector<8xf32> to vector<8x1xf32>
    %122 = tpu.reciprocal %121 {approx = true} : vector<8x1xf32> -> vector<8x1xf32>
    %123 = vector.broadcast %122 : vector<8x1xf32> to vector<8x8xf32>
    %124 = arith.mulf %119, %123 : vector<8x8xf32>
    %125 = arith.truncf %124 : vector<8x8xf32> to vector<8x8xbf16>
    %cst_31 = arith.constant dense<0.000000e+00> : vector<8x32xf32>
    %126 = tpu.matmul %125, %113, %cst_31 {dimension_numbers = #tpu.dot_dimension_numbers<[1], [0], [0], [1], [0, 0, 1, 1], [], []>} : vector<8x8xbf16>, vector<8x32xbf16>, vector<8x32xf32> -> vector<8x32xf32>
    %127 = vector.extract_strided_slice %11 {offsets = [8, 64], sizes = [8, 32], strides = [1, 1]} : vector<16x384xf32> to vector<8x32xf32>
    %128 = arith.truncf %127 : vector<8x32xf32> to vector<8x32xbf16>
    %129 = vector.extract_strided_slice %11 {offsets = [8, 192], sizes = [8, 32], strides = [1, 1]} : vector<16x384xf32> to vector<8x32xf32>
    %130 = arith.truncf %129 : vector<8x32xf32> to vector<8x32xbf16>
    %131 = vector.extract_strided_slice %11 {offsets = [8, 320], sizes = [8, 32], strides = [1, 1]} : vector<16x384xf32> to vector<8x32xf32>
    %132 = arith.truncf %131 : vector<8x32xf32> to vector<8x32xbf16>
    %cst_32 = arith.constant dense<0.000000e+00> : vector<8x8xf32>
    %133 = tpu.matmul %128, %130, %cst_32 {dimension_numbers = #tpu.dot_dimension_numbers<[1], [1], [0], [0], [0, 0, 1, 0], [], []>} : vector<8x32xbf16>, vector<8x32xbf16>, vector<8x8xf32> -> vector<8x8xf32>
    %cst_33 = arith.constant dense<0xFF800000> : vector<8xf32>
    %134 = vector.multi_reduction <maximumf>, %133, %cst_33 [1] : vector<8x8xf32> to vector<8xf32>
    %135 = vector.shape_cast %134 : vector<8xf32> to vector<8x1xf32>
    %136 = vector.broadcast %135 : vector<8x1xf32> to vector<8x8xf32>
    %137 = arith.subf %133, %136 : vector<8x8xf32>
    %138 = math.exp %137 : vector<8x8xf32>
    %cst_34 = arith.constant dense<0.000000e+00> : vector<8xf32>
    %139 = vector.multi_reduction <add>, %138, %cst_34 [1] : vector<8x8xf32> to vector<8xf32>
    %140 = vector.shape_cast %139 : vector<8xf32> to vector<8x1xf32>
    %141 = tpu.reciprocal %140 {approx = true} : vector<8x1xf32> -> vector<8x1xf32>
    %142 = vector.broadcast %141 : vector<8x1xf32> to vector<8x8xf32>
    %143 = arith.mulf %138, %142 : vector<8x8xf32>
    %144 = arith.truncf %143 : vector<8x8xf32> to vector<8x8xbf16>
    %cst_35 = arith.constant dense<0.000000e+00> : vector<8x32xf32>
    %145 = tpu.matmul %144, %132, %cst_35 {dimension_numbers = #tpu.dot_dimension_numbers<[1], [0], [0], [1], [0, 0, 1, 1], [], []>} : vector<8x8xbf16>, vector<8x32xbf16>, vector<8x32xf32> -> vector<8x32xf32>
    %146 = vector.extract_strided_slice %11 {offsets = [8, 96], sizes = [8, 32], strides = [1, 1]} : vector<16x384xf32> to vector<8x32xf32>
    %147 = arith.truncf %146 : vector<8x32xf32> to vector<8x32xbf16>
    %148 = vector.extract_strided_slice %11 {offsets = [8, 224], sizes = [8, 32], strides = [1, 1]} : vector<16x384xf32> to vector<8x32xf32>
    %149 = arith.truncf %148 : vector<8x32xf32> to vector<8x32xbf16>
    %150 = vector.extract_strided_slice %11 {offsets = [8, 352], sizes = [8, 32], strides = [1, 1]} : vector<16x384xf32> to vector<8x32xf32>
    %151 = arith.truncf %150 : vector<8x32xf32> to vector<8x32xbf16>
    %cst_36 = arith.constant dense<0.000000e+00> : vector<8x8xf32>
    %152 = tpu.matmul %147, %149, %cst_36 {dimension_numbers = #tpu.dot_dimension_numbers<[1], [1], [0], [0], [0, 0, 1, 0], [], []>} : vector<8x32xbf16>, vector<8x32xbf16>, vector<8x8xf32> -> vector<8x8xf32>
    %cst_37 = arith.constant dense<0xFF800000> : vector<8xf32>
    %153 = vector.multi_reduction <maximumf>, %152, %cst_37 [1] : vector<8x8xf32> to vector<8xf32>
    %154 = vector.shape_cast %153 : vector<8xf32> to vector<8x1xf32>
    %155 = vector.broadcast %154 : vector<8x1xf32> to vector<8x8xf32>
    %156 = arith.subf %152, %155 : vector<8x8xf32>
    %157 = math.exp %156 : vector<8x8xf32>
    %cst_38 = arith.constant dense<0.000000e+00> : vector<8xf32>
    %158 = vector.multi_reduction <add>, %157, %cst_38 [1] : vector<8x8xf32> to vector<8xf32>
    %159 = vector.shape_cast %158 : vector<8xf32> to vector<8x1xf32>
    %160 = tpu.reciprocal %159 {approx = true} : vector<8x1xf32> -> vector<8x1xf32>
    %161 = vector.broadcast %160 : vector<8x1xf32> to vector<8x8xf32>
    %162 = arith.mulf %157, %161 : vector<8x8xf32>
    %163 = arith.truncf %162 : vector<8x8xf32> to vector<8x8xbf16>
    %cst_39 = arith.constant dense<0.000000e+00> : vector<8x32xf32>
    %164 = tpu.matmul %163, %151, %cst_39 {dimension_numbers = #tpu.dot_dimension_numbers<[1], [0], [0], [1], [0, 0, 1, 1], [], []>} : vector<8x8xbf16>, vector<8x32xbf16>, vector<8x32xf32> -> vector<8x32xf32>
    %165 = tpu.concatenate %107, %126, %145, %164 in 1 : vector<8x32xf32>, vector<8x32xf32>, vector<8x32xf32>, vector<8x32xf32> -> vector<8x128xf32>
    %166 = tpu.concatenate %88, %165 in 0 : vector<8x128xf32>, vector<8x128xf32> -> vector<16x128xf32>
    %167 = arith.truncf %166 : vector<16x128xf32> to vector<16x128xbf16>
    %c0_40 = arith.constant 0 : index
    %c0_41 = arith.constant 0 : index
    %c0_42 = arith.constant 0 : index
    %168 = vector.load %arg5[%c0_40, %c0_41, %c0_42] : memref<1x128x128xbf16, #tpu.memory_space<vmem>>, vector<1x128x128xbf16>
    %169 = vector.shape_cast %168 : vector<1x128x128xbf16> to vector<128x128xbf16>
    %cst_43 = arith.constant dense<0.000000e+00> : vector<16x128xf32>
    %170 = tpu.matmul %167, %169, %cst_43 {dimension_numbers = #tpu.dot_dimension_numbers<[1], [0], [0], [1], [0, 0, 1, 1], [], []>} : vector<16x128xbf16>, vector<128x128xbf16>, vector<16x128xf32> -> vector<16x128xf32>
    %c0_44 = arith.constant 0 : index
    %c0_45 = arith.constant 0 : index
    %c0_46 = arith.constant 0 : index
    %171 = vector.load %arg6[%c0_44, %c0_45, %c0_46] : memref<1x1x128xf32, #tpu.memory_space<vmem>>, vector<1x1x128xf32>
    %172 = vector.shape_cast %171 : vector<1x1x128xf32> to vector<1x128xf32>
    %173 = vector.broadcast %172 : vector<1x128xf32> to vector<16x128xf32>
    %174 = arith.addf %170, %173 : vector<16x128xf32>
    %175 = arith.addf %3, %174 : vector<16x128xf32>
    %c0_47 = arith.constant 0 : index
    %c0_48 = arith.constant 0 : index
    %c0_49 = arith.constant 0 : index
    %176 = vector.load %arg7[%c0_47, %c0_48, %c0_49] : memref<1x1x128xf32, #tpu.memory_space<vmem>>, vector<1x1x128xf32>
    %177 = vector.shape_cast %176 : vector<1x1x128xf32> to vector<1x128xf32>
    %c0_50 = arith.constant 0 : index
    %c0_51 = arith.constant 0 : index
    %c0_52 = arith.constant 0 : index
    %178 = vector.load %arg8[%c0_50, %c0_51, %c0_52] : memref<1x1x128xf32, #tpu.memory_space<vmem>>, vector<1x1x128xf32>
    %179 = vector.shape_cast %178 : vector<1x1x128xf32> to vector<1x128xf32>
    %cst_53 = arith.constant dense<0.000000e+00> : vector<16xf32>
    %180 = vector.multi_reduction <add>, %175, %cst_53 [1] : vector<16x128xf32> to vector<16xf32>
    %181 = vector.shape_cast %180 : vector<16xf32> to vector<16x1xf32>
    %cst_54 = arith.constant 1.280000e+02 : f32
    %182 = vector.broadcast %cst_54 : f32 to vector<16x1xf32>
    %183 = arith.divf %181, %182 : vector<16x1xf32>
    %184 = vector.broadcast %183 : vector<16x1xf32> to vector<16x128xf32>
    %185 = arith.subf %175, %184 : vector<16x128xf32>
    %186 = arith.mulf %185, %185 : vector<16x128xf32>
    %cst_55 = arith.constant dense<0.000000e+00> : vector<16xf32>
    %187 = vector.multi_reduction <add>, %186, %cst_55 [1] : vector<16x128xf32> to vector<16xf32>
    %188 = vector.shape_cast %187 : vector<16xf32> to vector<16x1xf32>
    %cst_56 = arith.constant 1.280000e+02 : f32
    %189 = vector.broadcast %cst_56 : f32 to vector<16x1xf32>
    %190 = arith.divf %188, %189 : vector<16x1xf32>
    %191 = vector.broadcast %183 : vector<16x1xf32> to vector<16x128xf32>
    %192 = arith.subf %175, %191 : vector<16x128xf32>
    %cst_57 = arith.constant 9.99999974E-6 : f32
    %193 = vector.broadcast %cst_57 : f32 to vector<16x1xf32>
    %194 = arith.addf %190, %193 : vector<16x1xf32>
    %195 = math.rsqrt %194 : vector<16x1xf32>
    %196 = vector.broadcast %195 : vector<16x1xf32> to vector<16x128xf32>
    %197 = arith.mulf %192, %196 : vector<16x128xf32>
    %198 = vector.broadcast %177 : vector<1x128xf32> to vector<16x128xf32>
    %199 = arith.mulf %197, %198 : vector<16x128xf32>
    %200 = vector.broadcast %179 : vector<1x128xf32> to vector<16x128xf32>
    %201 = arith.addf %199, %200 : vector<16x128xf32>
    %202 = arith.truncf %201 : vector<16x128xf32> to vector<16x128xbf16>
    %c0_58 = arith.constant 0 : index
    %c0_59 = arith.constant 0 : index
    %c0_60 = arith.constant 0 : index
    %203 = vector.load %arg9[%c0_58, %c0_59, %c0_60] : memref<1x128x2048xbf16, #tpu.memory_space<vmem>>, vector<1x128x2048xbf16>
    %204 = vector.shape_cast %203 : vector<1x128x2048xbf16> to vector<128x2048xbf16>
    %cst_61 = arith.constant dense<0.000000e+00> : vector<16x2048xf32>
    %205 = tpu.matmul %202, %204, %cst_61 {dimension_numbers = #tpu.dot_dimension_numbers<[1], [0], [0], [1], [0, 0, 1, 1], [], []>} : vector<16x128xbf16>, vector<128x2048xbf16>, vector<16x2048xf32> -> vector<16x2048xf32>
    %c0_62 = arith.constant 0 : index
    %c0_63 = arith.constant 0 : index
    %c0_64 = arith.constant 0 : index
    %206 = vector.load %arg10[%c0_62, %c0_63, %c0_64] : memref<1x1x2048xf32, #tpu.memory_space<vmem>>, vector<1x1x2048xf32>
    %207 = vector.shape_cast %206 : vector<1x1x2048xf32> to vector<1x2048xf32>
    %208 = vector.broadcast %207 : vector<1x2048xf32> to vector<16x2048xf32>
    %209 = arith.addf %205, %208 : vector<16x2048xf32>
    %cst_65 = arith.constant 0.000000e+00 : f32
    %210 = vector.broadcast %cst_65 : f32 to vector<16x2048xf32>
    %211 = arith.maximumf %209, %210 : vector<16x2048xf32>
    %212 = arith.truncf %211 : vector<16x2048xf32> to vector<16x2048xbf16>
    %c0_66 = arith.constant 0 : index
    %c0_67 = arith.constant 0 : index
    %c0_68 = arith.constant 0 : index
    %213 = vector.load %arg11[%c0_66, %c0_67, %c0_68] : memref<1x2048x128xbf16, #tpu.memory_space<vmem>>, vector<1x2048x128xbf16>
    %214 = vector.shape_cast %213 : vector<1x2048x128xbf16> to vector<2048x128xbf16>
    %cst_69 = arith.constant dense<0.000000e+00> : vector<16x128xf32>
    %215 = tpu.matmul %212, %214, %cst_69 {dimension_numbers = #tpu.dot_dimension_numbers<[1], [0], [0], [1], [0, 0, 1, 1], [], []>} : vector<16x2048xbf16>, vector<2048x128xbf16>, vector<16x128xf32> -> vector<16x128xf32>
    %c0_70 = arith.constant 0 : index
    %c0_71 = arith.constant 0 : index
    %c0_72 = arith.constant 0 : index
    %216 = vector.load %arg12[%c0_70, %c0_71, %c0_72] : memref<1x1x128xf32, #tpu.memory_space<vmem>>, vector<1x1x128xf32>
    %217 = vector.shape_cast %216 : vector<1x1x128xf32> to vector<1x128xf32>
    %218 = vector.broadcast %217 : vector<1x128xf32> to vector<16x128xf32>
    %219 = arith.addf %215, %218 : vector<16x128xf32>
    %220 = arith.addf %201, %219 : vector<16x128xf32>
    %c0_73 = arith.constant 0 : index
    %c0_74 = arith.constant 0 : index
    %c0_75 = arith.constant 0 : index
    %221 = vector.load %arg13[%c0_73, %c0_74, %c0_75] : memref<1x1x128xf32, #tpu.memory_space<vmem>>, vector<1x1x128xf32>
    %222 = vector.shape_cast %221 : vector<1x1x128xf32> to vector<1x128xf32>
    %c0_76 = arith.constant 0 : index
    %c0_77 = arith.constant 0 : index
    %c0_78 = arith.constant 0 : index
    %223 = vector.load %arg14[%c0_76, %c0_77, %c0_78] : memref<1x1x128xf32, #tpu.memory_space<vmem>>, vector<1x1x128xf32>
    %224 = vector.shape_cast %223 : vector<1x1x128xf32> to vector<1x128xf32>
    %cst_79 = arith.constant dense<0.000000e+00> : vector<16xf32>
    %225 = vector.multi_reduction <add>, %220, %cst_79 [1] : vector<16x128xf32> to vector<16xf32>
    %226 = vector.shape_cast %225 : vector<16xf32> to vector<16x1xf32>
    %cst_80 = arith.constant 1.280000e+02 : f32
    %227 = vector.broadcast %cst_80 : f32 to vector<16x1xf32>
    %228 = arith.divf %226, %227 : vector<16x1xf32>
    %229 = vector.broadcast %228 : vector<16x1xf32> to vector<16x128xf32>
    %230 = arith.subf %220, %229 : vector<16x128xf32>
    %231 = arith.mulf %230, %230 : vector<16x128xf32>
    %cst_81 = arith.constant dense<0.000000e+00> : vector<16xf32>
    %232 = vector.multi_reduction <add>, %231, %cst_81 [1] : vector<16x128xf32> to vector<16xf32>
    %233 = vector.shape_cast %232 : vector<16xf32> to vector<16x1xf32>
    %cst_82 = arith.constant 1.280000e+02 : f32
    %234 = vector.broadcast %cst_82 : f32 to vector<16x1xf32>
    %235 = arith.divf %233, %234 : vector<16x1xf32>
    %236 = vector.broadcast %228 : vector<16x1xf32> to vector<16x128xf32>
    %237 = arith.subf %220, %236 : vector<16x128xf32>
    %cst_83 = arith.constant 9.99999974E-6 : f32
    %238 = vector.broadcast %cst_83 : f32 to vector<16x1xf32>
    %239 = arith.addf %235, %238 : vector<16x1xf32>
    %240 = math.rsqrt %239 : vector<16x1xf32>
    %241 = vector.broadcast %240 : vector<16x1xf32> to vector<16x128xf32>
    %242 = arith.mulf %237, %241 : vector<16x128xf32>
    %243 = vector.broadcast %222 : vector<1x128xf32> to vector<16x128xf32>
    %244 = arith.mulf %242, %243 : vector<16x128xf32>
    %245 = vector.broadcast %224 : vector<1x128xf32> to vector<16x128xf32>
    %246 = arith.addf %244, %245 : vector<16x128xf32>
    %c0_84 = arith.constant 0 : index
    %c0_85 = arith.constant 0 : index
    %247 = vector.load %arg18[%c0_84, %c0_85] : memref<16x128xf32, #tpu.memory_space<vmem>>, vector<16x128xf32>
    tpu.vector_store %arg18[%c0_84, %c0_85], %246 {strides = array<i32>} : memref<16x128xf32, #tpu.memory_space<vmem>>, vector<16x128xf32>,
    %c1_i32 = arith.constant 1 : i32
    %248 = arith.cmpi eq, %arg0, %c1_i32 : i32
    %249 = arith.extui %248 : i1 to i32
    %c0_i32_86 = arith.constant 0 : i32
    %250 = arith.cmpi ne, %249, %c0_i32_86 : i32
    scf.if %250 {
      %251 = arith.truncf %246 : vector<16x128xf32> to vector<16x128xbf16>
      %c0_87 = arith.constant 0 : index
      %c0_88 = arith.constant 0 : index
      %252 = vector.load %arg15[%c0_87, %c0_88] : memref<128x128xbf16, #tpu.memory_space<vmem>>, vector<128x128xbf16>
      %cst_89 = arith.constant dense<0.000000e+00> : vector<16x128xf32>
      %253 = tpu.matmul %251, %252, %cst_89 {dimension_numbers = #tpu.dot_dimension_numbers<[1], [0], [0], [1], [0, 0, 1, 1], [], []>} : vector<16x128xbf16>, vector<128x128xbf16>, vector<16x128xf32> -> vector<16x128xf32>
      %c0_90 = arith.constant 0 : index
      %c0_91 = arith.constant 0 : index
      %254 = vector.load %arg16[%c0_90, %c0_91] : memref<1x128xf32, #tpu.memory_space<vmem>>, vector<1x128xf32>
      %255 = vector.broadcast %254 : vector<1x128xf32> to vector<16x128xf32>
      %256 = arith.addf %253, %255 : vector<16x128xf32>
      %c0_92 = arith.constant 0 : index
      %c0_93 = arith.constant 0 : index
      %257 = vector.load %arg17[%c0_92, %c0_93] : memref<16x128xf32, #tpu.memory_space<vmem>>, vector<16x128xf32>
      tpu.vector_store %arg17[%c0_92, %c0_93], %256 {strides = array<i32>} : memref<16x128xf32, #tpu.memory_space<vmem>>, vector<16x128xf32>,
    } else {
    }
    return
  }
  func.func @transform_0(%arg0: i32, %arg1: memref<16xi32, #tpu.memory_space<smem>>) -> (i32, i32) {
    %c0_i32 = arith.constant 0 : i32
    %c0_i32_0 = arith.constant 0 : i32
    %c0_i32_1 = arith.constant 0 : i32
    return %c0_i32, %c0_i32_0 : i32, i32
  }
  func.func @transform_1(%arg0: i32, %arg1: memref<16xi32, #tpu.memory_space<smem>>) -> (i32, i32, i32) {
    %c0_i32 = arith.constant 0 : i32
    %c0_i32_0 = arith.constant 0 : i32
    %c0_i32_1 = arith.constant 0 : i32
    return %arg0, %c0_i32, %c0_i32_0 : i32, i32, i32
  }
  func.func @transform_2(%arg0: i32, %arg1: memref<16xi32, #tpu.memory_space<smem>>) -> (i32, i32, i32) {
    %c0_i32 = arith.constant 0 : i32
    %c0_i32_0 = arith.constant 0 : i32
    %c0_i32_1 = arith.constant 0 : i32
    return %arg0, %c0_i32, %c0_i32_0 : i32, i32, i32
  }
  func.func @transform_3(%arg0: i32, %arg1: memref<16xi32, #tpu.memory_space<smem>>) -> (i32, i32, i32) {
    %c0_i32 = arith.constant 0 : i32
    %c0_i32_0 = arith.constant 0 : i32
    %c0_i32_1 = arith.constant 0 : i32
    return %arg0, %c0_i32, %c0_i32_0 : i32, i32, i32
  }
  func.func @transform_4(%arg0: i32, %arg1: memref<16xi32, #tpu.memory_space<smem>>) -> (i32, i32, i32) {
    %c0_i32 = arith.constant 0 : i32
    %c0_i32_0 = arith.constant 0 : i32
    %c0_i32_1 = arith.constant 0 : i32
    return %arg0, %c0_i32, %c0_i32_0 : i32, i32, i32
  }
  func.func @transform_5(%arg0: i32, %arg1: memref<16xi32, #tpu.memory_space<smem>>) -> (i32, i32, i32) {
    %c0_i32 = arith.constant 0 : i32
    %c0_i32_0 = arith.constant 0 : i32
    %c0_i32_1 = arith.constant 0 : i32
    return %arg0, %c0_i32, %c0_i32_0 : i32, i32, i32
  }
  func.func @transform_6(%arg0: i32, %arg1: memref<16xi32, #tpu.memory_space<smem>>) -> (i32, i32, i32) {
    %c0_i32 = arith.constant 0 : i32
    %c0_i32_0 = arith.constant 0 : i32
    %c0_i32_1 = arith.constant 0 : i32
    return %arg0, %c0_i32, %c0_i32_0 : i32, i32, i32
  }
  func.func @transform_7(%arg0: i32, %arg1: memref<16xi32, #tpu.memory_space<smem>>) -> (i32, i32, i32) {
    %c0_i32 = arith.constant 0 : i32
    %c0_i32_0 = arith.constant 0 : i32
    %c0_i32_1 = arith.constant 0 : i32
    return %arg0, %c0_i32, %c0_i32_0 : i32, i32, i32
  }
  func.func @transform_8(%arg0: i32, %arg1: memref<16xi32, #tpu.memory_space<smem>>) -> (i32, i32, i32) {
    %c0_i32 = arith.constant 0 : i32
    %c0_i32_0 = arith.constant 0 : i32
    %c0_i32_1 = arith.constant 0 : i32
    return %arg0, %c0_i32, %c0_i32_0 : i32, i32, i32
  }
  func.func @transform_9(%arg0: i32, %arg1: memref<16xi32, #tpu.memory_space<smem>>) -> (i32, i32, i32) {
    %c0_i32 = arith.constant 0 : i32
    %c0_i32_0 = arith.constant 0 : i32
    %c0_i32_1 = arith.constant 0 : i32
    return %arg0, %c0_i32, %c0_i32_0 : i32, i32, i32
  }
  func.func @transform_10(%arg0: i32, %arg1: memref<16xi32, #tpu.memory_space<smem>>) -> (i32, i32, i32) {
    %c0_i32 = arith.constant 0 : i32
    %c0_i32_0 = arith.constant 0 : i32
    %c0_i32_1 = arith.constant 0 : i32
    return %arg0, %c0_i32, %c0_i32_0 : i32, i32, i32
  }
  func.func @transform_11(%arg0: i32, %arg1: memref<16xi32, #tpu.memory_space<smem>>) -> (i32, i32, i32) {
    %c0_i32 = arith.constant 0 : i32
    %c0_i32_0 = arith.constant 0 : i32
    %c0_i32_1 = arith.constant 0 : i32
    return %arg0, %c0_i32, %c0_i32_0 : i32, i32, i32
  }
  func.func @transform_12(%arg0: i32, %arg1: memref<16xi32, #tpu.memory_space<smem>>) -> (i32, i32, i32) {
    %c0_i32 = arith.constant 0 : i32
    %c0_i32_0 = arith.constant 0 : i32
    %c0_i32_1 = arith.constant 0 : i32
    return %arg0, %c0_i32, %c0_i32_0 : i32, i32, i32
  }
  func.func @transform_13(%arg0: i32, %arg1: memref<16xi32, #tpu.memory_space<smem>>) -> (i32, i32) {
    %c0_i32 = arith.constant 0 : i32
    %c0_i32_0 = arith.constant 0 : i32
    %c0_i32_1 = arith.constant 0 : i32
    return %c0_i32, %c0_i32_0 : i32, i32
  }
  func.func @transform_14(%arg0: i32, %arg1: memref<16xi32, #tpu.memory_space<smem>>) -> (i32, i32) {
    %c0_i32 = arith.constant 0 : i32
    %c0_i32_0 = arith.constant 0 : i32
    %c0_i32_1 = arith.constant 0 : i32
    return %c0_i32, %c0_i32_0 : i32, i32
  }
  func.func @transform_15(%arg0: i32, %arg1: memref<16xi32, #tpu.memory_space<smem>>) -> (i32, i32) {
    %c0_i32 = arith.constant 0 : i32
    %c0_i32_0 = arith.constant 0 : i32
    %c0_i32_1 = arith.constant 0 : i32
    return %c0_i32, %c0_i32_0 : i32, i32
  }
}

</mosaic_0001>

<llo_original>
// kernel: tiny_transformer_forward.1
$region0: #{tiny_transformer_forward.1}
  #allocation0 [shape = 'u32[]', space=smem, size = 0x4, offset = 0x4, fixed_abs, tag = 'smem constant byte address 0x4 - core index']
  #allocation1 [shape = 'u32[72,128]{1,0:T(1,128)}', space=vmem, size = 0x9000, scoped, tag = 'internal scratch']
  #allocation2 [shape = 'f32[16,128]{1,0:T(8,128)}', space=vmem, size = 0x2000, scoped, tag = 'scratch operand']
  #allocation3 [shape = 's32[1]{0}', space=sflag, size = 0x4, scoped, tag = 'scoped memory for tiny_transformer_forward.1']
  #allocation4 [shape = 'u8[512]{0}', space=smem, size = 0x200, scoped, tag = 'prefetched SMEM operand 0']
  %s0 = inlined_call_operand.vmem [shape: s32[16], index: 0, kind: input, shape index: {}]
  %s1 = inlined_call_operand.hbm [shape: f32[128,128], index: 1, kind: input, shape index: {}]
  %s2 = inlined_call_operand.hbm [shape: bf16[2,128,384], index: 2, kind: input, shape index: {}]
  %s3 = inlined_call_operand.vmem [shape: f32[2,1,384], index: 3, kind: input, shape index: {}]
  %s4 = inlined_call_operand.hbm [shape: bf16[2,128,128], index: 4, kind: input, shape index: {}]
  %s5 = inlined_call_operand.vmem [shape: f32[2,1,128], index: 5, kind: input, shape index: {}]
  %s6 = inlined_call_operand.vmem [shape: f32[2,1,128], index: 6, kind: input, shape index: {}]
  %s7 = inlined_call_operand.hbm [shape: f32[2,1,128], index: 7, kind: input, shape index: {}]
  %s8 = inlined_call_operand.hbm [shape: bf16[2,128,2048], index: 8, kind: input, shape index: {}]
  %s9 = inlined_call_operand.hbm [shape: f32[2,1,2048], index: 9, kind: input, shape index: {}]
  %s10 = inlined_call_operand.hbm [shape: bf16[2,2048,128], index: 10, kind: input, shape index: {}]
  %s11 = inlined_call_operand.vmem [shape: f32[2,1,128], index: 11, kind: input, shape index: {}]
  %s12 = inlined_call_operand.vmem [shape: f32[2,1,128], index: 12, kind: input, shape index: {}]
  %s13 = inlined_call_operand.vmem [shape: f32[2,1,128], index: 13, kind: input, shape index: {}]
  %s14 = inlined_call_operand.hbm [shape: bf16[128,128], index: 14, kind: input, shape index: {}]
  %s15 = inlined_call_operand.hbm [shape: f32[1,128], index: 15, kind: input, shape index: {}]
  %s16 = inlined_call_operand.hbm [shape: f32[16,128], index: 16, kind: output, shape index: {}]
  %s17 = sld [smem:[#allocation0]]
  $region137: #{tiny_transformer_forward.1} parent=0
    _
  %s19 = ssub.s32 1, %s17
  %s20 = scalar_select 0, %s19, %s17
  %s22 = sshll.u32 %s0, 4
  %s23 = int_to_ptr.vmem [resolvable:$true] %s22
  %25 = dma.vmem_to_smem %s23, 16, [#allocation4], [#allocation3]
  %27 = dma.done [#allocation3], 16
  %28 = sfence
  $region1: #{tiny_transformer_forward.1} parent=0
    #allocation5 [shape = 'u8[65536]{0}', space=vmem, size = 0x10000, scoped, tag = 'input window, operand 1, single buffered']
    #allocation6 [shape = 's32[2]{0}', space=sflag, size = 0x8, scoped, tag = 'scoped memory for tiny_transformer_forward.1']
    #allocation7 [shape = 's32[2]{0}', space=sflag, size = 0x8, scoped, tag = 'scoped memory for tiny_transformer_forward.1']
    #allocation8 [shape = 'u8[196608]{0}', space=vmem, size = 0x30000, scoped, tag = 'input window, operand 2']
    #allocation9 [shape = 's32[2]{0}', space=sflag, size = 0x8, scoped, tag = 'scoped memory for tiny_transformer_forward.1']
    #allocation10 [shape = 'u8[65536]{0}', space=vmem, size = 0x10000, scoped, tag = 'input window, operand 4']
    #allocation11 [shape = 'u8[1024]{0}', space=vmem, size = 0x400, scoped, tag = 'input window, operand 7']
    #allocation12 [shape = 's32[2]{0}', space=sflag, size = 0x8, scoped, tag = 'scoped memory for tiny_transformer_forward.1']
    #allocation13 [shape = 'u8[1048576]{0}', space=vmem, size = 0x100000, scoped, tag = 'input window, operand 8']
    #allocation14 [shape = 'u8[16384]{0}', space=vmem, size = 0x4000, scoped, tag = 'input window, operand 9']
    #allocation15 [shape = 's32[2]{0}', space=sflag, size = 0x8, scoped, tag = 'scoped memory for tiny_transformer_forward.1']
    #allocation16 [shape = 'u8[1048576]{0}', space=vmem, size = 0x100000, scoped, tag = 'input window, operand 10']
    #allocation17 [shape = 'u8[32768]{0}', space=vmem, size = 0x8000, scoped, tag = 'input window, operand 14, single buffered']
    #allocation18 [shape = 's32[1]{0}', space=sflag, size = 0x4, scoped, tag = 'scoped memory for tiny_transformer_forward.1']
    #allocation19 [shape = 'u8[512]{0}', space=vmem, size = 0x400, scoped, tag = 'input window, operand 15, single buffered']
    #allocation20 [shape = 'u8[8192]{0}', space=vmem, size = 0x2000, scoped, tag = 'output window, operand 0, single buffered']
    %29 = vsyncpa [#allocation6], 0
    %30 = vsyncpa [#allocation9], 0
    %s31 = scalar_lea.sflag [#allocation9], 1
    %32 = vsyncpa %s31, 0
    %33 = vsyncpa [#allocation12], 0
    %s34 = scalar_lea.sflag [#allocation12], 1
    %35 = vsyncpa %s34, 0
    %36 = vsyncpa [#allocation15], 0
    %s37 = scalar_lea.sflag [#allocation15], 1
    %38 = vsyncpa %s37, 0
    %39 = vsyncpa [#allocation18], 0
    %40 = vsyncpa [#allocation7], 0
    loop: start=0, step=1, limit=4
    $region2: #{tiny_transformer_forward.1} parent=1 // loop_pre_header
      _
    $region3: #{tiny_transformer_forward.1} parent=1 // loop_header
      %s42 = sphi 0, %s46
      %p43 = scmp.ge.s32.totalorder %s42, 4
      %s50 = sphi 0, %s50
      %s52 = sphi 0, %s50
      %s53 = sphi 0, %s52
      %s67 = sphi 0, %s53
      %s73 = sphi 0, %s75
      %s76 = sphi 0, %s73
      %s77 = sphi 0, %s76
      %s93 = sphi 0, %s77
      %s99 = sphi 0, %s101
      %s102 = sphi 0, %s99
      %s103 = sphi 0, %s102
      %s119 = sphi 0, %s103
      %s125 = sphi 0, %s127
      %s128 = sphi 0, %s125
      %s129 = sphi 0, %s128
      %s145 = sphi 0, %s129
      %s151 = sphi 0, %s153
      %s154 = sphi 0, %s151
      %s155 = sphi 0, %s154
      %s171 = sphi 0, %s155
      %s177 = sphi 0, %s179
      %s180 = sphi 0, %s177
      %s181 = sphi 0, %s180
      %s197 = sphi 0, %s181
      %s203 = sphi 0, %s205
      %s206 = sphi 0, %s203
      %s207 = sphi 0, %s206
      %s223 = sphi 0, %s207
      %s229 = sphi 0, %s231
      %s232 = sphi 0, %s229
      %s233 = sphi 0, %s232
      %s249 = sphi 0, %s233
      %s255 = sphi 0, %s257
      %s258 = sphi 0, %s255
      %s259 = sphi 0, %s258
      %s275 = sphi 0, %s259
      %s281 = sphi 0, %s283
      %s284 = sphi 0, %s281
      %s285 = sphi 0, %s284
      %s301 = sphi 0, %s285
      %s307 = sphi 0, %s309
      %s310 = sphi 0, %s307
      %s311 = sphi 0, %s310
      %s327 = sphi 0, %s311
      %s333 = sphi 0, %s335
      %s336 = sphi 0, %s333
      %s337 = sphi 0, %s336
      %s353 = sphi 0, %s337
      %s359 = sphi 0, %s361
      %s362 = sphi 0, %s359
      %s363 = sphi 0, %s362
      %s379 = sphi 0, %s363
      %s383 = sphi 0, %s383
      %s385 = sphi 0, %s383
      %s386 = sphi 0, %s385
      %s400 = sphi 0, %s386
      %s404 = sphi 0, %s404
      %s406 = sphi 0, %s404
      %s407 = sphi 0, %s406
      %s421 = sphi 0, %s407
      %s425 = sphi 0, %s425
      %s427 = sphi 0, %s425
      %s428 = sphi 0, %s427
      %s442 = sphi 0, %s428
    $region4: #{tiny_transformer_forward.1} parent=1 // loop_header_branch
      %45 = sbr.rel (%p43) target = $region8
    $region5: #{tiny_transformer_forward.1} parent=1 // loop_body
      %s47 = ssub.s32 %s42, 1
      %s48 = ssub.s32 %s42, 2
      %s49 = sadd.s32 %s42, 1
      %s51 = sadd.s32 %s50, 1
      %p54 = scmp.eq.s32.totalorder %s42, 1
      %p55 = scmp.ne.s32.totalorder %s50, %s52
      %p56 = scmp.eq.s32.totalorder %s42, 0
      %p57 = por %p55, %p56
      %p58 = scmp.ne.s32.totalorder %s50, %s52
      %p59 = scmp.eq.s32.totalorder %s47, 1
      %p60 = por %p58, %p59
      %p61 = scmp.ne.s32.totalorder %s52, %s53
      %p62 = scmp.eq.s32.totalorder %s47, 0
      %p63 = por %p61, %p62
      %p64 = scmp.ne.s32.totalorder %s52, %s53
      %p65 = scmp.eq.s32.totalorder %s48, 1
      %p66 = por %p64, %p65
      %p68 = scmp.ne.s32.totalorder %s53, %s67
      %p69 = scmp.eq.s32.totalorder %s48, 0
      %p70 = por %p68, %p69
      %s71 = ssub.s32 %s42, %s49
      %p72 = scmp.eq.s32.totalorder %s71, 0
      %s74 = sadd.s32 %s73, 1
      %s75 = scalar_select %p72, %s73, %s74
      %p78 = pneg %p72
      %p79 = scmp.eq.s32.totalorder %s42, 1
      %p80 = por %p78, %p79
      %p81 = scmp.ne.s32.totalorder %s73, %s76
      %p82 = scmp.eq.s32.totalorder %s42, 0
      %p83 = por %p81, %p82
      %p84 = scmp.ne.s32.totalorder %s73, %s76
      %p85 = scmp.eq.s32.totalorder %s47, 1
      %p86 = por %p84, %p85
      %p87 = scmp.ne.s32.totalorder %s76, %s77
      %p88 = scmp.eq.s32.totalorder %s47, 0
      %p89 = por %p87, %p88
      %p90 = scmp.ne.s32.totalorder %s76, %s77
      %p91 = scmp.eq.s32.totalorder %s48, 1
      %p92 = por %p90, %p91
      %p94 = scmp.ne.s32.totalorder %s77, %s93
      %p95 = scmp.eq.s32.totalorder %s48, 0
      %p96 = por %p94, %p95
      %s97 = ssub.s32 %s42, %s49
      %p98 = scmp.eq.s32.totalorder %s97, 0
      %s100 = sadd.s32 %s99, 1
      %s101 = scalar_select %p98, %s99, %s100
      %p104 = pneg %p98
      %p105 = scmp.eq.s32.totalorder %s42, 1
      %p106 = por %p104, %p105
      %p107 = scmp.ne.s32.totalorder %s99, %s102
      %p108 = scmp.eq.s32.totalorder %s42, 0
      %p109 = por %p107, %p108
      %p110 = scmp.ne.s32.totalorder %s99, %s102
      %p111 = scmp.eq.s32.totalorder %s47, 1
      %p112 = por %p110, %p111
      %p113 = scmp.ne.s32.totalorder %s102, %s103
      %p114 = scmp.eq.s32.totalorder %s47, 0
      %p115 = por %p113, %p114
      %p116 = scmp.ne.s32.totalorder %s102, %s103
      %p117 = scmp.eq.s32.totalorder %s48, 1
      %p118 = por %p116, %p117
      %p120 = scmp.ne.s32.totalorder %s103, %s119
      %p121 = scmp.eq.s32.totalorder %s48, 0
      %p122 = por %p120, %p121
      %s123 = ssub.s32 %s42, %s49
      %p124 = scmp.eq.s32.totalorder %s123, 0
      %s126 = sadd.s32 %s125, 1
      %s127 = scalar_select %p124, %s125, %s126
      %p130 = pneg %p124
      %p131 = scmp.eq.s32.totalorder %s42, 1
      %p132 = por %p130, %p131
      %p133 = scmp.ne.s32.totalorder %s125, %s128
      %p134 = scmp.eq.s32.totalorder %s42, 0
      %p135 = por %p133, %p134
      %p136 = scmp.ne.s32.totalorder %s125, %s128
      %p137 = scmp.eq.s32.totalorder %s47, 1
      %p138 = por %p136, %p137
      %p139 = scmp.ne.s32.totalorder %s128, %s129
      %p140 = scmp.eq.s32.totalorder %s47, 0
      %p141 = por %p139, %p140
      %p142 = scmp.ne.s32.totalorder %s128, %s129
      %p143 = scmp.eq.s32.totalorder %s48, 1
      %p144 = por %p142, %p143
      %p146 = scmp.ne.s32.totalorder %s129, %s145
      %p147 = scmp.eq.s32.totalorder %s48, 0
      %p148 = por %p146, %p147
      %s149 = ssub.s32 %s42, %s49
      %p150 = scmp.eq.s32.totalorder %s149, 0
      %s152 = sadd.s32 %s151, 1
      %s153 = scalar_select %p150, %s151, %s152
      %p156 = pneg %p150
      %p157 = scmp.eq.s32.totalorder %s42, 1
      %p158 = por %p156, %p157
      %p159 = scmp.ne.s32.totalorder %s151, %s154
      %p160 = scmp.eq.s32.totalorder %s42, 0
      %p161 = por %p159, %p160
      %p162 = scmp.ne.s32.totalorder %s151, %s154
      %p163 = scmp.eq.s32.totalorder %s47, 1
      %p164 = por %p162, %p163
      %p165 = scmp.ne.s32.totalorder %s154, %s155
      %p166 = scmp.eq.s32.totalorder %s47, 0
      %p167 = por %p165, %p166
      %p168 = scmp.ne.s32.totalorder %s154, %s155
      %p169 = scmp.eq.s32.totalorder %s48, 1
      %p170 = por %p168, %p169
      %p172 = scmp.ne.s32.totalorder %s155, %s171
      %p173 = scmp.eq.s32.totalorder %s48, 0
      %p174 = por %p172, %p173
      %s175 = ssub.s32 %s42, %s49
      %p176 = scmp.eq.s32.totalorder %s175, 0
      %s178 = sadd.s32 %s177, 1
      %s179 = scalar_select %p176, %s177, %s178
      %p182 = pneg %p176
      %p183 = scmp.eq.s32.totalorder %s42, 1
      %p184 = por %p182, %p183
      %p185 = scmp.ne.s32.totalorder %s177, %s180
      %p186 = scmp.eq.s32.totalorder %s42, 0
      %p187 = por %p185, %p186
      %p188 = scmp.ne.s32.totalorder %s177, %s180
      %p189 = scmp.eq.s32.totalorder %s47, 1
      %p190 = por %p188, %p189
      %p191 = scmp.ne.s32.totalorder %s180, %s181
      %p192 = scmp.eq.s32.totalorder %s47, 0
      %p193 = por %p191, %p192
      %p194 = scmp.ne.s32.totalorder %s180, %s181
      %p195 = scmp.eq.s32.totalorder %s48, 1
      %p196 = por %p194, %p195
      %p198 = scmp.ne.s32.totalorder %s181, %s197
      %p199 = scmp.eq.s32.totalorder %s48, 0
      %p200 = por %p198, %p199
      %s201 = ssub.s32 %s42, %s49
      %p202 = scmp.eq.s32.totalorder %s201, 0
      %s204 = sadd.s32 %s203, 1
      %s205 = scalar_select %p202, %s203, %s204
      %p208 = pneg %p202
      %p209 = scmp.eq.s32.totalorder %s42, 1
      %p210 = por %p208, %p209
      %p211 = scmp.ne.s32.totalorder %s203, %s206
      %p212 = scmp.eq.s32.totalorder %s42, 0
      %p213 = por %p211, %p212
      %p214 = scmp.ne.s32.totalorder %s203, %s206
      %p215 = scmp.eq.s32.totalorder %s47, 1
      %p216 = por %p214, %p215
      %p217 = scmp.ne.s32.totalorder %s206, %s207
      %p218 = scmp.eq.s32.totalorder %s47, 0
      %p219 = por %p217, %p218
      %p220 = scmp.ne.s32.totalorder %s206, %s207
      %p221 = scmp.eq.s32.totalorder %s48, 1
      %p222 = por %p220, %p221
      %p224 = scmp.ne.s32.totalorder %s207, %s223
      %p225 = scmp.eq.s32.totalorder %s48, 0
      %p226 = por %p224, %p225
      %s227 = ssub.s32 %s42, %s49
      %p228 = scmp.eq.s32.totalorder %s227, 0
      %s230 = sadd.s32 %s229, 1
      %s231 = scalar_select %p228, %s229, %s230
      %p234 = pneg %p228
      %p235 = scmp.eq.s32.totalorder %s42, 1
      %p236 = por %p234, %p235
      %p237 = scmp.ne.s32.totalorder %s229, %s232
      %p238 = scmp.eq.s32.totalorder %s42, 0
      %p239 = por %p237, %p238
      %p240 = scmp.ne.s32.totalorder %s229, %s232
      %p241 = scmp.eq.s32.totalorder %s47, 1
      %p242 = por %p240, %p241
      %p243 = scmp.ne.s32.totalorder %s232, %s233
      %p244 = scmp.eq.s32.totalorder %s47, 0
      %p245 = por %p243, %p244
      %p246 = scmp.ne.s32.totalorder %s232, %s233
      %p247 = scmp.eq.s32.totalorder %s48, 1
      %p248 = por %p246, %p247
      %p250 = scmp.ne.s32.totalorder %s233, %s249
      %p251 = scmp.eq.s32.totalorder %s48, 0
      %p252 = por %p250, %p251
      %s253 = ssub.s32 %s42, %s49
      %p254 = scmp.eq.s32.totalorder %s253, 0
      %s256 = sadd.s32 %s255, 1
      %s257 = scalar_select %p254, %s255, %s256
      %p260 = pneg %p254
      %p261 = scmp.eq.s32.totalorder %s42, 1
      %p262 = por %p260, %p261
      %p263 = scmp.ne.s32.totalorder %s255, %s258
      %p264 = scmp.eq.s32.totalorder %s42, 0
      %p265 = por %p263, %p264
      %p266 = scmp.ne.s32.totalorder %s255, %s258
      %p267 = scmp.eq.s32.totalorder %s47, 1
      %p268 = por %p266, %p267
      %p269 = scmp.ne.s32.totalorder %s258, %s259
      %p270 = scmp.eq.s32.totalorder %s47, 0
      %p271 = por %p269, %p270
      %p272 = scmp.ne.s32.totalorder %s258, %s259
      %p273 = scmp.eq.s32.totalorder %s48, 1
      %p274 = por %p272, %p273
      %p276 = scmp.ne.s32.totalorder %s259, %s275
      %p277 = scmp.eq.s32.totalorder %s48, 0
      %p278 = por %p276, %p277
      %s279 = ssub.s32 %s42, %s49
      %p280 = scmp.eq.s32.totalorder %s279, 0
      %s282 = sadd.s32 %s281, 1
      %s283 = scalar_select %p280, %s281, %s282
      %p286 = pneg %p280
      %p287 = scmp.eq.s32.totalorder %s42, 1
      %p288 = por %p286, %p287
      %p289 = scmp.ne.s32.totalorder %s281, %s284
      %p290 = scmp.eq.s32.totalorder %s42, 0
      %p291 = por %p289, %p290
      %p292 = scmp.ne.s32.totalorder %s281, %s284
      %p293 = scmp.eq.s32.totalorder %s47, 1
      %p294 = por %p292, %p293
      %p295 = scmp.ne.s32.totalorder %s284, %s285
      %p296 = scmp.eq.s32.totalorder %s47, 0
      %p297 = por %p295, %p296
      %p298 = scmp.ne.s32.totalorder %s284, %s285
      %p299 = scmp.eq.s32.totalorder %s48, 1
      %p300 = por %p298, %p299
      %p302 = scmp.ne.s32.totalorder %s285, %s301
      %p303 = scmp.eq.s32.totalorder %s48, 0
      %p304 = por %p302, %p303
      %s305 = ssub.s32 %s42, %s49
      %p306 = scmp.eq.s32.totalorder %s305, 0
      %s308 = sadd.s32 %s307, 1
      %s309 = scalar_select %p306, %s307, %s308
      %p312 = pneg %p306
      %p313 = scmp.eq.s32.totalorder %s42, 1
      %p314 = por %p312, %p313
      %p315 = scmp.ne.s32.totalorder %s307, %s310
      %p316 = scmp.eq.s32.totalorder %s42, 0
      %p317 = por %p315, %p316
      %p318 = scmp.ne.s32.totalorder %s307, %s310
      %p319 = scmp.eq.s32.totalorder %s47, 1
      %p320 = por %p318, %p319
      %p321 = scmp.ne.s32.totalorder %s310, %s311
      %p322 = scmp.eq.s32.totalorder %s47, 0
      %p323 = por %p321, %p322
      %p324 = scmp.ne.s32.totalorder %s310, %s311
      %p325 = scmp.eq.s32.totalorder %s48, 1
      %p326 = por %p324, %p325
      %p328 = scmp.ne.s32.totalorder %s311, %s327
      %p329 = scmp.eq.s32.totalorder %s48, 0
      %p330 = por %p328, %p329
      %s331 = ssub.s32 %s42, %s49
      %p332 = scmp.eq.s32.totalorder %s331, 0
      %s334 = sadd.s32 %s333, 1
      %s335 = scalar_select %p332, %s333, %s334
      %p338 = pneg %p332
      %p339 = scmp.eq.s32.totalorder %s42, 1
      %p340 = por %p338, %p339
      %p341 = scmp.ne.s32.totalorder %s333, %s336
      %p342 = scmp.eq.s32.totalorder %s42, 0
      %p343 = por %p341, %p342
      %p344 = scmp.ne.s32.totalorder %s333, %s336
      %p345 = scmp.eq.s32.totalorder %s47, 1
      %p346 = por %p344, %p345
      %p347 = scmp.ne.s32.totalorder %s336, %s337
      %p348 = scmp.eq.s32.totalorder %s47, 0
      %p349 = por %p347, %p348
      %p350 = scmp.ne.s32.totalorder %s336, %s337
      %p351 = scmp.eq.s32.totalorder %s48, 1
      %p352 = por %p350, %p351
      %p354 = scmp.ne.s32.totalorder %s337, %s353
      %p355 = scmp.eq.s32.totalorder %s48, 0
      %p356 = por %p354, %p355
      %s357 = ssub.s32 %s42, %s49
      %p358 = scmp.eq.s32.totalorder %s357, 0
      %s360 = sadd.s32 %s359, 1
      %s361 = scalar_select %p358, %s359, %s360
      %p364 = pneg %p358
      %p365 = scmp.eq.s32.totalorder %s42, 1
      %p366 = por %p364, %p365
      %p367 = scmp.ne.s32.totalorder %s359, %s362
      %p368 = scmp.eq.s32.totalorder %s42, 0
      %p369 = por %p367, %p368
      %p370 = scmp.ne.s32.totalorder %s359, %s362
      %p371 = scmp.eq.s32.totalorder %s47, 1
      %p372 = por %p370, %p371
      %p373 = scmp.ne.s32.totalorder %s362, %s363
      %p374 = scmp.eq.s32.totalorder %s47, 0
      %p375 = por %p373, %p374
      %p376 = scmp.ne.s32.totalorder %s362, %s363
      %p377 = scmp.eq.s32.totalorder %s48, 1
      %p378 = por %p376, %p377
      %p380 = scmp.ne.s32.totalorder %s363, %s379
      %p381 = scmp.eq.s32.totalorder %s48, 0
      %p382 = por %p380, %p381
      %s384 = sadd.s32 %s383, 1
      %p387 = scmp.eq.s32.totalorder %s42, 1
      %p388 = scmp.ne.s32.totalorder %s383, %s385
      %p389 = scmp.eq.s32.totalorder %s42, 0
      %p390 = por %p388, %p389
      %p391 = scmp.ne.s32.totalorder %s383, %s385
      %p392 = scmp.eq.s32.totalorder %s47, 1
      %p393 = por %p391, %p392
      %p394 = scmp.ne.s32.totalorder %s385, %s386
      %p395 = scmp.eq.s32.totalorder %s47, 0
      %p396 = por %p394, %p395
      %p397 = scmp.ne.s32.totalorder %s385, %s386
      %p398 = scmp.eq.s32.totalorder %s48, 1
      %p399 = por %p397, %p398
      %p401 = scmp.ne.s32.totalorder %s386, %s400
      %p402 = scmp.eq.s32.totalorder %s48, 0
      %p403 = por %p401, %p402
      %s405 = sadd.s32 %s404, 1
      %p408 = scmp.eq.s32.totalorder %s42, 1
      %p409 = scmp.ne.s32.totalorder %s404, %s406
      %p410 = scmp.eq.s32.totalorder %s42, 0
      %p411 = por %p409, %p410
      %p412 = scmp.ne.s32.totalorder %s404, %s406
      %p413 = scmp.eq.s32.totalorder %s47, 1
      %p414 = por %p412, %p413
      %p415 = scmp.ne.s32.totalorder %s406, %s407
      %p416 = scmp.eq.s32.totalorder %s47, 0
      %p417 = por %p415, %p416
      %p418 = scmp.ne.s32.totalorder %s406, %s407
      %p419 = scmp.eq.s32.totalorder %s48, 1
      %p420 = por %p418, %p419
      %p422 = scmp.ne.s32.totalorder %s407, %s421
      %p423 = scmp.eq.s32.totalorder %s48, 0
      %p424 = por %p422, %p423
      %s426 = sadd.s32 %s425, 1
      %p429 = scmp.eq.s32.totalorder %s42, 1
      %p430 = scmp.ne.s32.totalorder %s425, %s427
      %p431 = scmp.eq.s32.totalorder %s42, 0
      %p432 = por %p430, %p431
      %p433 = scmp.ne.s32.totalorder %s425, %s427
      %p434 = scmp.eq.s32.totalorder %s47, 1
      %p435 = por %p433, %p434
      %p436 = scmp.ne.s32.totalorder %s427, %s428
      %p437 = scmp.eq.s32.totalorder %s47, 0
      %p438 = por %p436, %p437
      %p439 = scmp.ne.s32.totalorder %s427, %s428
      %p440 = scmp.eq.s32.totalorder %s48, 1
      %p441 = por %p439, %p440
      %p443 = scmp.ne.s32.totalorder %s428, %s442
      %p444 = scmp.eq.s32.totalorder %s48, 0
      %p445 = por %p443, %p444
      %p446 = scmp.le.s32.totalorder 1, %s42
      %p447 = scmp.lt.s32.totalorder %s42, 3
      %p448 = pnand %p446, %p447
      %p449 = pneg %p448
      // Predicated region
      $region9: #{tiny_transformer_forward.1} parent=5 // pred_check
        _
      $region10: #{tiny_transformer_forward.1} parent=5 // pred_check_branch
        %451 = sbr.rel (%p448) target = $region12
      $region11: #{tiny_transformer_forward.1} parent=5 // pred_region
        %s452 = ssub.s32 %s42, 1
        // Predicated region
        $region13: #{tiny_transformer_forward.1} parent=11 // pred_check
          %p453 = pneg %p63
        $region14: #{tiny_transformer_forward.1} parent=11 // pred_check_branch
          %455 = sbr.rel (%p453) target = $region16
        $region15: #{tiny_transformer_forward.1} parent=11 // pred_region
          %457 = vsyncadd [#allocation6], 0
          %s458 = sshll.u32 %s1, 4
          %s459 = int_to_ptr.hbm [resolvable:$true] %s458
          %s460 = sshll.u32 [#allocation5], 4
          %s461 = int_to_ptr.vmem [resolvable:$true] %s460
          %466 = dma.hbm_to_vmem [thread:$0]  %s459, 2048, %s461, [#allocation6], 128, 128, 8
        $region16: #{tiny_transformer_forward.1} parent=11 // pred_fallthru
          _
        // Predicated region
        $region17: #{tiny_transformer_forward.1} parent=11 // pred_check
          %p467 = pneg %p396
        $region18: #{tiny_transformer_forward.1} parent=11 // pred_check_branch
          %469 = sbr.rel (%p467) target = $region20
        $region19: #{tiny_transformer_forward.1} parent=11 // pred_region
          %471 = vsyncadd [#allocation18], 0
          %s472 = sshll.u32 %s14, 4
          %s473 = int_to_ptr.hbm [resolvable:$true] %s472
          %s474 = sshll.u32 [#allocation17], 4
          %s475 = int_to_ptr.vmem [resolvable:$true] %s474
          %480 = dma.hbm_to_vmem [thread:$0]  %s473, 1024, %s475, [#allocation18], 64, 64, 4
        $region20: #{tiny_transformer_forward.1} parent=11 // pred_fallthru
          _
        // Predicated region
        $region21: #{tiny_transformer_forward.1} parent=11 // pred_check
          %p481 = pneg %p417
        $region22: #{tiny_transformer_forward.1} parent=11 // pred_check_branch
          %483 = sbr.rel (%p481) target = $region24
        $region23: #{tiny_transformer_forward.1} parent=11 // pred_region
          %485 = vsyncadd [#allocation18], 0
          %s487 = sshll.u32 %s15, 4
          %s488 = int_to_ptr.hbm [resolvable:$true] %s487
          %s489 = sshll.u32 [#allocation19], 4
          %s490 = int_to_ptr.vmem [resolvable:$true] %s489
          %492 = dma.hbm_to_vmem [thread:$0]  %s488, 16, %s490, [#allocation18]
        $region24: #{tiny_transformer_forward.1} parent=11 // pred_fallthru
          _
      $region12: #{tiny_transformer_forward.1} parent=5 // pred_fallthru
        _
      %p493 = scmp.lt.s32.totalorder %s42, 2
      // Predicated region
      $region25: #{tiny_transformer_forward.1} parent=5 // pred_check
        %p494 = pneg %p493
      $region26: #{tiny_transformer_forward.1} parent=5 // pred_check_branch
        %496 = sbr.rel (%p494) target = $region28
      $region27: #{tiny_transformer_forward.1} parent=5 // pred_region
        // Predicated region
        $region29: #{tiny_transformer_forward.1} parent=27 // pred_check
          %p497 = pneg %p83
        $region30: #{tiny_transformer_forward.1} parent=27 // pred_check_branch
          %499 = sbr.rel (%p497) target = $region32
        $region31: #{tiny_transformer_forward.1} parent=27 // pred_region
          %s500 = sand.u32 %s42, 1
          %s501 = scalar_lea.sflag [#allocation9], %s500
          %s502 = sand.u32 %s73, 1
          %s503 = smul.addr %s502, 192
          %s504 = scalar_lea.vmem [#allocation8], %s503
          %506 = vsyncadd %s501, 0
          %s507 = smul.addr %s42, 48
          %s508 = smul.addr %s507, 4
          %s509 = scalar_lea.hbm %s2, %s508
          %s510 = sshll.u32 %s509, 4
          %s511 = int_to_ptr.hbm [resolvable:$true] %s510
          %s512 = sshll.u32 %s504, 4
          %s513 = int_to_ptr.vmem [resolvable:$true] %s512
          %518 = dma.hbm_to_vmem [thread:$0]  %s511, 3072, %s513, %s501, 192, 192, 12
        $region32: #{tiny_transformer_forward.1} parent=27 // pred_fallthru
          _
        // Predicated region
        $region33: #{tiny_transformer_forward.1} parent=27 // pred_check
          %p519 = pneg %p109
        $region34: #{tiny_transformer_forward.1} parent=27 // pred_check_branch
          %521 = sbr.rel (%p519) target = $region36
        $region35: #{tiny_transformer_forward.1} parent=27 // pred_region
          %p522 = scmp.lt.s32.totalorder %s42, 1
          %s523 = scalar_select %p522, %s42, 1
          %s524 = smul.addr %s523, 3
          %s525 = scalar_lea.vmem %s3, %s524
        $region36: #{tiny_transformer_forward.1} parent=27 // pred_fallthru
          _
        // Predicated region
        $region37: #{tiny_transformer_forward.1} parent=27 // pred_check
          %p526 = pneg %p135
        $region38: #{tiny_transformer_forward.1} parent=27 // pred_check_branch
          %528 = sbr.rel (%p526) target = $region40
        $region39: #{tiny_transformer_forward.1} parent=27 // pred_region
          %s529 = sand.u32 %s42, 1
          %s530 = scalar_lea.sflag [#allocation9], %s529
          %s531 = sand.u32 %s125, 1
          %s532 = smul.addr %s531, 64
          %s533 = scalar_lea.vmem [#allocation10], %s532
          %535 = vsyncadd %s530, 0
          %s536 = smul.addr %s42, 16
          %s537 = smul.addr %s536, 4
          %s538 = scalar_lea.hbm %s4, %s537
          %s539 = sshll.u32 %s538, 4
          %s540 = int_to_ptr.hbm [resolvable:$true] %s539
          %s541 = sshll.u32 %s533, 4
          %s542 = int_to_ptr.vmem [resolvable:$true] %s541
          %547 = dma.hbm_to_vmem [thread:$0]  %s540, 1024, %s542, %s530, 64, 64, 4
        $region40: #{tiny_transformer_forward.1} parent=27 // pred_fallthru
          _
        // Predicated region
        $region41: #{tiny_transformer_forward.1} parent=27 // pred_check
          %p548 = pneg %p161
        $region42: #{tiny_transformer_forward.1} parent=27 // pred_check_branch
          %550 = sbr.rel (%p548) target = $region44
        $region43: #{tiny_transformer_forward.1} parent=27 // pred_region
          %p551 = scmp.lt.s32.totalorder %s42, 1
          %s552 = scalar_select %p551, %s42, 1
          %s553 = scalar_lea.vmem %s5, %s552
        $region44: #{tiny_transformer_forward.1} parent=27 // pred_fallthru
          _
        // Predicated region
        $region45: #{tiny_transformer_forward.1} parent=27 // pred_check
          %p554 = pneg %p187
        $region46: #{tiny_transformer_forward.1} parent=27 // pred_check_branch
          %556 = sbr.rel (%p554) target = $region48
        $region47: #{tiny_transformer_forward.1} parent=27 // pred_region
          %p557 = scmp.lt.s32.totalorder %s42, 1
          %s558 = scalar_select %p557, %s42, 1
          %s559 = scalar_lea.vmem %s6, %s558
        $region48: #{tiny_transformer_forward.1} parent=27 // pred_fallthru
          _
        // Predicated region
        $region49: #{tiny_transformer_forward.1} parent=27 // pred_check
          %p560 = pneg %p213
        $region50: #{tiny_transformer_forward.1} parent=27 // pred_check_branch
          %562 = sbr.rel (%p560) target = $region52
        $region51: #{tiny_transformer_forward.1} parent=27 // pred_region
          %s563 = sand.u32 %s42, 1
          %s564 = scalar_lea.sflag [#allocation12], %s563
          %s565 = sand.u32 %s203, 1
          %s566 = scalar_lea.vmem [#allocation11], %s565
          %568 = vsyncadd %s564, 0
          %s569 = scalar_lea.hbm %s7, %s42
          %s571 = sshll.u32 %s569, 4
          %s572 = int_to_ptr.hbm [resolvable:$true] %s571
          %s573 = sshll.u32 %s566, 4
          %s574 = int_to_ptr.vmem [resolvable:$true] %s573
          %576 = dma.hbm_to_vmem [thread:$0]  %s572, 16, %s574, %s564
        $region52: #{tiny_transformer_forward.1} parent=27 // pred_fallthru
          _
        // Predicated region
        $region53: #{tiny_transformer_forward.1} parent=27 // pred_check
          %p577 = pneg %p239
        $region54: #{tiny_transformer_forward.1} parent=27 // pred_check_branch
          %579 = sbr.rel (%p577) target = $region56
        $region55: #{tiny_transformer_forward.1} parent=27 // pred_region
          %s580 = sand.u32 %s42, 1
          %s581 = scalar_lea.sflag [#allocation12], %s580
          %s582 = sand.u32 %s229, 1
          %s583 = smul.addr %s582, 1024
          %s584 = scalar_lea.vmem [#allocation13], %s583
          %586 = vsyncadd %s581, 0
          %s587 = smul.addr %s42, 256
          %s588 = smul.addr %s587, 4
          %s589 = scalar_lea.hbm %s8, %s588
          %s590 = sshll.u32 %s589, 4
          %s591 = int_to_ptr.hbm [resolvable:$true] %s590
          %s592 = sshll.u32 %s584, 4
          %s593 = int_to_ptr.vmem [resolvable:$true] %s592
          %598 = dma.hbm_to_vmem [thread:$0]  %s591, 16384, %s593, %s581, 1024, 1024, 64
        $region56: #{tiny_transformer_forward.1} parent=27 // pred_fallthru
          _
        // Predicated region
        $region57: #{tiny_transformer_forward.1} parent=27 // pred_check
          %p599 = pneg %p265
        $region58: #{tiny_transformer_forward.1} parent=27 // pred_check_branch
          %601 = sbr.rel (%p599) target = $region60
        $region59: #{tiny_transformer_forward.1} parent=27 // pred_region
          %s602 = sand.u32 %s42, 1
          %s603 = scalar_lea.sflag [#allocation15], %s602
          %s604 = sand.u32 %s255, 1
          %s605 = smul.addr %s604, 16
          %s606 = scalar_lea.vmem [#allocation14], %s605
          %608 = vsyncadd %s603, 0
          %s609 = smul.addr %s42, 16
          %s610 = scalar_lea.hbm %s9, %s609
          %s612 = sshll.u32 %s610, 4
          %s613 = int_to_ptr.hbm [resolvable:$true] %s612
          %s614 = sshll.u32 %s606, 4
          %s615 = int_to_ptr.vmem [resolvable:$true] %s614
          %617 = dma.hbm_to_vmem [thread:$0]  %s613, 256, %s615, %s603
        $region60: #{tiny_transformer_forward.1} parent=27 // pred_fallthru
          _
        // Predicated region
        $region61: #{tiny_transformer_forward.1} parent=27 // pred_check
          %p618 = pneg %p291
        $region62: #{tiny_transformer_forward.1} parent=27 // pred_check_branch
          %620 = sbr.rel (%p618) target = $region64
        $region63: #{tiny_transformer_forward.1} parent=27 // pred_region
          %s621 = sand.u32 %s42, 1
          %s622 = scalar_lea.sflag [#allocation15], %s621
          %s623 = sand.u32 %s281, 1
          %s624 = smul.addr %s623, 1024
          %s625 = scalar_lea.vmem [#allocation16], %s624
          %627 = vsyncadd %s622, 0
          %s628 = smul.addr %s42, 256
          %s629 = smul.addr %s628, 4
          %s630 = scalar_lea.hbm %s10, %s629
          %s631 = sshll.u32 %s630, 4
          %s632 = int_to_ptr.hbm [resolvable:$true] %s631
          %s633 = sshll.u32 %s625, 4
          %s634 = int_to_ptr.vmem [resolvable:$true] %s633
          %639 = dma.hbm_to_vmem [thread:$0]  %s632, 16384, %s634, %s622, 64, 64, 4
        $region64: #{tiny_transformer_forward.1} parent=27 // pred_fallthru
          _
        // Predicated region
        $region65: #{tiny_transformer_forward.1} parent=27 // pred_check
          %p640 = pneg %p317
        $region66: #{tiny_transformer_forward.1} parent=27 // pred_check_branch
          %642 = sbr.rel (%p640) target = $region68
        $region67: #{tiny_transformer_forward.1} parent=27 // pred_region
          %p643 = scmp.lt.s32.totalorder %s42, 1
          %s644 = scalar_select %p643, %s42, 1
          %s645 = scalar_lea.vmem %s11, %s644
        $region68: #{tiny_transformer_forward.1} parent=27 // pred_fallthru
          _
        // Predicated region
        $region69: #{tiny_transformer_forward.1} parent=27 // pred_check
          %p646 = pneg %p343
        $region70: #{tiny_transformer_forward.1} parent=27 // pred_check_branch
          %648 = sbr.rel (%p646) target = $region72
        $region71: #{tiny_transformer_forward.1} parent=27 // pred_region
          %p649 = scmp.lt.s32.totalorder %s42, 1
          %s650 = scalar_select %p649, %s42, 1
          %s651 = scalar_lea.vmem %s12, %s650
        $region72: #{tiny_transformer_forward.1} parent=27 // pred_fallthru
          _
        // Predicated region
        $region73: #{tiny_transformer_forward.1} parent=27 // pred_check
          %p652 = pneg %p369
        $region74: #{tiny_transformer_forward.1} parent=27 // pred_check_branch
          %654 = sbr.rel (%p652) target = $region76
        $region75: #{tiny_transformer_forward.1} parent=27 // pred_region
          %p655 = scmp.lt.s32.totalorder %s42, 1
          %s656 = scalar_select %p655, %s42, 1
          %s657 = scalar_lea.vmem %s13, %s656
        $region76: #{tiny_transformer_forward.1} parent=27 // pred_fallthru
          _
      $region28: #{tiny_transformer_forward.1} parent=5 // pred_fallthru
        _
      %p658 = scmp.le.s32.totalorder 1, %s42
      %p659 = scmp.lt.s32.totalorder %s42, 3
      %p660 = pnand %p658, %p659
      %p661 = pneg %p660
      // Predicated region
      $region77: #{tiny_transformer_forward.1} parent=5 // pred_check
        _
      $region78: #{tiny_transformer_forward.1} parent=5 // pred_check_branch
        %663 = sbr.rel (%p660) target = $region80
      $region79: #{tiny_transformer_forward.1} parent=5 // pred_region
        %s664 = ssub.s32 %s42, 1
        // Predicated region
        $region81: #{tiny_transformer_forward.1} parent=79 // pred_check
          %p665 = pneg %p63
        $region82: #{tiny_transformer_forward.1} parent=79 // pred_check_branch
          %667 = sbr.rel (%p665) target = $region84
        $region83: #{tiny_transformer_forward.1} parent=79 // pred_region
          %669 = dma.done [#allocation6], 2048
        $region84: #{tiny_transformer_forward.1} parent=79 // pred_fallthru
          _
        %s670 = sand.u32 %s47, 1
        %s671 = scalar_lea.sflag [#allocation9], %s670
        %s672 = sand.u32 %s76, 1
        %s673 = smul.addr %s672, 192
        %s674 = scalar_lea.vmem [#allocation8], %s673
        // Predicated region
        $region85: #{tiny_transformer_forward.1} parent=79 // pred_check
          %p675 = pneg %p89
        $region86: #{tiny_transformer_forward.1} parent=79 // pred_check_branch
          %677 = sbr.rel (%p675) target = $region88
        $region87: #{tiny_transformer_forward.1} parent=79 // pred_region
          %679 = dma.done %s671, 3072
        $region88: #{tiny_transformer_forward.1} parent=79 // pred_fallthru
          _
        %s680 = sand.u32 %s47, 1
        %s681 = scalar_lea.sflag [#allocation9], %s680
        %s682 = sand.u32 %s128, 1
        %s683 = smul.addr %s682, 64
        %s684 = scalar_lea.vmem [#allocation10], %s683
        // Predicated region
        $region89: #{tiny_transformer_forward.1} parent=79 // pred_check
          %p685 = pneg %p141
        $region90: #{tiny_transformer_forward.1} parent=79 // pred_check_branch
          %687 = sbr.rel (%p685) target = $region92
        $region91: #{tiny_transformer_forward.1} parent=79 // pred_region
          %689 = dma.done %s681, 1024
        $region92: #{tiny_transformer_forward.1} parent=79 // pred_fallthru
          _
        %s690 = sand.u32 %s47, 1
        %s691 = scalar_lea.sflag [#allocation12], %s690
        %s692 = sand.u32 %s206, 1
        %s693 = scalar_lea.vmem [#allocation11], %s692
        // Predicated region
        $region93: #{tiny_transformer_forward.1} parent=79 // pred_check
          %p694 = pneg %p219
        $region94: #{tiny_transformer_forward.1} parent=79 // pred_check_branch
          %696 = sbr.rel (%p694) target = $region96
        $region95: #{tiny_transformer_forward.1} parent=79 // pred_region
          %698 = dma.done %s691, 16
        $region96: #{tiny_transformer_forward.1} parent=79 // pred_fallthru
          _
        %s699 = sand.u32 %s47, 1
        %s700 = scalar_lea.sflag [#allocation12], %s699
        %s701 = sand.u32 %s232, 1
        %s702 = smul.addr %s701, 1024
        %s703 = scalar_lea.vmem [#allocation13], %s702
        // Predicated region
        $region97: #{tiny_transformer_forward.1} parent=79 // pred_check
          %p704 = pneg %p245
        $region98: #{tiny_transformer_forward.1} parent=79 // pred_check_branch
          %706 = sbr.rel (%p704) target = $region100
        $region99: #{tiny_transformer_forward.1} parent=79 // pred_region
          %708 = dma.done %s700, 16384
        $region100: #{tiny_transformer_forward.1} parent=79 // pred_fallthru
          _
        %s709 = sand.u32 %s47, 1
        %s710 = scalar_lea.sflag [#allocation15], %s709
        %s711 = sand.u32 %s258, 1
        %s712 = smul.addr %s711, 16
        %s713 = scalar_lea.vmem [#allocation14], %s712
        // Predicated region
        $region101: #{tiny_transformer_forward.1} parent=79 // pred_check
          %p714 = pneg %p271
        $region102: #{tiny_transformer_forward.1} parent=79 // pred_check_branch
          %716 = sbr.rel (%p714) target = $region104
        $region103: #{tiny_transformer_forward.1} parent=79 // pred_region
          %718 = dma.done %s710, 256
        $region104: #{tiny_transformer_forward.1} parent=79 // pred_fallthru
          _
        %s719 = sand.u32 %s47, 1
        %s720 = scalar_lea.sflag [#allocation15], %s719
        %s721 = sand.u32 %s284, 1
        %s722 = smul.addr %s721, 1024
        %s723 = scalar_lea.vmem [#allocation16], %s722
        // Predicated region
        $region105: #{tiny_transformer_forward.1} parent=79 // pred_check
          %p724 = pneg %p297
        $region106: #{tiny_transformer_forward.1} parent=79 // pred_check_branch
          %726 = sbr.rel (%p724) target = $region108
        $region107: #{tiny_transformer_forward.1} parent=79 // pred_region
          %728 = dma.done %s720, 16384
        $region108: #{tiny_transformer_forward.1} parent=79 // pred_fallthru
          _
        // Predicated region
        $region109: #{tiny_transformer_forward.1} parent=79 // pred_check
          %p729 = pneg %p396
        $region110: #{tiny_transformer_forward.1} parent=79 // pred_check_branch
          %731 = sbr.rel (%p729) target = $region112
        $region111: #{tiny_transformer_forward.1} parent=79 // pred_region
          %733 = dma.done [#allocation18], 1024
        $region112: #{tiny_transformer_forward.1} parent=79 // pred_fallthru
          _
        // Predicated region
        $region113: #{tiny_transformer_forward.1} parent=79 // pred_check
          %p734 = pneg %p417
        $region114: #{tiny_transformer_forward.1} parent=79 // pred_check_branch
          %736 = sbr.rel (%p734) target = $region116
        $region115: #{tiny_transformer_forward.1} parent=79 // pred_region
          %738 = dma.done [#allocation18], 16
        $region116: #{tiny_transformer_forward.1} parent=79 // pred_fallthru
          _
        %p739 = pneg %p63
        %p740 = pneg %p60
        %s741 = sand.u32 %s47, 1
        %s742 = scalar_lea.sflag [#allocation9], %s741
        %s743 = sand.u32 %s76, 1
        %s744 = smul.addr %s743, 192
        %s745 = scalar_lea.vmem [#allocation8], %s744
        %p746 = pneg %p89
        %p747 = pneg %p86
        %p748 = scmp.lt.s32.totalorder %s47, 1
        %s749 = scalar_select %p748, %s47, 1
        %s750 = smul.addr %s749, 3
        %s751 = scalar_lea.vmem %s3, %s750
        %p752 = pneg %p115
        %p753 = pneg %p112
        %s754 = sand.u32 %s47, 1
        %s755 = scalar_lea.sflag [#allocation9], %s754
        %s756 = sand.u32 %s128, 1
        %s757 = smul.addr %s756, 64
        %s758 = scalar_lea.vmem [#allocation10], %s757
        %p759 = pneg %p141
        %p760 = pneg %p138
        %p761 = scmp.lt.s32.totalorder %s47, 1
        %s762 = scalar_select %p761, %s47, 1
        %s763 = scalar_lea.vmem %s5, %s762
        %p764 = pneg %p167
        %p765 = pneg %p164
        %p766 = scmp.lt.s32.totalorder %s47, 1
        %s767 = scalar_select %p766, %s47, 1
        %s768 = scalar_lea.vmem %s6, %s767
        %p769 = pneg %p193
        %p770 = pneg %p190
        %s771 = sand.u32 %s47, 1
        %s772 = scalar_lea.sflag [#allocation12], %s771
        %s773 = sand.u32 %s206, 1
        %s774 = scalar_lea.vmem [#allocation11], %s773
        %p775 = pneg %p219
        %p776 = pneg %p216
        %s777 = sand.u32 %s47, 1
        %s778 = scalar_lea.sflag [#allocation12], %s777
        %s779 = sand.u32 %s232, 1
        %s780 = smul.addr %s779, 1024
        %s781 = scalar_lea.vmem [#allocation13], %s780
        %p782 = pneg %p245
        %p783 = pneg %p242
        %s784 = sand.u32 %s47, 1
        %s785 = scalar_lea.sflag [#allocation15], %s784
        %s786 = sand.u32 %s258, 1
        %s787 = smul.addr %s786, 16
        %s788 = scalar_lea.vmem [#allocation14], %s787
        %p789 = pneg %p271
        %p790 = pneg %p268
        %s791 = sand.u32 %s47, 1
        %s792 = scalar_lea.sflag [#allocation15], %s791
        %s793 = sand.u32 %s284, 1
        %s794 = smul.addr %s793, 1024
        %s795 = scalar_lea.vmem [#allocation16], %s794
        %p796 = pneg %p297
        %p797 = pneg %p294
        %p798 = scmp.lt.s32.totalorder %s47, 1
        %s799 = scalar_select %p798, %s47, 1
        %s800 = scalar_lea.vmem %s11, %s799
        %p801 = pneg %p323
        %p802 = pneg %p320
        %p803 = scmp.lt.s32.totalorder %s47, 1
        %s804 = scalar_select %p803, %s47, 1
        %s805 = scalar_lea.vmem %s12, %s804
        %p806 = pneg %p349
        %p807 = pneg %p346
        %p808 = scmp.lt.s32.totalorder %s47, 1
        %s809 = scalar_select %p808, %s47, 1
        %s810 = scalar_lea.vmem %s13, %s809
        %p811 = pneg %p375
        %p812 = pneg %p372
        %p813 = pneg %p396
        %p814 = pneg %p393
        %p815 = pneg %p417
        %p816 = pneg %p414
        %p817 = pneg %p438
        %p818 = pneg %p435
        %p819 = scmp.lt.s32.totalorder %s47, 1
        %s820 = scalar_select %p819, %s47, 1
        %s821 = smul.addr %s820, 3
        %s822 = scalar_lea.vmem %s3, %s821
        %p823 = scmp.lt.s32.totalorder %s47, 1
        %s824 = scalar_select %p823, %s47, 1
        %s825 = scalar_lea.vmem %s5, %s824
        %p826 = scmp.lt.s32.totalorder %s47, 1
        %s827 = scalar_select %p826, %s47, 1
        %s828 = scalar_lea.vmem %s6, %s827
        %p829 = scmp.lt.s32.totalorder %s47, 1
        %s830 = scalar_select %p829, %s47, 1
        %s831 = scalar_lea.vmem %s11, %s830
        %p832 = scmp.lt.s32.totalorder %s47, 1
        %s833 = scalar_select %p832, %s47, 1
        %s834 = scalar_lea.vmem %s12, %s833
        %p835 = scmp.lt.s32.totalorder %s47, 1
        %s836 = scalar_select %p835, %s47, 1
        %s837 = scalar_lea.vmem %s13, %s836
        %p839 = scmp.eq.s32.totalorder %s47, 0
        // Predicated region
        $region117: #{tiny_transformer_forward.1} parent=79 // pred_check
          %p840 = pneg %p839
        $region118: #{tiny_transformer_forward.1} parent=79 // pred_check_branch
          %842 = sbr.rel (%p840) target = $region120
        $region119: #{tiny_transformer_forward.1} parent=79 // pred_region
          %s843 = sld [smem:[#allocation4]]
          %s844 = scalar_lea.vmem [#allocation5], %s843
          %v845 = vld [vmem:[%s844] sm:$0x1]
          %846 = vst [vmem:[#allocation2] sm:$0x1] %v845
          %s847 = sld [smem:[#allocation4 + $0x1]]
          %s848 = scalar_lea.vmem [#allocation5], %s847
          %v849 = vld [vmem:[%s848] sm:$0x1]
          %850 = vst [vmem:[#allocation2 + $0x1] sm:$0x1] %v849
          %s851 = sld [smem:[#allocation4 + $0x2]]
          %s852 = scalar_lea.vmem [#allocation5], %s851
          %v853 = vld [vmem:[%s852] sm:$0x1]
          %854 = vst [vmem:[#allocation2 + $0x2] sm:$0x1] %v853
          %s855 = sld [smem:[#allocation4 + $0x3]]
          %s856 = scalar_lea.vmem [#allocation5], %s855
          %v857 = vld [vmem:[%s856] sm:$0x1]
          %858 = vst [vmem:[#allocation2 + $0x3] sm:$0x1] %v857
          %s859 = sld [smem:[#allocation4 + $0x4]]
          %s860 = scalar_lea.vmem [#allocation5], %s859
          %v861 = vld [vmem:[%s860] sm:$0x1]
          %862 = vst [vmem:[#allocation2 + $0x4] sm:$0x1] %v861
          %s863 = sld [smem:[#allocation4 + $0x5]]
          %s864 = scalar_lea.vmem [#allocation5], %s863
          %v865 = vld [vmem:[%s864] sm:$0x1]
          %866 = vst [vmem:[#allocation2 + $0x5] sm:$0x1] %v865
          %s867 = sld [smem:[#allocation4 + $0x6]]
          %s868 = scalar_lea.vmem [#allocation5], %s867
          %v869 = vld [vmem:[%s868] sm:$0x1]
          %870 = vst [vmem:[#allocation2 + $0x6] sm:$0x1] %v869
          %s871 = sld [smem:[#allocation4 + $0x7]]
          %s872 = scalar_lea.vmem [#allocation5], %s871
          %v873 = vld [vmem:[%s872] sm:$0x1]
          %874 = vst [vmem:[#allocation2 + $0x7] sm:$0x1] %v873
          %s875 = sld [smem:[#allocation4 + $0x8]]
          %s876 = scalar_lea.vmem [#allocation5], %s875
          %v877 = vld [vmem:[%s876] sm:$0x1]
          %878 = vst [vmem:[#allocation2 + $0x8] sm:$0x1] %v877
          %s879 = sld [smem:[#allocation4 + $0x9]]
          %s880 = scalar_lea.vmem [#allocation5], %s879
          %v881 = vld [vmem:[%s880] sm:$0x1]
          %882 = vst [vmem:[#allocation2 + $0x9] sm:$0x1] %v881
          %s883 = sld [smem:[#allocation4 + $0xa]]
          %s884 = scalar_lea.vmem [#allocation5], %s883
          %v885 = vld [vmem:[%s884] sm:$0x1]
          %886 = vst [vmem:[#allocation2 + $0xa] sm:$0x1] %v885
          %s887 = sld [smem:[#allocation4 + $0xb]]
          %s888 = scalar_lea.vmem [#allocation5], %s887
          %v889 = vld [vmem:[%s888] sm:$0x1]
          %890 = vst [vmem:[#allocation2 + $0xb] sm:$0x1] %v889
          %s891 = sld [smem:[#allocation4 + $0xc]]
          %s892 = scalar_lea.vmem [#allocation5], %s891
          %v893 = vld [vmem:[%s892] sm:$0x1]
          %894 = vst [vmem:[#allocation2 + $0xc] sm:$0x1] %v893
          %s895 = sld [smem:[#allocation4 + $0xd]]
          %s896 = scalar_lea.vmem [#allocation5], %s895
          %v897 = vld [vmem:[%s896] sm:$0x1]
          %898 = vst [vmem:[#allocation2 + $0xd] sm:$0x1] %v897
          %s899 = sld [smem:[#allocation4 + $0xe]]
          %s900 = scalar_lea.vmem [#allocation5], %s899
          %v901 = vld [vmem:[%s900] sm:$0x1]
          %902 = vst [vmem:[#allocation2 + $0xe] sm:$0x1] %v901
          %s903 = sld [smem:[#allocation4 + $0xf]]
          %s904 = scalar_lea.vmem [#allocation5], %s903
          %v905 = vld [vmem:[%s904] sm:$0x1]
          %906 = vst [vmem:[#allocation2 + $0xf] sm:$0x1] %v905
        $region120: #{tiny_transformer_forward.1} parent=79 // pred_fallthru
          _
        %v907 = vld [vmem:[#allocation2] sm:$0xff]
        %v908 = vld [vmem:[#allocation2 + $0x8] sm:$0xff]
        %v909 = vpack.c.bf16 %v908, %v907
        %v910 = vld [vmem:[%s674] sm:$0xff]
        %v911 = vld [vmem:[%s674 + $0x8] sm:$0xf]
        %v912 = vld [vmem:[%s674 + $0xc] sm:$0xff]
        %v913 = vld [vmem:[%s674 + $0x14] sm:$0xf]
        %v914 = vld [vmem:[%s674 + $0x18] sm:$0xff]
        %v915 = vld [vmem:[%s674 + $0x20] sm:$0xf]
        %v916 = vld [vmem:[%s674 + $0x24] sm:$0xff]
        %v917 = vld [vmem:[%s674 + $0x2c] sm:$0xf]
        %v918 = vld [vmem:[%s674 + $0x30] sm:$0xff]
        %v919 = vld [vmem:[%s674 + $0x38] sm:$0xf]
        %v920 = vld [vmem:[%s674 + $0x3c] sm:$0xff]
        %v921 = vld [vmem:[%s674 + $0x44] sm:$0xf]
        %v922 = vld [vmem:[%s674 + $0x48] sm:$0xff]
        %v923 = vld [vmem:[%s674 + $0x50] sm:$0xf]
        %v924 = vld [vmem:[%s674 + $0x54] sm:$0xff]
        %v925 = vld [vmem:[%s674 + $0x5c] sm:$0xf]
        %v926 = vld [vmem:[%s674 + $0x60] sm:$0xff]
        %v927 = vld [vmem:[%s674 + $0x68] sm:$0xf]
        %v928 = vld [vmem:[%s674 + $0x6c] sm:$0xff]
        %v929 = vld [vmem:[%s674 + $0x74] sm:$0xf]
        %v930 = vld [vmem:[%s674 + $0x78] sm:$0xff]
        %v931 = vld [vmem:[%s674 + $0x80] sm:$0xf]
        %v932 = vld [vmem:[%s674 + $0x84] sm:$0xff]
        %v933 = vld [vmem:[%s674 + $0x8c] sm:$0xf]
        %v934 = vld [vmem:[%s674 + $0x90] sm:$0xff]
        %v935 = vld [vmem:[%s674 + $0x98] sm:$0xf]
        %v936 = vld [vmem:[%s674 + $0x9c] sm:$0xff]
        %v937 = vld [vmem:[%s674 + $0xa4] sm:$0xf]
        %v938 = vld [vmem:[%s674 + $0xa8] sm:$0xff]
        %v939 = vld [vmem:[%s674 + $0xb0] sm:$0xf]
        %v940 = vld [vmem:[%s674 + $0xb4] sm:$0xff]
        %v941 = vld [vmem:[%s674 + $0xbc] sm:$0xf]
        %v942 = vld [vmem:[%s822] sm:$0x7]
        %v944 = vperm.slane %v942, 0
        %v945 = vperm.slane %v942, 1
        %v946 = vperm.slane %v942, 2
        %v982 = vunpack.c.l.b16 %v910
        %v983 = vunpack.c.h.b16 %v910
        %v984 = vunpack.c.l.b16 %v911
        %v985 = vunpack.c.l.b16 %v912
        %v986 = vunpack.c.h.b16 %v912
        %v987 = vunpack.c.l.b16 %v913
        %v988 = vunpack.c.l.b16 %v914
        %v989 = vunpack.c.h.b16 %v914
        %v990 = vunpack.c.l.b16 %v915
        %v991 = vunpack.c.l.b16 %v916
        %v992 = vunpack.c.h.b16 %v916
        %v993 = vunpack.c.l.b16 %v917
        %v994 = vunpack.c.l.b16 %v918
        %v995 = vunpack.c.h.b16 %v918
        %v996 = vunpack.c.l.b16 %v919
        %v997 = vunpack.c.l.b16 %v920
        %v998 = vunpack.c.h.b16 %v920
        %v999 = vunpack.c.l.b16 %v921
        %v1000 = vunpack.c.l.b16 %v922
        %v1001 = vunpack.c.h.b16 %v922
        %v1002 = vunpack.c.l.b16 %v923
        %v1003 = vunpack.c.l.b16 %v924
        %v1004 = vunpack.c.h.b16 %v924
        %v1005 = vunpack.c.l.b16 %v925
        %v1006 = vunpack.c.l.b16 %v926
        %v1007 = vunpack.c.h.b16 %v926
        %v1008 = vunpack.c.l.b16 %v927
        %v1009 = vunpack.c.l.b16 %v928
        %v1010 = vunpack.c.h.b16 %v928
        %v1011 = vunpack.c.l.b16 %v929
        %v1012 = vunpack.c.l.b16 %v930
        %v1013 = vunpack.c.h.b16 %v930
        %v1014 = vunpack.c.l.b16 %v931
        %v1015 = vunpack.c.l.b16 %v932
        %v1016 = vunpack.c.h.b16 %v932
        %v1017 = vunpack.c.l.b16 %v933
        %v1018 = vunpack.c.l.b16 %v934
        %v1019 = vunpack.c.h.b16 %v934
        %v1020 = vunpack.c.l.b16 %v935
        %v1021 = vunpack.c.l.b16 %v936
        %v1022 = vunpack.c.h.b16 %v936
        %v1023 = vunpack.c.l.b16 %v937
        %v1024 = vunpack.c.l.b16 %v938
        %v1025 = vunpack.c.h.b16 %v938
        %v1026 = vunpack.c.l.b16 %v939
        %v1027 = vunpack.c.l.b16 %v940
        %v1028 = vunpack.c.h.b16 %v940
        %v1029 = vunpack.c.l.b16 %v941
        %v1030 = vpack.c.b16 %v985, %v982
        %v1031 = vpack.c.b16 %v986, %v983
        %v1032 = vpack.c.b16 %v987, %v984
        %v1033 = vpack.c.b16 %v991, %v988
        %v1034 = vpack.c.b16 %v992, %v989
        %v1035 = vpack.c.b16 %v993, %v990
        %v1036 = vpack.c.b16 %v997, %v994
        %v1037 = vpack.c.b16 %v998, %v995
        %v1038 = vpack.c.b16 %v999, %v996
        %v1039 = vpack.c.b16 %v1003, %v1000
        %v1040 = vpack.c.b16 %v1004, %v1001
        %v1041 = vpack.c.b16 %v1005, %v1002
        %v1042 = vpack.c.b16 %v1009, %v1006
        %v1043 = vpack.c.b16 %v1010, %v1007
        %v1044 = vpack.c.b16 %v1011, %v1008
        %v1045 = vpack.c.b16 %v1015, %v1012
        %v1046 = vpack.c.b16 %v1016, %v1013
        %v1047 = vpack.c.b16 %v1017, %v1014
        %v1048 = vpack.c.b16 %v1021, %v1018
        %v1049 = vpack.c.b16 %v1022, %v1019
        %v1050 = vpack.c.b16 %v1023, %v1020
        %v1051 = vpack.c.b16 %v1027, %v1024
        %v1052 = vpack.c.b16 %v1028, %v1025
        %v1053 = vpack.c.b16 %v1029, %v1026
        %1078 = vmatpush.bf16.msra.mxu0 %v1051
        %1079 = vmatpush.bf16.msra.mxu0 %v1048
        %1080 = vmatpush.bf16.msra.mxu0 %v1045
        %1081 = vmatpush.bf16.msra.mxu0 %v1042
        %1082 = vmatpush.bf16.msra.mxu0 %v1039
        %1083 = vmatpush.bf16.msra.mxu0 %v1036
        %1084 = vmatpush.bf16.msra.mxu0 %v1033
        %1085 = vmatpush.bf16.msra.mxu0 %v1030
        %1086 = vmatmul.bf16.gmra.mxu0 %v909
        %v1087 = vpop.f32.mrf.mxu0
        %v1088 = vadd.f32 %v944, %v1087
        %v1089 = vpop.f32.mrf.mxu0
        %v1090 = vadd.f32 %v944, %v1089
        %1091 = vdwg.mxu0
        %1092 = vmatpush.bf16.msra.mxu0 %v1052
        %1093 = vmatpush.bf16.msra.mxu0 %v1049
        %1094 = vmatpush.bf16.msra.mxu0 %v1046
        %1095 = vmatpush.bf16.msra.mxu0 %v1043
        %1096 = vmatpush.bf16.msra.mxu0 %v1040
        %1097 = vmatpush.bf16.msra.mxu0 %v1037
        %1098 = vmatpush.bf16.msra.mxu0 %v1034
        %1099 = vmatpush.bf16.msra.mxu0 %v1031
        %1100 = vmatmul.bf16.gmra.mxu0 %v909
        %v1101 = vpop.f32.mrf.mxu0
        %v1102 = vadd.f32 %v945, %v1101
        %v1103 = vpop.f32.mrf.mxu0
        %v1104 = vadd.f32 %v945, %v1103
        %1105 = vdwg.mxu0
        %1106 = vmatpush.bf16.msra.mxu0 %v1053
        %1107 = vmatpush.bf16.msra.mxu0 %v1050
        %1108 = vmatpush.bf16.msra.mxu0 %v1047
        %1109 = vmatpush.bf16.msra.mxu0 %v1044
        %1110 = vmatpush.bf16.msra.mxu0 %v1041
        %1111 = vmatpush.bf16.msra.mxu0 %v1038
        %1112 = vmatpush.bf16.msra.mxu0 %v1035
        %1113 = vmatpush.bf16.msra.mxu0 %v1032
        %1114 = vmatmul.bf16.gmra.mxu0 %v909
        %v1115 = vpop.f32.mrf.mxu0
        %v1116 = vadd.f32 %v946, %v1115
        %v1117 = vpop.f32.mrf.mxu0
        %v1118 = vadd.f32 %v946, %v1117
        %1119 = vdwg.mxu0
        %v1120 = vpack.c.bf16 %v1088, %v1088
        %v1121 = vpack.c.bf16 %v1102, %v1102
        %v1122 = vpack.c.bf16 %v1116, %v1116
        %vm1123 = vcmask 261120
        %v1125 = vsel %vm1123, %v1120, 0
        %v1128 = vsel %vm1123, %v1121, 0
        %1130 = vmatpush.bf16.xpose.msra.mxu0 0
        %1131 = vmatpush.bf16.xpose.msra.mxu0 0
        %1132 = vmatpush.bf16.xpose.msra.mxu0 0
        %1133 = vmatpush.bf16.xpose.msra.mxu0 0
        %1134 = vmatpush.bf16.xpose.msra.mxu0 0
        %1135 = vmatpush.bf16.xpose.msra.mxu0 0
        %1136 = vmatpush.bf16.xpose.msra.mxu0 0
        %1137 = vmatpush.bf16.xpose.msra.mxu0 %v1128
        %1138 = vmatmul.bf16.gmra.mxu0 %v1125
        %v1139 = vpop.f32.mrf.mxu0
        %v1140 = vadd.f32 0.0, %v1139
        %v1141 = vpop.f32.mrf.mxu0
        %1142 = vdwg.mxu0
        %vm1143 = vcmask 64512
        %v1144 = vsel %vm1143, %v1140, -inf
        %1145 = vmax.xlane.f32.xlu0 %v1144
        %v1146 = vpop.xlane.xlu0 %1145
        %v1147 = vsub.f32 %v1140, %v1146
        %v1148 = vmul.f32 %v1147, 1.442695
        %v1149 = vpow.pop %v1148
        %v1150 = vsel %vm1143, %v1149, 0.0
        %1151 = vadd.xlane.f32.xlu0 %v1150
        %v1152 = vpop.xlane.xlu0 %1151
        %v1153 = vrcp.pop %v1152
        %v1154 = vmul.f32 %v1149, %v1153
        %v1155 = vpack.c.bf16 %v1154, %v1154
        %v1157 = vsel %vm1143, %v1155, 0
        %vm1159 = vcmask 1043456
        %v1161 = vsel %vm1159, %v1122, 0
        %1163 = vmatpush.bf16.msra.mxu0 0
        %1164 = vmatpush.bf16.msra.mxu0 0
        %1165 = vmatpush.bf16.msra.mxu0 0
        %1166 = vmatpush.bf16.msra.mxu0 0
        %1167 = vmatpush.bf16.msra.mxu0 0
        %1168 = vmatpush.bf16.msra.mxu0 0
        %1169 = vmatpush.bf16.msra.mxu0 0
        %1170 = vmatpush.bf16.msra.mxu0 %v1161
        %1171 = vmatmul.bf16.gmra.mxu0 %v1157
        %v1172 = vpop.f32.mrf.mxu0
        %v1173 = vadd.f32 0.0, %v1172
        %v1174 = vpop.f32.mrf.mxu0
        %1175 = vdwg.mxu0
        %1177 = vrot.lane.b32.xlu0 %v1120, 96
        %v1178 = vpop.permute.xlu0 %1177
        %1180 = vrot.lane.b32.xlu0 %v1121, 96
        %v1181 = vpop.permute.xlu0 %1180
        %v1183 = vsel %vm1123, %v1178, 0
        %v1186 = vsel %vm1123, %v1181, 0
        %1188 = vmatpush.bf16.xpose.msra.mxu0 0
        %1189 = vmatpush.bf16.xpose.msra.mxu0 0
        %1190 = vmatpush.bf16.xpose.msra.mxu0 0
        %1191 = vmatpush.bf16.xpose.msra.mxu0 0
        %1192 = vmatpush.bf16.xpose.msra.mxu0 0
        %1193 = vmatpush.bf16.xpose.msra.mxu0 0
        %1194 = vmatpush.bf16.xpose.msra.mxu0 0
        %1195 = vmatpush.bf16.xpose.msra.mxu0 %v1186
        %1196 = vmatmul.bf16.gmra.mxu0 %v1183
        %v1197 = vpop.f32.mrf.mxu0
        %v1198 = vadd.f32 0.0, %v1197
        %v1199 = vpop.f32.mrf.mxu0
        %1200 = vdwg.mxu0
        %v1201 = vsel %vm1143, %v1198, -inf
        %1202 = vmax.xlane.f32.xlu0 %v1201
        %v1203 = vpop.xlane.xlu0 %1202
        %v1204 = vsub.f32 %v1198, %v1203
        %v1205 = vmul.f32 %v1204, 1.442695
        %v1206 = vpow.pop %v1205
        %v1207 = vsel %vm1143, %v1206, 0.0
        %1208 = vadd.xlane.f32.xlu0 %v1207
        %v1209 = vpop.xlane.xlu0 %1208
        %v1210 = vrcp.pop %v1209
        %v1211 = vmul.f32 %v1206, %v1210
        %v1212 = vpack.c.bf16 %v1211, %v1211
        %1214 = vrot.lane.b32.xlu0 %v1122, 96
        %v1215 = vpop.permute.xlu0 %1214
        %v1217 = vsel %vm1143, %v1212, 0
        %v1220 = vsel %vm1159, %v1215, 0
        %1222 = vmatpush.bf16.msra.mxu0 0
        %1223 = vmatpush.bf16.msra.mxu0 0
        %1224 = vmatpush.bf16.msra.mxu0 0
        %1225 = vmatpush.bf16.msra.mxu0 0
        %1226 = vmatpush.bf16.msra.mxu0 0
        %1227 = vmatpush.bf16.msra.mxu0 0
        %1228 = vmatpush.bf16.msra.mxu0 0
        %1229 = vmatpush.bf16.msra.mxu0 %v1220
        %1230 = vmatmul.bf16.gmra.mxu0 %v1217
        %v1231 = vpop.f32.mrf.mxu0
        %v1232 = vadd.f32 0.0, %v1231
        %v1233 = vpop.f32.mrf.mxu0
        %1234 = vdwg.mxu0
        %1235 = vrot.lane.b32.xlu0 %v1120, 64
        %v1236 = vpop.permute.xlu0 %1235
        %1237 = vrot.lane.b32.xlu0 %v1121, 64
        %v1238 = vpop.permute.xlu0 %1237
        %v1240 = vsel %vm1123, %v1236, 0
        %v1243 = vsel %vm1123, %v1238, 0
        %1245 = vmatpush.bf16.xpose.msra.mxu0 0
        %1246 = vmatpush.bf16.xpose.msra.mxu0 0
        %1247 = vmatpush.bf16.xpose.msra.mxu0 0
        %1248 = vmatpush.bf16.xpose.msra.mxu0 0
        %1249 = vmatpush.bf16.xpose.msra.mxu0 0
        %1250 = vmatpush.bf16.xpose.msra.mxu0 0
        %1251 = vmatpush.bf16.xpose.msra.mxu0 0
        %1252 = vmatpush.bf16.xpose.msra.mxu0 %v1243
        %1253 = vmatmul.bf16.gmra.mxu0 %v1240
        %v1254 = vpop.f32.mrf.mxu0
        %v1255 = vadd.f32 0.0, %v1254
        %v1256 = vpop.f32.mrf.mxu0
        %1257 = vdwg.mxu0
        %v1258 = vsel %vm1143, %v1255, -inf
        %1259 = vmax.xlane.f32.xlu0 %v1258
        %v1260 = vpop.xlane.xlu0 %1259
        %v1261 = vsub.f32 %v1255, %v1260
        %v1262 = vmul.f32 %v1261, 1.442695
        %v1263 = vpow.pop %v1262
        %v1264 = vsel %vm1143, %v1263, 0.0
        %1265 = vadd.xlane.f32.xlu0 %v1264
        %v1266 = vpop.xlane.xlu0 %1265
        %v1267 = vrcp.pop %v1266
        %v1268 = vmul.f32 %v1263, %v1267
        %v1269 = vpack.c.bf16 %v1268, %v1268
        %1270 = vrot.lane.b32.xlu0 %v1122, 64
        %v1271 = vpop.permute.xlu0 %1270
        %v1273 = vsel %vm1143, %v1269, 0
        %v1276 = vsel %vm1159, %v1271, 0
        %1278 = vmatpush.bf16.msra.mxu0 0
        %1279 = vmatpush.bf16.msra.mxu0 0
        %1280 = vmatpush.bf16.msra.mxu0 0
        %1281 = vmatpush.bf16.msra.mxu0 0
        %1282 = vmatpush.bf16.msra.mxu0 0
        %1283 = vmatpush.bf16.msra.mxu0 0
        %1284 = vmatpush.bf16.msra.mxu0 0
        %1285 = vmatpush.bf16.msra.mxu0 %v1276
        %1286 = vmatmul.bf16.gmra.mxu0 %v1273
        %v1287 = vpop.f32.mrf.mxu0
        %v1288 = vadd.f32 0.0, %v1287
        %v1289 = vpop.f32.mrf.mxu0
        %1290 = vdwg.mxu0
        %1291 = vrot.lane.b32.xlu0 %v1120, 32
        %v1292 = vpop.permute.xlu0 %1291
        %1293 = vrot.lane.b32.xlu0 %v1121, 32
        %v1294 = vpop.permute.xlu0 %1293
        %v1296 = vsel %vm1123, %v1292, 0
        %v1299 = vsel %vm1123, %v1294, 0
        %1301 = vmatpush.bf16.xpose.msra.mxu0 0
        %1302 = vmatpush.bf16.xpose.msra.mxu0 0
        %1303 = vmatpush.bf16.xpose.msra.mxu0 0
        %1304 = vmatpush.bf16.xpose.msra.mxu0 0
        %1305 = vmatpush.bf16.xpose.msra.mxu0 0
        %1306 = vmatpush.bf16.xpose.msra.mxu0 0
        %1307 = vmatpush.bf16.xpose.msra.mxu0 0
        %1308 = vmatpush.bf16.xpose.msra.mxu0 %v1299
        %1309 = vmatmul.bf16.gmra.mxu0 %v1296
        %v1310 = vpop.f32.mrf.mxu0
        %v1311 = vadd.f32 0.0, %v1310
        %v1312 = vpop.f32.mrf.mxu0
        %1313 = vdwg.mxu0
        %v1314 = vsel %vm1143, %v1311, -inf
        %1315 = vmax.xlane.f32.xlu0 %v1314
        %v1316 = vpop.xlane.xlu0 %1315
        %v1317 = vsub.f32 %v1311, %v1316
        %v1318 = vmul.f32 %v1317, 1.442695
        %v1319 = vpow.pop %v1318
        %v1320 = vsel %vm1143, %v1319, 0.0
        %1321 = vadd.xlane.f32.xlu0 %v1320
        %v1322 = vpop.xlane.xlu0 %1321
        %v1323 = vrcp.pop %v1322
        %v1324 = vmul.f32 %v1319, %v1323
        %v1325 = vpack.c.bf16 %v1324, %v1324
        %1326 = vrot.lane.b32.xlu0 %v1122, 32
        %v1327 = vpop.permute.xlu0 %1326
        %v1329 = vsel %vm1143, %v1325, 0
        %v1332 = vsel %vm1159, %v1327, 0
        %1334 = vmatpush.bf16.msra.mxu0 0
        %1335 = vmatpush.bf16.msra.mxu0 0
        %1336 = vmatpush.bf16.msra.mxu0 0
        %1337 = vmatpush.bf16.msra.mxu0 0
        %1338 = vmatpush.bf16.msra.mxu0 0
        %1339 = vmatpush.bf16.msra.mxu0 0
        %1340 = vmatpush.bf16.msra.mxu0 0
        %1341 = vmatpush.bf16.msra.mxu0 %v1332
        %1342 = vmatmul.bf16.gmra.mxu0 %v1329
        %v1343 = vpop.f32.mrf.mxu0
        %v1344 = vadd.f32 0.0, %v1343
        %v1345 = vpop.f32.mrf.mxu0
        %1346 = vdwg.mxu0
        %1348 = vrot.lane.b32.xlu0 %v1232, 32
        %v1349 = vpop.permute.xlu0 %1348
        %1352 = vrot.lane.b32.xlu0 %v1288, 64
        %v1353 = vpop.permute.xlu0 %1352
        %1356 = vrot.lane.b32.xlu0 %v1344, 96
        %v1357 = vpop.permute.xlu0 %1356
        %v1359 = vsel %vm1123, %v1173, %v1349
        %vm1360 = vcmask 523264
        %v1361 = vsel %vm1360, %v1359, %v1353
        %vm1362 = vcmask 785408
        %v1363 = vsel %vm1362, %v1361, %v1357
        %v1364 = vpack.c.bf16 %v1090, %v1090
        %v1365 = vpack.c.bf16 %v1104, %v1104
        %v1366 = vpack.c.bf16 %v1118, %v1118
        %v1368 = vsel %vm1123, %v1364, 0
        %v1371 = vsel %vm1123, %v1365, 0
        %1373 = vmatpush.bf16.xpose.msra.mxu0 0
        %1374 = vmatpush.bf16.xpose.msra.mxu0 0
        %1375 = vmatpush.bf16.xpose.msra.mxu0 0
        %1376 = vmatpush.bf16.xpose.msra.mxu0 0
        %1377 = vmatpush.bf16.xpose.msra.mxu0 0
        %1378 = vmatpush.bf16.xpose.msra.mxu0 0
        %1379 = vmatpush.bf16.xpose.msra.mxu0 0
        %1380 = vmatpush.bf16.xpose.msra.mxu0 %v1371
        %1381 = vmatmul.bf16.gmra.mxu0 %v1368
        %v1382 = vpop.f32.mrf.mxu0
        %v1383 = vadd.f32 0.0, %v1382
        %v1384 = vpop.f32.mrf.mxu0
        %1385 = vdwg.mxu0
        %v1386 = vsel %vm1143, %v1383, -inf
        %1387 = vmax.xlane.f32.xlu0 %v1386
        %v1388 = vpop.xlane.xlu0 %1387
        %v1389 = vsub.f32 %v1383, %v1388
        %v1390 = vmul.f32 %v1389, 1.442695
        %v1391 = vpow.pop %v1390
        %v1392 = vsel %vm1143, %v1391, 0.0
        %1393 = vadd.xlane.f32.xlu0 %v1392
        %v1394 = vpop.xlane.xlu0 %1393
        %v1395 = vrcp.pop %v1394
        %v1396 = vmul.f32 %v1391, %v1395
        %v1397 = vpack.c.bf16 %v1396, %v1396
        %v1399 = vsel %vm1143, %v1397, 0
        %v1402 = vsel %vm1159, %v1366, 0
        %1404 = vmatpush.bf16.msra.mxu0 0
        %1405 = vmatpush.bf16.msra.mxu0 0
        %1406 = vmatpush.bf16.msra.mxu0 0
        %1407 = vmatpush.bf16.msra.mxu0 0
        %1408 = vmatpush.bf16.msra.mxu0 0
        %1409 = vmatpush.bf16.msra.mxu0 0
        %1410 = vmatpush.bf16.msra.mxu0 0
        %1411 = vmatpush.bf16.msra.mxu0 %v1402
        %1412 = vmatmul.bf16.gmra.mxu0 %v1399
        %v1413 = vpop.f32.mrf.mxu0
        %v1414 = vadd.f32 0.0, %v1413
        %v1415 = vpop.f32.mrf.mxu0
        %1416 = vdwg.mxu0
        %1418 = vrot.lane.b32.xlu0 %v1364, 96
        %v1419 = vpop.permute.xlu0 %1418
        %1421 = vrot.lane.b32.xlu0 %v1365, 96
        %v1422 = vpop.permute.xlu0 %1421
        %v1424 = vsel %vm1123, %v1419, 0
        %v1427 = vsel %vm1123, %v1422, 0
        %1429 = vmatpush.bf16.xpose.msra.mxu0 0
        %1430 = vmatpush.bf16.xpose.msra.mxu0 0
        %1431 = vmatpush.bf16.xpose.msra.mxu0 0
        %1432 = vmatpush.bf16.xpose.msra.mxu0 0
        %1433 = vmatpush.bf16.xpose.msra.mxu0 0
        %1434 = vmatpush.bf16.xpose.msra.mxu0 0
        %1435 = vmatpush.bf16.xpose.msra.mxu0 0
        %1436 = vmatpush.bf16.xpose.msra.mxu0 %v1427
        %1437 = vmatmul.bf16.gmra.mxu0 %v1424
        %v1438 = vpop.f32.mrf.mxu0
        %v1439 = vadd.f32 0.0, %v1438
        %v1440 = vpop.f32.mrf.mxu0
        %1441 = vdwg.mxu0
        %v1442 = vsel %vm1143, %v1439, -inf
        %1443 = vmax.xlane.f32.xlu0 %v1442
        %v1444 = vpop.xlane.xlu0 %1443
        %v1445 = vsub.f32 %v1439, %v1444
        %v1446 = vmul.f32 %v1445, 1.442695
        %v1447 = vpow.pop %v1446
        %v1448 = vsel %vm1143, %v1447, 0.0
        %1449 = vadd.xlane.f32.xlu0 %v1448
        %v1450 = vpop.xlane.xlu0 %1449
        %v1451 = vrcp.pop %v1450
        %v1452 = vmul.f32 %v1447, %v1451
        %v1453 = vpack.c.bf16 %v1452, %v1452
        %1455 = vrot.lane.b32.xlu0 %v1366, 96
        %v1456 = vpop.permute.xlu0 %1455
        %v1458 = vsel %vm1143, %v1453, 0
        %v1461 = vsel %vm1159, %v1456, 0
        %1463 = vmatpush.bf16.msra.mxu0 0
        %1464 = vmatpush.bf16.msra.mxu0 0
        %1465 = vmatpush.bf16.msra.mxu0 0
        %1466 = vmatpush.bf16.msra.mxu0 0
        %1467 = vmatpush.bf16.msra.mxu0 0
        %1468 = vmatpush.bf16.msra.mxu0 0
        %1469 = vmatpush.bf16.msra.mxu0 0
        %1470 = vmatpush.bf16.msra.mxu0 %v1461
        %1471 = vmatmul.bf16.gmra.mxu0 %v1458
        %v1472 = vpop.f32.mrf.mxu0
        %v1473 = vadd.f32 0.0, %v1472
        %v1474 = vpop.f32.mrf.mxu0
        %1475 = vdwg.mxu0
        %1476 = vrot.lane.b32.xlu0 %v1364, 64
        %v1477 = vpop.permute.xlu0 %1476
        %1478 = vrot.lane.b32.xlu0 %v1365, 64
        %v1479 = vpop.permute.xlu0 %1478
        %v1481 = vsel %vm1123, %v1477, 0
        %v1484 = vsel %vm1123, %v1479, 0
        %1486 = vmatpush.bf16.xpose.msra.mxu0 0
        %1487 = vmatpush.bf16.xpose.msra.mxu0 0
        %1488 = vmatpush.bf16.xpose.msra.mxu0 0
        %1489 = vmatpush.bf16.xpose.msra.mxu0 0
        %1490 = vmatpush.bf16.xpose.msra.mxu0 0
        %1491 = vmatpush.bf16.xpose.msra.mxu0 0
        %1492 = vmatpush.bf16.xpose.msra.mxu0 0
        %1493 = vmatpush.bf16.xpose.msra.mxu0 %v1484
        %1494 = vmatmul.bf16.gmra.mxu0 %v1481
        %v1495 = vpop.f32.mrf.mxu0
        %v1496 = vadd.f32 0.0, %v1495
        %v1497 = vpop.f32.mrf.mxu0
        %1498 = vdwg.mxu0
        %v1499 = vsel %vm1143, %v1496, -inf
        %1500 = vmax.xlane.f32.xlu0 %v1499
        %v1501 = vpop.xlane.xlu0 %1500
        %v1502 = vsub.f32 %v1496, %v1501
        %v1503 = vmul.f32 %v1502, 1.442695
        %v1504 = vpow.pop %v1503
        %v1505 = vsel %vm1143, %v1504, 0.0
        %1506 = vadd.xlane.f32.xlu0 %v1505
        %v1507 = vpop.xlane.xlu0 %1506
        %v1508 = vrcp.pop %v1507
        %v1509 = vmul.f32 %v1504, %v1508
        %v1510 = vpack.c.bf16 %v1509, %v1509
        %1511 = vrot.lane.b32.xlu0 %v1366, 64
        %v1512 = vpop.permute.xlu0 %1511
        %v1514 = vsel %vm1143, %v1510, 0
        %v1517 = vsel %vm1159, %v1512, 0
        %1519 = vmatpush.bf16.msra.mxu0 0
        %1520 = vmatpush.bf16.msra.mxu0 0
        %1521 = vmatpush.bf16.msra.mxu0 0
        %1522 = vmatpush.bf16.msra.mxu0 0
        %1523 = vmatpush.bf16.msra.mxu0 0
        %1524 = vmatpush.bf16.msra.mxu0 0
        %1525 = vmatpush.bf16.msra.mxu0 0
        %1526 = vmatpush.bf16.msra.mxu0 %v1517
        %1527 = vmatmul.bf16.gmra.mxu0 %v1514
        %v1528 = vpop.f32.mrf.mxu0
        %v1529 = vadd.f32 0.0, %v1528
        %v1530 = vpop.f32.mrf.mxu0
        %1531 = vdwg.mxu0
        %1532 = vrot.lane.b32.xlu0 %v1364, 32
        %v1533 = vpop.permute.xlu0 %1532
        %1534 = vrot.lane.b32.xlu0 %v1365, 32
        %v1535 = vpop.permute.xlu0 %1534
        %v1537 = vsel %vm1123, %v1533, 0
        %v1540 = vsel %vm1123, %v1535, 0
        %1542 = vmatpush.bf16.xpose.msra.mxu0 0
        %1543 = vmatpush.bf16.xpose.msra.mxu0 0
        %1544 = vmatpush.bf16.xpose.msra.mxu0 0
        %1545 = vmatpush.bf16.xpose.msra.mxu0 0
        %1546 = vmatpush.bf16.xpose.msra.mxu0 0
        %1547 = vmatpush.bf16.xpose.msra.mxu0 0
        %1548 = vmatpush.bf16.xpose.msra.mxu0 0
        %1549 = vmatpush.bf16.xpose.msra.mxu0 %v1540
        %1550 = vmatmul.bf16.gmra.mxu0 %v1537
        %v1551 = vpop.f32.mrf.mxu0
        %v1552 = vadd.f32 0.0, %v1551
        %v1553 = vpop.f32.mrf.mxu0
        %1554 = vdwg.mxu0
        %v1555 = vsel %vm1143, %v1552, -inf
        %1556 = vmax.xlane.f32.xlu0 %v1555
        %v1557 = vpop.xlane.xlu0 %1556
        %v1558 = vsub.f32 %v1552, %v1557
        %v1559 = vmul.f32 %v1558, 1.442695
        %v1560 = vpow.pop %v1559
        %v1561 = vsel %vm1143, %v1560, 0.0
        %1562 = vadd.xlane.f32.xlu0 %v1561
        %v1563 = vpop.xlane.xlu0 %1562
        %v1564 = vrcp.pop %v1563
        %v1565 = vmul.f32 %v1560, %v1564
        %v1566 = vpack.c.bf16 %v1565, %v1565
        %1567 = vrot.lane.b32.xlu0 %v1366, 32
        %v1568 = vpop.permute.xlu0 %1567
        %v1570 = vsel %vm1143, %v1566, 0
        %v1573 = vsel %vm1159, %v1568, 0
        %1575 = vmatpush.bf16.msra.mxu0 0
        %1576 = vmatpush.bf16.msra.mxu0 0
        %1577 = vmatpush.bf16.msra.mxu0 0
        %1578 = vmatpush.bf16.msra.mxu0 0
        %1579 = vmatpush.bf16.msra.mxu0 0
        %1580 = vmatpush.bf16.msra.mxu0 0
        %1581 = vmatpush.bf16.msra.mxu0 0
        %1582 = vmatpush.bf16.msra.mxu0 %v1573
        %1583 = vmatmul.bf16.gmra.mxu0 %v1570
        %v1584 = vpop.f32.mrf.mxu0
        %v1585 = vadd.f32 0.0, %v1584
        %v1586 = vpop.f32.mrf.mxu0
        %1587 = vdwg.mxu0
        %1589 = vrot.lane.b32.xlu0 %v1473, 32
        %v1590 = vpop.permute.xlu0 %1589
        %1593 = vrot.lane.b32.xlu0 %v1529, 64
        %v1594 = vpop.permute.xlu0 %1593
        %1597 = vrot.lane.b32.xlu0 %v1585, 96
        %v1598 = vpop.permute.xlu0 %1597
        %v1600 = vsel %vm1123, %v1414, %v1590
        %v1601 = vsel %vm1360, %v1600, %v1594
        %v1602 = vsel %vm1362, %v1601, %v1598
        %v1603 = vpack.c.bf16 %v1602, %v1363
        %v1604 = vld [vmem:[%s684] sm:$0xf]
        %v1605 = vld [vmem:[%s684 + $0x4] sm:$0xf]
        %v1606 = vld [vmem:[%s684 + $0x8] sm:$0xf]
        %v1607 = vld [vmem:[%s684 + $0xc] sm:$0xf]
        %v1608 = vld [vmem:[%s684 + $0x10] sm:$0xf]
        %v1609 = vld [vmem:[%s684 + $0x14] sm:$0xf]
        %v1610 = vld [vmem:[%s684 + $0x18] sm:$0xf]
        %v1611 = vld [vmem:[%s684 + $0x1c] sm:$0xf]
        %v1612 = vld [vmem:[%s684 + $0x20] sm:$0xf]
        %v1613 = vld [vmem:[%s684 + $0x24] sm:$0xf]
        %v1614 = vld [vmem:[%s684 + $0x28] sm:$0xf]
        %v1615 = vld [vmem:[%s684 + $0x2c] sm:$0xf]
        %v1616 = vld [vmem:[%s684 + $0x30] sm:$0xf]
        %v1617 = vld [vmem:[%s684 + $0x34] sm:$0xf]
        %v1618 = vld [vmem:[%s684 + $0x38] sm:$0xf]
        %v1619 = vld [vmem:[%s684 + $0x3c] sm:$0xf]
        %v1620 = vld [vmem:[%s825] sm:$0x1]
        %v1622 = vperm.slane %v1620, 0
        %v1640 = vunpack.c.l.b16 %v1604
        %v1641 = vunpack.c.l.b16 %v1605
        %v1642 = vunpack.c.l.b16 %v1606
        %v1643 = vunpack.c.l.b16 %v1607
        %v1644 = vunpack.c.l.b16 %v1608
        %v1645 = vunpack.c.l.b16 %v1609
        %v1646 = vunpack.c.l.b16 %v1610
        %v1647 = vunpack.c.l.b16 %v1611
        %v1648 = vunpack.c.l.b16 %v1612
        %v1649 = vunpack.c.l.b16 %v1613
        %v1650 = vunpack.c.l.b16 %v1614
        %v1651 = vunpack.c.l.b16 %v1615
        %v1652 = vunpack.c.l.b16 %v1616
        %v1653 = vunpack.c.l.b16 %v1617
        %v1654 = vunpack.c.l.b16 %v1618
        %v1655 = vunpack.c.l.b16 %v1619
        %v1656 = vpack.c.b16 %v1641, %v1640
        %v1657 = vpack.c.b16 %v1643, %v1642
        %v1658 = vpack.c.b16 %v1645, %v1644
        %v1659 = vpack.c.b16 %v1647, %v1646
        %v1660 = vpack.c.b16 %v1649, %v1648
        %v1661 = vpack.c.b16 %v1651, %v1650
        %v1662 = vpack.c.b16 %v1653, %v1652
        %v1663 = vpack.c.b16 %v1655, %v1654
        %1672 = vmatpush.bf16.msra.mxu0 %v1663
        %1673 = vmatpush.bf16.msra.mxu0 %v1662
        %1674 = vmatpush.bf16.msra.mxu0 %v1661
        %1675 = vmatpush.bf16.msra.mxu0 %v1660
        %1676 = vmatpush.bf16.msra.mxu0 %v1659
        %1677 = vmatpush.bf16.msra.mxu0 %v1658
        %1678 = vmatpush.bf16.msra.mxu0 %v1657
        %1679 = vmatpush.bf16.msra.mxu0 %v1656
        %1680 = vmatmul.bf16.gmra.mxu0 %v1603
        %v1681 = vpop.f32.mrf.mxu0
        %v1682 = vadd.f32 %v1622, %v1681
        %v1683 = vpop.f32.mrf.mxu0
        %v1684 = vadd.f32 %v1622, %v1683
        %1685 = vdwg.mxu0
        %v1686 = vadd.f32 %v907, %v1682
        %v1687 = vadd.f32 %v908, %v1684
        %v1688 = vld [vmem:[%s828] sm:$0x1]
        %v1689 = vld [vmem:[%s693] sm:$0x1]
        %1690 = vadd.xlane.f32.xlu0 %v1686
        %v1691 = vpop.xlane.xlu0 %1690
        %1692 = vadd.xlane.f32.xlu0 %v1687
        %v1693 = vpop.xlane.xlu0 %1692
        %v1694 = vrcp.pop 128.0
        %v1695 = vmul.f32 128.0, %v1694
        %v1696 = vsub.f32 1.0, %v1695
        %v1697 = vmul.f32 %v1694, %v1696
        %v1698 = vadd.f32 %v1694, %v1697
        %vm1699 = vweird.f32 %v1694
        %v1700 = vsel %vm1699, %v1694, %v1698
        %v1701 = vmul.f32 %v1691, %v1700
        %v1702 = vmul.f32 %v1693, %v1700
        %v1703 = vsub.f32 %v1686, %v1701
        %v1704 = vsub.f32 %v1687, %v1702
        %v1705 = vmul.f32 %v1703, %v1703
        %v1706 = vmul.f32 %v1704, %v1704
        %1707 = vadd.xlane.f32.xlu0 %v1705
        %v1708 = vpop.xlane.xlu0 %1707
        %1709 = vadd.xlane.f32.xlu0 %v1706
        %v1710 = vpop.xlane.xlu0 %1709
        %v1711 = vmul.f32 %v1708, %v1700
        %v1712 = vmul.f32 %v1710, %v1700
        %v1713 = vadd.f32 %v1711, 1e-05
        %v1714 = vadd.f32 %v1712, 1e-05
        %v1715 = vrsqrt.pop %v1713
        %v1716 = vmul.f32 %v1715, %v1713
        %v1717 = vmul.f32 %v1716, %v1715
        %v1718 = vmul.f32 0.5, %v1717
        %v1719 = vsub.f32 1.5, %v1718
        %v1720 = vmul.f32 %v1715, %v1719
        %vm1721 = vweird.f32 %v1713
        %vm1722 = vweird.f32 %v1715
        %vm1723 = vmor %vm1721, %vm1722
        %v1724 = vsel %vm1723, %v1715, %v1720
        %v1725 = vrsqrt.pop %v1714
        %v1726 = vmul.f32 %v1725, %v1714
        %v1727 = vmul.f32 %v1726, %v1725
        %v1728 = vmul.f32 0.5, %v1727
        %v1729 = vsub.f32 1.5, %v1728
        %v1730 = vmul.f32 %v1725, %v1729
        %vm1731 = vweird.f32 %v1714
        %vm1732 = vweird.f32 %v1725
        %vm1733 = vmor %vm1731, %vm1732
        %v1734 = vsel %vm1733, %v1725, %v1730
        %v1735 = vmul.f32 %v1703, %v1724
        %v1736 = vmul.f32 %v1704, %v1734
        %v1738 = vperm.slane %v1688, 0
        %v1740 = vmul.f32 %v1735, %v1738
        %v1741 = vmul.f32 %v1736, %v1738
        %v1743 = vperm.slane %v1689, 0
        %v1745 = vadd.f32 %v1740, %v1743
        %v1746 = vadd.f32 %v1741, %v1743
        %v1747 = vpack.c.bf16 %v1746, %v1745
        %v1748 = vld [vmem:[%s703] sm:$0xff]
        %v1749 = vld [vmem:[%s703 + $0x8] sm:$0xff]
        %v1750 = vld [vmem:[%s703 + $0x10] sm:$0xff]
        %v1751 = vld [vmem:[%s703 + $0x18] sm:$0xff]
        %v1752 = vld [vmem:[%s703 + $0x20] sm:$0xff]
        %v1753 = vld [vmem:[%s703 + $0x28] sm:$0xff]
        %v1754 = vld [vmem:[%s703 + $0x30] sm:$0xff]
        %v1755 = vld [vmem:[%s703 + $0x38] sm:$0xff]
        %v1756 = vld [vmem:[%s703 + $0x40] sm:$0xff]
        %v1757 = vld [vmem:[%s703 + $0x48] sm:$0xff]
        %v1758 = vld [vmem:[%s703 + $0x50] sm:$0xff]
        %v1759 = vld [vmem:[%s703 + $0x58] sm:$0xff]
        %v1760 = vld [vmem:[%s703 + $0x60] sm:$0xff]
        %v1761 = vld [vmem:[%s703 + $0x68] sm:$0xff]
        %v1762 = vld [vmem:[%s703 + $0x70] sm:$0xff]
        %v1763 = vld [vmem:[%s703 + $0x78] sm:$0xff]
        %v1764 = vld [vmem:[%s703 + $0x80] sm:$0xff]
        %v1765 = vld [vmem:[%s703 + $0x88] sm:$0xff]
        %v1766 = vld [vmem:[%s703 + $0x90] sm:$0xff]
        %v1767 = vld [vmem:[%s703 + $0x98] sm:$0xff]
        %v1768 = vld [vmem:[%s703 + $0xa0] sm:$0xff]
        %v1769 = vld [vmem:[%s703 + $0xa8] sm:$0xff]
        %v1770 = vld [vmem:[%s703 + $0xb0] sm:$0xff]
        %v1771 = vld [vmem:[%s703 + $0xb8] sm:$0xff]
        %v1772 = vld [vmem:[%s703 + $0xc0] sm:$0xff]
        %v1773 = vld [vmem:[%s703 + $0xc8] sm:$0xff]
        %v1774 = vld [vmem:[%s703 + $0xd0] sm:$0xff]
        %v1775 = vld [vmem:[%s703 + $0xd8] sm:$0xff]
        %v1776 = vld [vmem:[%s703 + $0xe0] sm:$0xff]
        %v1777 = vld [vmem:[%s703 + $0xe8] sm:$0xff]
        %v1778 = vld [vmem:[%s703 + $0xf0] sm:$0xff]
        %v1779 = vld [vmem:[%s703 + $0xf8] sm:$0xff]
        %v1780 = vld [vmem:[%s703 + $0x100] sm:$0xff]
        %v1781 = vld [vmem:[%s703 + $0x108] sm:$0xff]
        %v1782 = vld [vmem:[%s703 + $0x110] sm:$0xff]
        %v1783 = vld [vmem:[%s703 + $0x118] sm:$0xff]
        %v1784 = vld [vmem:[%s703 + $0x120] sm:$0xff]
        %v1785 = vld [vmem:[%s703 + $0x128] sm:$0xff]
        %v1786 = vld [vmem:[%s703 + $0x130] sm:$0xff]
        %v1787 = vld [vmem:[%s703 + $0x138] sm:$0xff]
        %v1788 = vld [vmem:[%s703 + $0x140] sm:$0xff]
        %v1789 = vld [vmem:[%s703 + $0x148] sm:$0xff]
        %v1790 = vld [vmem:[%s703 + $0x150] sm:$0xff]
        %v1791 = vld [vmem:[%s703 + $0x158] sm:$0xff]
        %v1792 = vld [vmem:[%s703 + $0x160] sm:$0xff]
        %v1793 = vld [vmem:[%s703 + $0x168] sm:$0xff]
        %v1794 = vld [vmem:[%s703 + $0x170] sm:$0xff]
        %v1795 = vld [vmem:[%s703 + $0x178] sm:$0xff]
        %v1796 = vld [vmem:[%s703 + $0x180] sm:$0xff]
        %v1797 = vld [vmem:[%s703 + $0x188] sm:$0xff]
        %v1798 = vld [vmem:[%s703 + $0x190] sm:$0xff]
        %v1799 = vld [vmem:[%s703 + $0x198] sm:$0xff]
        %v1800 = vld [vmem:[%s703 + $0x1a0] sm:$0xff]
        %v1801 = vld [vmem:[%s703 + $0x1a8] sm:$0xff]
        %v1802 = vld [vmem:[%s703 + $0x1b0] sm:$0xff]
        %v1803 = vld [vmem:[%s703 + $0x1b8] sm:$0xff]
        %v1804 = vld [vmem:[%s703 + $0x1c0] sm:$0xff]
        %v1805 = vld [vmem:[%s703 + $0x1c8] sm:$0xff]
        %v1806 = vld [vmem:[%s703 + $0x1d0] sm:$0xff]
        %v1807 = vld [vmem:[%s703 + $0x1d8] sm:$0xff]
        %v1808 = vld [vmem:[%s703 + $0x1e0] sm:$0xff]
        %v1809 = vld [vmem:[%s703 + $0x1e8] sm:$0xff]
        %v1810 = vld [vmem:[%s703 + $0x1f0] sm:$0xff]
        %v1811 = vld [vmem:[%s703 + $0x1f8] sm:$0xff]
        %v1812 = vld [vmem:[%s703 + $0x200] sm:$0xff]
        %v1813 = vld [vmem:[%s703 + $0x208] sm:$0xff]
        %v1814 = vld [vmem:[%s703 + $0x210] sm:$0xff]
        %v1815 = vld [vmem:[%s703 + $0x218] sm:$0xff]
        %v1816 = vld [vmem:[%s703 + $0x220] sm:$0xff]
        %v1817 = vld [vmem:[%s703 + $0x228] sm:$0xff]
        %v1818 = vld [vmem:[%s703 + $0x230] sm:$0xff]
        %v1819 = vld [vmem:[%s703 + $0x238] sm:$0xff]
        %v1820 = vld [vmem:[%s703 + $0x240] sm:$0xff]
        %v1821 = vld [vmem:[%s703 + $0x248] sm:$0xff]
        %v1822 = vld [vmem:[%s703 + $0x250] sm:$0xff]
        %v1823 = vld [vmem:[%s703 + $0x258] sm:$0xff]
        %v1824 = vld [vmem:[%s703 + $0x260] sm:$0xff]
        %v1825 = vld [vmem:[%s703 + $0x268] sm:$0xff]
        %v1826 = vld [vmem:[%s703 + $0x270] sm:$0xff]
        %v1827 = vld [vmem:[%s703 + $0x278] sm:$0xff]
        %v1828 = vld [vmem:[%s703 + $0x280] sm:$0xff]
        %v1829 = vld [vmem:[%s703 + $0x288] sm:$0xff]
        %v1830 = vld [vmem:[%s703 + $0x290] sm:$0xff]
        %v1831 = vld [vmem:[%s703 + $0x298] sm:$0xff]
        %v1832 = vld [vmem:[%s703 + $0x2a0] sm:$0xff]
        %v1833 = vld [vmem:[%s703 + $0x2a8] sm:$0xff]
        %v1834 = vld [vmem:[%s703 + $0x2b0] sm:$0xff]
        %v1835 = vld [vmem:[%s703 + $0x2b8] sm:$0xff]
        %v1836 = vld [vmem:[%s703 + $0x2c0] sm:$0xff]
        %v1837 = vld [vmem:[%s703 + $0x2c8] sm:$0xff]
        %v1838 = vld [vmem:[%s703 + $0x2d0] sm:$0xff]
        %v1839 = vld [vmem:[%s703 + $0x2d8] sm:$0xff]
        %v1840 = vld [vmem:[%s703 + $0x2e0] sm:$0xff]
        %v1841 = vld [vmem:[%s703 + $0x2e8] sm:$0xff]
        %v1842 = vld [vmem:[%s703 + $0x2f0] sm:$0xff]
        %v1843 = vld [vmem:[%s703 + $0x2f8] sm:$0xff]
        %v1844 = vld [vmem:[%s703 + $0x300] sm:$0xff]
        %v1845 = vld [vmem:[%s703 + $0x308] sm:$0xff]
        %v1846 = vld [vmem:[%s703 + $0x310] sm:$0xff]
        %v1847 = vld [vmem:[%s703 + $0x318] sm:$0xff]
        %v1848 = vld [vmem:[%s703 + $0x320] sm:$0xff]
        %v1849 = vld [vmem:[%s703 + $0x328] sm:$0xff]
        %v1850 = vld [vmem:[%s703 + $0x330] sm:$0xff]
        %v1851 = vld [vmem:[%s703 + $0x338] sm:$0xff]
        %v1852 = vld [vmem:[%s703 + $0x340] sm:$0xff]
        %v1853 = vld [vmem:[%s703 + $0x348] sm:$0xff]
        %v1854 = vld [vmem:[%s703 + $0x350] sm:$0xff]
        %v1855 = vld [vmem:[%s703 + $0x358] sm:$0xff]
        %v1856 = vld [vmem:[%s703 + $0x360] sm:$0xff]
        %v1857 = vld [vmem:[%s703 + $0x368] sm:$0xff]
        %v1858 = vld [vmem:[%s703 + $0x370] sm:$0xff]
        %v1859 = vld [vmem:[%s703 + $0x378] sm:$0xff]
        %v1860 = vld [vmem:[%s703 + $0x380] sm:$0xff]
        %v1861 = vld [vmem:[%s703 + $0x388] sm:$0xff]
        %v1862 = vld [vmem:[%s703 + $0x390] sm:$0xff]
        %v1863 = vld [vmem:[%s703 + $0x398] sm:$0xff]
        %v1864 = vld [vmem:[%s703 + $0x3a0] sm:$0xff]
        %v1865 = vld [vmem:[%s703 + $0x3a8] sm:$0xff]
        %v1866 = vld [vmem:[%s703 + $0x3b0] sm:$0xff]
        %v1867 = vld [vmem:[%s703 + $0x3b8] sm:$0xff]
        %v1868 = vld [vmem:[%s703 + $0x3c0] sm:$0xff]
        %v1869 = vld [vmem:[%s703 + $0x3c8] sm:$0xff]
        %v1870 = vld [vmem:[%s703 + $0x3d0] sm:$0xff]
        %v1871 = vld [vmem:[%s703 + $0x3d8] sm:$0xff]
        %v1872 = vld [vmem:[%s703 + $0x3e0] sm:$0xff]
        %v1873 = vld [vmem:[%s703 + $0x3e8] sm:$0xff]
        %v1874 = vld [vmem:[%s703 + $0x3f0] sm:$0xff]
        %v1875 = vld [vmem:[%s703 + $0x3f8] sm:$0xff]
        %v1876 = vld [vmem:[%s713] sm:$0xff]
        %v1877 = vld [vmem:[%s713 + $0x8] sm:$0xff]
        %v1880 = vperm.slane %v1876, 0
        %v1881 = vperm.slane %v1876, 1
        %v1882 = vperm.slane %v1876, 2
        %v1883 = vperm.slane %v1876, 3
        %v1884 = vperm.slane %v1876, 4
        %v1885 = vperm.slane %v1876, 5
        %v1886 = vperm.slane %v1876, 6
        %v1887 = vperm.slane %v1876, 7
        %v1888 = vperm.slane %v1877, 0
        %v1889 = vperm.slane %v1877, 1
        %v1890 = vperm.slane %v1877, 2
        %v1891 = vperm.slane %v1877, 3
        %v1892 = vperm.slane %v1877, 4
        %v1893 = vperm.slane %v1877, 5
        %v1894 = vperm.slane %v1877, 6
        %v1895 = vperm.slane %v1877, 7
        %v2040 = vunpack.c.l.b16 %v1748
        %v2041 = vunpack.c.h.b16 %v1748
        %v2042 = vunpack.c.l.b16 %v1749
        %v2043 = vunpack.c.h.b16 %v1749
        %v2044 = vunpack.c.l.b16 %v1750
        %v2045 = vunpack.c.h.b16 %v1750
        %v2046 = vunpack.c.l.b16 %v1751
        %v2047 = vunpack.c.h.b16 %v1751
        %v2048 = vunpack.c.l.b16 %v1752
        %v2049 = vunpack.c.h.b16 %v1752
        %v2050 = vunpack.c.l.b16 %v1753
        %v2051 = vunpack.c.h.b16 %v1753
        %v2052 = vunpack.c.l.b16 %v1754
        %v2053 = vunpack.c.h.b16 %v1754
        %v2054 = vunpack.c.l.b16 %v1755
        %v2055 = vunpack.c.h.b16 %v1755
        %v2056 = vunpack.c.l.b16 %v1756
        %v2057 = vunpack.c.h.b16 %v1756
        %v2058 = vunpack.c.l.b16 %v1757
        %v2059 = vunpack.c.h.b16 %v1757
        %v2060 = vunpack.c.l.b16 %v1758
        %v2061 = vunpack.c.h.b16 %v1758
        %v2062 = vunpack.c.l.b16 %v1759
        %v2063 = vunpack.c.h.b16 %v1759
        %v2064 = vunpack.c.l.b16 %v1760
        %v2065 = vunpack.c.h.b16 %v1760
        %v2066 = vunpack.c.l.b16 %v1761
        %v2067 = vunpack.c.h.b16 %v1761
        %v2068 = vunpack.c.l.b16 %v1762
        %v2069 = vunpack.c.h.b16 %v1762
        %v2070 = vunpack.c.l.b16 %v1763
        %v2071 = vunpack.c.h.b16 %v1763
        %v2072 = vunpack.c.l.b16 %v1764
        %v2073 = vunpack.c.h.b16 %v1764
        %v2074 = vunpack.c.l.b16 %v1765
        %v2075 = vunpack.c.h.b16 %v1765
        %v2076 = vunpack.c.l.b16 %v1766
        %v2077 = vunpack.c.h.b16 %v1766
        %v2078 = vunpack.c.l.b16 %v1767
        %v2079 = vunpack.c.h.b16 %v1767
        %v2080 = vunpack.c.l.b16 %v1768
        %v2081 = vunpack.c.h.b16 %v1768
        %v2082 = vunpack.c.l.b16 %v1769
        %v2083 = vunpack.c.h.b16 %v1769
        %v2084 = vunpack.c.l.b16 %v1770
        %v2085 = vunpack.c.h.b16 %v1770
        %v2086 = vunpack.c.l.b16 %v1771
        %v2087 = vunpack.c.h.b16 %v1771
        %v2088 = vunpack.c.l.b16 %v1772
        %v2089 = vunpack.c.h.b16 %v1772
        %v2090 = vunpack.c.l.b16 %v1773
        %v2091 = vunpack.c.h.b16 %v1773
        %v2092 = vunpack.c.l.b16 %v1774
        %v2093 = vunpack.c.h.b16 %v1774
        %v2094 = vunpack.c.l.b16 %v1775
        %v2095 = vunpack.c.h.b16 %v1775
        %v2096 = vunpack.c.l.b16 %v1776
        %v2097 = vunpack.c.h.b16 %v1776
        %v2098 = vunpack.c.l.b16 %v1777
        %v2099 = vunpack.c.h.b16 %v1777
        %v2100 = vunpack.c.l.b16 %v1778
        %v2101 = vunpack.c.h.b16 %v1778
        %v2102 = vunpack.c.l.b16 %v1779
        %v2103 = vunpack.c.h.b16 %v1779
        %v2104 = vunpack.c.l.b16 %v1780
        %v2105 = vunpack.c.h.b16 %v1780
        %v2106 = vunpack.c.l.b16 %v1781
        %v2107 = vunpack.c.h.b16 %v1781
        %v2108 = vunpack.c.l.b16 %v1782
        %v2109 = vunpack.c.h.b16 %v1782
        %v2110 = vunpack.c.l.b16 %v1783
        %v2111 = vunpack.c.h.b16 %v1783
        %v2112 = vunpack.c.l.b16 %v1784
        %v2113 = vunpack.c.h.b16 %v1784
        %v2114 = vunpack.c.l.b16 %v1785
        %v2115 = vunpack.c.h.b16 %v1785
        %v2116 = vunpack.c.l.b16 %v1786
        %v2117 = vunpack.c.h.b16 %v1786
        %v2118 = vunpack.c.l.b16 %v1787
        %v2119 = vunpack.c.h.b16 %v1787
        %v2120 = vunpack.c.l.b16 %v1788
        %v2121 = vunpack.c.h.b16 %v1788
        %v2122 = vunpack.c.l.b16 %v1789
        %v2123 = vunpack.c.h.b16 %v1789
        %v2124 = vunpack.c.l.b16 %v1790
        %v2125 = vunpack.c.h.b16 %v1790
        %v2126 = vunpack.c.l.b16 %v1791
        %v2127 = vunpack.c.h.b16 %v1791
        %v2128 = vunpack.c.l.b16 %v1792
        %v2129 = vunpack.c.h.b16 %v1792
        %v2130 = vunpack.c.l.b16 %v1793
        %v2131 = vunpack.c.h.b16 %v1793
        %v2132 = vunpack.c.l.b16 %v1794
        %v2133 = vunpack.c.h.b16 %v1794
        %v2134 = vunpack.c.l.b16 %v1795
        %v2135 = vunpack.c.h.b16 %v1795
        %v2136 = vunpack.c.l.b16 %v1796
        %v2137 = vunpack.c.h.b16 %v1796
        %v2138 = vunpack.c.l.b16 %v1797
        %v2139 = vunpack.c.h.b16 %v1797
        %v2140 = vunpack.c.l.b16 %v1798
        %v2141 = vunpack.c.h.b16 %v1798
        %v2142 = vunpack.c.l.b16 %v1799
        %v2143 = vunpack.c.h.b16 %v1799
        %v2144 = vunpack.c.l.b16 %v1800
        %v2145 = vunpack.c.h.b16 %v1800
        %v2146 = vunpack.c.l.b16 %v1801
        %v2147 = vunpack.c.h.b16 %v1801
        %v2148 = vunpack.c.l.b16 %v1802
        %v2149 = vunpack.c.h.b16 %v1802
        %v2150 = vunpack.c.l.b16 %v1803
        %v2151 = vunpack.c.h.b16 %v1803
        %v2152 = vunpack.c.l.b16 %v1804
        %v2153 = vunpack.c.h.b16 %v1804
        %v2154 = vunpack.c.l.b16 %v1805
        %v2155 = vunpack.c.h.b16 %v1805
        %v2156 = vunpack.c.l.b16 %v1806
        %v2157 = vunpack.c.h.b16 %v1806
        %v2158 = vunpack.c.l.b16 %v1807
        %v2159 = vunpack.c.h.b16 %v1807
        %v2160 = vunpack.c.l.b16 %v1808
        %v2161 = vunpack.c.h.b16 %v1808
        %v2162 = vunpack.c.l.b16 %v1809
        %v2163 = vunpack.c.h.b16 %v1809
        %v2164 = vunpack.c.l.b16 %v1810
        %v2165 = vunpack.c.h.b16 %v1810
        %v2166 = vunpack.c.l.b16 %v1811
        %v2167 = vunpack.c.h.b16 %v1811
        %v2168 = vunpack.c.l.b16 %v1812
        %v2169 = vunpack.c.h.b16 %v1812
        %v2170 = vunpack.c.l.b16 %v1813
        %v2171 = vunpack.c.h.b16 %v1813
        %v2172 = vunpack.c.l.b16 %v1814
        %v2173 = vunpack.c.h.b16 %v1814
        %v2174 = vunpack.c.l.b16 %v1815
        %v2175 = vunpack.c.h.b16 %v1815
        %v2176 = vunpack.c.l.b16 %v1816
        %v2177 = vunpack.c.h.b16 %v1816
        %v2178 = vunpack.c.l.b16 %v1817
        %v2179 = vunpack.c.h.b16 %v1817
        %v2180 = vunpack.c.l.b16 %v1818
        %v2181 = vunpack.c.h.b16 %v1818
        %v2182 = vunpack.c.l.b16 %v1819
        %v2183 = vunpack.c.h.b16 %v1819
        %v2184 = vunpack.c.l.b16 %v1820
        %v2185 = vunpack.c.h.b16 %v1820
        %v2186 = vunpack.c.l.b16 %v1821
        %v2187 = vunpack.c.h.b16 %v1821
        %v2188 = vunpack.c.l.b16 %v1822
        %v2189 = vunpack.c.h.b16 %v1822
        %v2190 = vunpack.c.l.b16 %v1823
        %v2191 = vunpack.c.h.b16 %v1823
        %v2192 = vunpack.c.l.b16 %v1824
        %v2193 = vunpack.c.h.b16 %v1824
        %v2194 = vunpack.c.l.b16 %v1825
        %v2195 = vunpack.c.h.b16 %v1825
        %v2196 = vunpack.c.l.b16 %v1826
        %v2197 = vunpack.c.h.b16 %v1826
        %v2198 = vunpack.c.l.b16 %v1827
        %v2199 = vunpack.c.h.b16 %v1827
        %v2200 = vunpack.c.l.b16 %v1828
        %v2201 = vunpack.c.h.b16 %v1828
        %v2202 = vunpack.c.l.b16 %v1829
        %v2203 = vunpack.c.h.b16 %v1829
        %v2204 = vunpack.c.l.b16 %v1830
        %v2205 = vunpack.c.h.b16 %v1830
        %v2206 = vunpack.c.l.b16 %v1831
        %v2207 = vunpack.c.h.b16 %v1831
        %v2208 = vunpack.c.l.b16 %v1832
        %v2209 = vunpack.c.h.b16 %v1832
        %v2210 = vunpack.c.l.b16 %v1833
        %v2211 = vunpack.c.h.b16 %v1833
        %v2212 = vunpack.c.l.b16 %v1834
        %v2213 = vunpack.c.h.b16 %v1834
        %v2214 = vunpack.c.l.b16 %v1835
        %v2215 = vunpack.c.h.b16 %v1835
        %v2216 = vunpack.c.l.b16 %v1836
        %v2217 = vunpack.c.h.b16 %v1836
        %v2218 = vunpack.c.l.b16 %v1837
        %v2219 = vunpack.c.h.b16 %v1837
        %v2220 = vunpack.c.l.b16 %v1838
        %v2221 = vunpack.c.h.b16 %v1838
        %v2222 = vunpack.c.l.b16 %v1839
        %v2223 = vunpack.c.h.b16 %v1839
        %v2224 = vunpack.c.l.b16 %v1840
        %v2225 = vunpack.c.h.b16 %v1840
        %v2226 = vunpack.c.l.b16 %v1841
        %v2227 = vunpack.c.h.b16 %v1841
        %v2228 = vunpack.c.l.b16 %v1842
        %v2229 = vunpack.c.h.b16 %v1842
        %v2230 = vunpack.c.l.b16 %v1843
        %v2231 = vunpack.c.h.b16 %v1843
        %v2232 = vunpack.c.l.b16 %v1844
        %v2233 = vunpack.c.h.b16 %v1844
        %v2234 = vunpack.c.l.b16 %v1845
        %v2235 = vunpack.c.h.b16 %v1845
        %v2236 = vunpack.c.l.b16 %v1846
        %v2237 = vunpack.c.h.b16 %v1846
        %v2238 = vunpack.c.l.b16 %v1847
        %v2239 = vunpack.c.h.b16 %v1847
        %v2240 = vunpack.c.l.b16 %v1848
        %v2241 = vunpack.c.h.b16 %v1848
        %v2242 = vunpack.c.l.b16 %v1849
        %v2243 = vunpack.c.h.b16 %v1849
        %v2244 = vunpack.c.l.b16 %v1850
        %v2245 = vunpack.c.h.b16 %v1850
        %v2246 = vunpack.c.l.b16 %v1851
        %v2247 = vunpack.c.h.b16 %v1851
        %v2248 = vunpack.c.l.b16 %v1852
        %v2249 = vunpack.c.h.b16 %v1852
        %v2250 = vunpack.c.l.b16 %v1853
        %v2251 = vunpack.c.h.b16 %v1853
        %v2252 = vunpack.c.l.b16 %v1854
        %v2253 = vunpack.c.h.b16 %v1854
        %v2254 = vunpack.c.l.b16 %v1855
        %v2255 = vunpack.c.h.b16 %v1855
        %v2256 = vunpack.c.l.b16 %v1856
        %v2257 = vunpack.c.h.b16 %v1856
        %v2258 = vunpack.c.l.b16 %v1857
        %v2259 = vunpack.c.h.b16 %v1857
        %v2260 = vunpack.c.l.b16 %v1858
        %v2261 = vunpack.c.h.b16 %v1858
        %v2262 = vunpack.c.l.b16 %v1859
        %v2263 = vunpack.c.h.b16 %v1859
        %v2264 = vunpack.c.l.b16 %v1860
        %v2265 = vunpack.c.h.b16 %v1860
        %v2266 = vunpack.c.l.b16 %v1861
        %v2267 = vunpack.c.h.b16 %v1861
        %v2268 = vunpack.c.l.b16 %v1862
        %v2269 = vunpack.c.h.b16 %v1862
        %v2270 = vunpack.c.l.b16 %v1863
        %v2271 = vunpack.c.h.b16 %v1863
        %v2272 = vunpack.c.l.b16 %v1864
        %v2273 = vunpack.c.h.b16 %v1864
        %v2274 = vunpack.c.l.b16 %v1865
        %v2275 = vunpack.c.h.b16 %v1865
        %v2276 = vunpack.c.l.b16 %v1866
        %v2277 = vunpack.c.h.b16 %v1866
        %v2278 = vunpack.c.l.b16 %v1867
        %v2279 = vunpack.c.h.b16 %v1867
        %v2280 = vunpack.c.l.b16 %v1868
        %v2281 = vunpack.c.h.b16 %v1868
        %v2282 = vunpack.c.l.b16 %v1869
        %v2283 = vunpack.c.h.b16 %v1869
        %v2284 = vunpack.c.l.b16 %v1870
        %v2285 = vunpack.c.h.b16 %v1870
        %v2286 = vunpack.c.l.b16 %v1871
        %v2287 = vunpack.c.h.b16 %v1871
        %v2288 = vunpack.c.l.b16 %v1872
        %v2289 = vunpack.c.h.b16 %v1872
        %v2290 = vunpack.c.l.b16 %v1873
        %v2291 = vunpack.c.h.b16 %v1873
        %v2292 = vunpack.c.l.b16 %v1874
        %v2293 = vunpack.c.h.b16 %v1874
        %v2294 = vunpack.c.l.b16 %v1875
        %v2295 = vunpack.c.h.b16 %v1875
        %v2296 = vpack.c.b16 %v2056, %v2040
        %v2297 = vpack.c.b16 %v2057, %v2041
        %v2298 = vpack.c.b16 %v2058, %v2042
        %v2299 = vpack.c.b16 %v2059, %v2043
        %v2300 = vpack.c.b16 %v2060, %v2044
        %v2301 = vpack.c.b16 %v2061, %v2045
        %v2302 = vpack.c.b16 %v2062, %v2046
        %v2303 = vpack.c.b16 %v2063, %v2047
        %v2304 = vpack.c.b16 %v2064, %v2048
        %v2305 = vpack.c.b16 %v2065, %v2049
        %v2306 = vpack.c.b16 %v2066, %v2050
        %v2307 = vpack.c.b16 %v2067, %v2051
        %v2308 = vpack.c.b16 %v2068, %v2052
        %v2309 = vpack.c.b16 %v2069, %v2053
        %v2310 = vpack.c.b16 %v2070, %v2054
        %v2311 = vpack.c.b16 %v2071, %v2055
        %v2312 = vpack.c.b16 %v2088, %v2072
        %v2313 = vpack.c.b16 %v2089, %v2073
        %v2314 = vpack.c.b16 %v2090, %v2074
        %v2315 = vpack.c.b16 %v2091, %v2075
        %v2316 = vpack.c.b16 %v2092, %v2076
        %v2317 = vpack.c.b16 %v2093, %v2077
        %v2318 = vpack.c.b16 %v2094, %v2078
        %v2319 = vpack.c.b16 %v2095, %v2079
        %v2320 = vpack.c.b16 %v2096, %v2080
        %v2321 = vpack.c.b16 %v2097, %v2081
        %v2322 = vpack.c.b16 %v2098, %v2082
        %v2323 = vpack.c.b16 %v2099, %v2083
        %v2324 = vpack.c.b16 %v2100, %v2084
        %v2325 = vpack.c.b16 %v2101, %v2085
        %v2326 = vpack.c.b16 %v2102, %v2086
        %v2327 = vpack.c.b16 %v2103, %v2087
        %v2328 = vpack.c.b16 %v2120, %v2104
        %v2329 = vpack.c.b16 %v2121, %v2105
        %v2330 = vpack.c.b16 %v2122, %v2106
        %v2331 = vpack.c.b16 %v2123, %v2107
        %v2332 = vpack.c.b16 %v2124, %v2108
        %v2333 = vpack.c.b16 %v2125, %v2109
        %v2334 = vpack.c.b16 %v2126, %v2110
        %v2335 = vpack.c.b16 %v2127, %v2111
        %v2336 = vpack.c.b16 %v2128, %v2112
        %v2337 = vpack.c.b16 %v2129, %v2113
        %v2338 = vpack.c.b16 %v2130, %v2114
        %v2339 = vpack.c.b16 %v2131, %v2115
        %v2340 = vpack.c.b16 %v2132, %v2116
        %v2341 = vpack.c.b16 %v2133, %v2117
        %v2342 = vpack.c.b16 %v2134, %v2118
        %v2343 = vpack.c.b16 %v2135, %v2119
        %v2344 = vpack.c.b16 %v2152, %v2136
        %v2345 = vpack.c.b16 %v2153, %v2137
        %v2346 = vpack.c.b16 %v2154, %v2138
        %v2347 = vpack.c.b16 %v2155, %v2139
        %v2348 = vpack.c.b16 %v2156, %v2140
        %v2349 = vpack.c.b16 %v2157, %v2141
        %v2350 = vpack.c.b16 %v2158, %v2142
        %v2351 = vpack.c.b16 %v2159, %v2143
        %v2352 = vpack.c.b16 %v2160, %v2144
        %v2353 = vpack.c.b16 %v2161, %v2145
        %v2354 = vpack.c.b16 %v2162, %v2146
        %v2355 = vpack.c.b16 %v2163, %v2147
        %v2356 = vpack.c.b16 %v2164, %v2148
        %v2357 = vpack.c.b16 %v2165, %v2149
        %v2358 = vpack.c.b16 %v2166, %v2150
        %v2359 = vpack.c.b16 %v2167, %v2151
        %v2360 = vpack.c.b16 %v2184, %v2168
        %v2361 = vpack.c.b16 %v2185, %v2169
        %v2362 = vpack.c.b16 %v2186, %v2170
        %v2363 = vpack.c.b16 %v2187, %v2171
        %v2364 = vpack.c.b16 %v2188, %v2172
        %v2365 = vpack.c.b16 %v2189, %v2173
        %v2366 = vpack.c.b16 %v2190, %v2174
        %v2367 = vpack.c.b16 %v2191, %v2175
        %v2368 = vpack.c.b16 %v2192, %v2176
        %v2369 = vpack.c.b16 %v2193, %v2177
        %v2370 = vpack.c.b16 %v2194, %v2178
        %v2371 = vpack.c.b16 %v2195, %v2179
        %v2372 = vpack.c.b16 %v2196, %v2180
        %v2373 = vpack.c.b16 %v2197, %v2181
        %v2374 = vpack.c.b16 %v2198, %v2182
        %v2375 = vpack.c.b16 %v2199, %v2183
        %v2376 = vpack.c.b16 %v2216, %v2200
        %v2377 = vpack.c.b16 %v2217, %v2201
        %v2378 = vpack.c.b16 %v2218, %v2202
        %v2379 = vpack.c.b16 %v2219, %v2203
        %v2380 = vpack.c.b16 %v2220, %v2204
        %v2381 = vpack.c.b16 %v2221, %v2205
        %v2382 = vpack.c.b16 %v2222, %v2206
        %v2383 = vpack.c.b16 %v2223, %v2207
        %v2384 = vpack.c.b16 %v2224, %v2208
        %v2385 = vpack.c.b16 %v2225, %v2209
        %v2386 = vpack.c.b16 %v2226, %v2210
        %v2387 = vpack.c.b16 %v2227, %v2211
        %v2388 = vpack.c.b16 %v2228, %v2212
        %v2389 = vpack.c.b16 %v2229, %v2213
        %v2390 = vpack.c.b16 %v2230, %v2214
        %v2391 = vpack.c.b16 %v2231, %v2215
        %v2392 = vpack.c.b16 %v2248, %v2232
        %v2393 = vpack.c.b16 %v2249, %v2233
        %v2394 = vpack.c.b16 %v2250, %v2234
        %v2395 = vpack.c.b16 %v2251, %v2235
        %v2396 = vpack.c.b16 %v2252, %v2236
        %v2397 = vpack.c.b16 %v2253, %v2237
        %v2398 = vpack.c.b16 %v2254, %v2238
        %v2399 = vpack.c.b16 %v2255, %v2239
        %v2400 = vpack.c.b16 %v2256, %v2240
        %v2401 = vpack.c.b16 %v2257, %v2241
        %v2402 = vpack.c.b16 %v2258, %v2242
        %v2403 = vpack.c.b16 %v2259, %v2243
        %v2404 = vpack.c.b16 %v2260, %v2244
        %v2405 = vpack.c.b16 %v2261, %v2245
        %v2406 = vpack.c.b16 %v2262, %v2246
        %v2407 = vpack.c.b16 %v2263, %v2247
        %v2408 = vpack.c.b16 %v2280, %v2264
        %v2409 = vpack.c.b16 %v2281, %v2265
        %v2410 = vpack.c.b16 %v2282, %v2266
        %v2411 = vpack.c.b16 %v2283, %v2267
        %v2412 = vpack.c.b16 %v2284, %v2268
        %v2413 = vpack.c.b16 %v2285, %v2269
        %v2414 = vpack.c.b16 %v2286, %v2270
        %v2415 = vpack.c.b16 %v2287, %v2271
        %v2416 = vpack.c.b16 %v2288, %v2272
        %v2417 = vpack.c.b16 %v2289, %v2273
        %v2418 = vpack.c.b16 %v2290, %v2274
        %v2419 = vpack.c.b16 %v2291, %v2275
        %v2420 = vpack.c.b16 %v2292, %v2276
        %v2421 = vpack.c.b16 %v2293, %v2277
        %v2422 = vpack.c.b16 %v2294, %v2278
        %v2423 = vpack.c.b16 %v2295, %v2279
        %2552 = vmatpush.bf16.msra.mxu0 %v2408
        %2553 = vmatpush.bf16.msra.mxu0 %v2392
        %2554 = vmatpush.bf16.msra.mxu0 %v2376
        %2555 = vmatpush.bf16.msra.mxu0 %v2360
        %2556 = vmatpush.bf16.msra.mxu0 %v2344
        %2557 = vmatpush.bf16.msra.mxu0 %v2328
        %2558 = vmatpush.bf16.msra.mxu0 %v2312
        %2559 = vmatpush.bf16.msra.mxu0 %v2296
        %2560 = vmatmul.bf16.gmra.mxu0 %v1747
        %v2561 = vpop.f32.mrf.mxu0
        %v2562 = vadd.f32 %v1880, %v2561
        %v2563 = vpop.f32.mrf.mxu0
        %v2564 = vadd.f32 %v1880, %v2563
        %2565 = vdwg.mxu0
        %2566 = vmatpush.bf16.msra.mxu0 %v2409
        %2567 = vmatpush.bf16.msra.mxu0 %v2393
        %2568 = vmatpush.bf16.msra.mxu0 %v2377
        %2569 = vmatpush.bf16.msra.mxu0 %v2361
        %2570 = vmatpush.bf16.msra.mxu0 %v2345
        %2571 = vmatpush.bf16.msra.mxu0 %v2329
        %2572 = vmatpush.bf16.msra.mxu0 %v2313
        %2573 = vmatpush.bf16.msra.mxu0 %v2297
        %2574 = vmatmul.bf16.gmra.mxu0 %v1747
        %v2575 = vpop.f32.mrf.mxu0
        %v2576 = vadd.f32 %v1881, %v2575
        %v2577 = vpop.f32.mrf.mxu0
        %v2578 = vadd.f32 %v1881, %v2577
        %2579 = vdwg.mxu0
        %2580 = vmatpush.bf16.msra.mxu0 %v2410
        %2581 = vmatpush.bf16.msra.mxu0 %v2394
        %2582 = vmatpush.bf16.msra.mxu0 %v2378
        %2583 = vmatpush.bf16.msra.mxu0 %v2362
        %2584 = vmatpush.bf16.msra.mxu0 %v2346
        %2585 = vmatpush.bf16.msra.mxu0 %v2330
        %2586 = vmatpush.bf16.msra.mxu0 %v2314
        %2587 = vmatpush.bf16.msra.mxu0 %v2298
        %2588 = vmatmul.bf16.gmra.mxu0 %v1747
        %v2589 = vpop.f32.mrf.mxu0
        %v2590 = vadd.f32 %v1882, %v2589
        %v2591 = vpop.f32.mrf.mxu0
        %v2592 = vadd.f32 %v1882, %v2591
        %2593 = vdwg.mxu0
        %2594 = vmatpush.bf16.msra.mxu0 %v2411
        %2595 = vmatpush.bf16.msra.mxu0 %v2395
        %2596 = vmatpush.bf16.msra.mxu0 %v2379
        %2597 = vmatpush.bf16.msra.mxu0 %v2363
        %2598 = vmatpush.bf16.msra.mxu0 %v2347
        %2599 = vmatpush.bf16.msra.mxu0 %v2331
        %2600 = vmatpush.bf16.msra.mxu0 %v2315
        %2601 = vmatpush.bf16.msra.mxu0 %v2299
        %2602 = vmatmul.bf16.gmra.mxu0 %v1747
        %v2603 = vpop.f32.mrf.mxu0
        %v2604 = vadd.f32 %v1883, %v2603
        %v2605 = vpop.f32.mrf.mxu0
        %v2606 = vadd.f32 %v1883, %v2605
        %2607 = vdwg.mxu0
        %2608 = vmatpush.bf16.msra.mxu0 %v2412
        %2609 = vmatpush.bf16.msra.mxu0 %v2396
        %2610 = vmatpush.bf16.msra.mxu0 %v2380
        %2611 = vmatpush.bf16.msra.mxu0 %v2364
        %2612 = vmatpush.bf16.msra.mxu0 %v2348
        %2613 = vmatpush.bf16.msra.mxu0 %v2332
        %2614 = vmatpush.bf16.msra.mxu0 %v2316
        %2615 = vmatpush.bf16.msra.mxu0 %v2300
        %2616 = vmatmul.bf16.gmra.mxu0 %v1747
        %v2617 = vpop.f32.mrf.mxu0
        %v2618 = vadd.f32 %v1884, %v2617
        %v2619 = vpop.f32.mrf.mxu0
        %v2620 = vadd.f32 %v1884, %v2619
        %2621 = vdwg.mxu0
        %2622 = vmatpush.bf16.msra.mxu0 %v2413
        %2623 = vmatpush.bf16.msra.mxu0 %v2397
        %2624 = vmatpush.bf16.msra.mxu0 %v2381
        %2625 = vmatpush.bf16.msra.mxu0 %v2365
        %2626 = vmatpush.bf16.msra.mxu0 %v2349
        %2627 = vmatpush.bf16.msra.mxu0 %v2333
        %2628 = vmatpush.bf16.msra.mxu0 %v2317
        %2629 = vmatpush.bf16.msra.mxu0 %v2301
        %2630 = vmatmul.bf16.gmra.mxu0 %v1747
        %v2631 = vpop.f32.mrf.mxu0
        %v2632 = vadd.f32 %v1885, %v2631
        %v2633 = vpop.f32.mrf.mxu0
        %v2634 = vadd.f32 %v1885, %v2633
        %2635 = vdwg.mxu0
        %2636 = vmatpush.bf16.msra.mxu0 %v2414
        %2637 = vmatpush.bf16.msra.mxu0 %v2398
        %2638 = vmatpush.bf16.msra.mxu0 %v2382
        %2639 = vmatpush.bf16.msra.mxu0 %v2366
        %2640 = vmatpush.bf16.msra.mxu0 %v2350
        %2641 = vmatpush.bf16.msra.mxu0 %v2334
        %2642 = vmatpush.bf16.msra.mxu0 %v2318
        %2643 = vmatpush.bf16.msra.mxu0 %v2302
        %2644 = vmatmul.bf16.gmra.mxu0 %v1747
        %v2645 = vpop.f32.mrf.mxu0
        %v2646 = vadd.f32 %v1886, %v2645
        %v2647 = vpop.f32.mrf.mxu0
        %v2648 = vadd.f32 %v1886, %v2647
        %2649 = vdwg.mxu0
        %2650 = vmatpush.bf16.msra.mxu0 %v2415
        %2651 = vmatpush.bf16.msra.mxu0 %v2399
        %2652 = vmatpush.bf16.msra.mxu0 %v2383
        %2653 = vmatpush.bf16.msra.mxu0 %v2367
        %2654 = vmatpush.bf16.msra.mxu0 %v2351
        %2655 = vmatpush.bf16.msra.mxu0 %v2335
        %2656 = vmatpush.bf16.msra.mxu0 %v2319
        %2657 = vmatpush.bf16.msra.mxu0 %v2303
        %2658 = vmatmul.bf16.gmra.mxu0 %v1747
        %v2659 = vpop.f32.mrf.mxu0
        %v2660 = vadd.f32 %v1887, %v2659
        %v2661 = vpop.f32.mrf.mxu0
        %v2662 = vadd.f32 %v1887, %v2661
        %2663 = vdwg.mxu0
        %2664 = vmatpush.bf16.msra.mxu0 %v2416
        %2665 = vmatpush.bf16.msra.mxu0 %v2400
        %2666 = vmatpush.bf16.msra.mxu0 %v2384
        %2667 = vmatpush.bf16.msra.mxu0 %v2368
        %2668 = vmatpush.bf16.msra.mxu0 %v2352
        %2669 = vmatpush.bf16.msra.mxu0 %v2336
        %2670 = vmatpush.bf16.msra.mxu0 %v2320
        %2671 = vmatpush.bf16.msra.mxu0 %v2304
        %2672 = vmatmul.bf16.gmra.mxu0 %v1747
        %v2673 = vpop.f32.mrf.mxu0
        %v2674 = vadd.f32 %v1888, %v2673
        %v2675 = vpop.f32.mrf.mxu0
        %v2676 = vadd.f32 %v1888, %v2675
        %2677 = vdwg.mxu0
        %2678 = vmatpush.bf16.msra.mxu0 %v2417
        %2679 = vmatpush.bf16.msra.mxu0 %v2401
        %2680 = vmatpush.bf16.msra.mxu0 %v2385
        %2681 = vmatpush.bf16.msra.mxu0 %v2369
        %2682 = vmatpush.bf16.msra.mxu0 %v2353
        %2683 = vmatpush.bf16.msra.mxu0 %v2337
        %2684 = vmatpush.bf16.msra.mxu0 %v2321
        %2685 = vmatpush.bf16.msra.mxu0 %v2305
        %2686 = vmatmul.bf16.gmra.mxu0 %v1747
        %v2687 = vpop.f32.mrf.mxu0
        %v2688 = vadd.f32 %v1889, %v2687
        %v2689 = vpop.f32.mrf.mxu0
        %v2690 = vadd.f32 %v1889, %v2689
        %2691 = vdwg.mxu0
        %2692 = vmatpush.bf16.msra.mxu0 %v2418
        %2693 = vmatpush.bf16.msra.mxu0 %v2402
        %2694 = vmatpush.bf16.msra.mxu0 %v2386
        %2695 = vmatpush.bf16.msra.mxu0 %v2370
        %2696 = vmatpush.bf16.msra.mxu0 %v2354
        %2697 = vmatpush.bf16.msra.mxu0 %v2338
        %2698 = vmatpush.bf16.msra.mxu0 %v2322
        %2699 = vmatpush.bf16.msra.mxu0 %v2306
        %2700 = vmatmul.bf16.gmra.mxu0 %v1747
        %v2701 = vpop.f32.mrf.mxu0
        %v2702 = vadd.f32 %v1890, %v2701
        %v2703 = vpop.f32.mrf.mxu0
        %v2704 = vadd.f32 %v1890, %v2703
        %2705 = vdwg.mxu0
        %2706 = vmatpush.bf16.msra.mxu0 %v2419
        %2707 = vmatpush.bf16.msra.mxu0 %v2403
        %2708 = vmatpush.bf16.msra.mxu0 %v2387
        %2709 = vmatpush.bf16.msra.mxu0 %v2371
        %2710 = vmatpush.bf16.msra.mxu0 %v2355
        %2711 = vmatpush.bf16.msra.mxu0 %v2339
        %2712 = vmatpush.bf16.msra.mxu0 %v2323
        %2713 = vmatpush.bf16.msra.mxu0 %v2307
        %2714 = vmatmul.bf16.gmra.mxu0 %v1747
        %v2715 = vpop.f32.mrf.mxu0
        %v2716 = vadd.f32 %v1891, %v2715
        %v2717 = vpop.f32.mrf.mxu0
        %v2718 = vadd.f32 %v1891, %v2717
        %2719 = vdwg.mxu0
        %2720 = vmatpush.bf16.msra.mxu0 %v2420
        %2721 = vmatpush.bf16.msra.mxu0 %v2404
        %2722 = vmatpush.bf16.msra.mxu0 %v2388
        %2723 = vmatpush.bf16.msra.mxu0 %v2372
        %2724 = vmatpush.bf16.msra.mxu0 %v2356
        %2725 = vmatpush.bf16.msra.mxu0 %v2340
        %2726 = vmatpush.bf16.msra.mxu0 %v2324
        %2727 = vmatpush.bf16.msra.mxu0 %v2308
        %2728 = vmatmul.bf16.gmra.mxu0 %v1747
        %v2729 = vpop.f32.mrf.mxu0
        %v2730 = vadd.f32 %v1892, %v2729
        %v2731 = vpop.f32.mrf.mxu0
        %v2732 = vadd.f32 %v1892, %v2731
        %2733 = vdwg.mxu0
        %2734 = vmatpush.bf16.msra.mxu0 %v2421
        %2735 = vmatpush.bf16.msra.mxu0 %v2405
        %2736 = vmatpush.bf16.msra.mxu0 %v2389
        %2737 = vmatpush.bf16.msra.mxu0 %v2373
        %2738 = vmatpush.bf16.msra.mxu0 %v2357
        %2739 = vmatpush.bf16.msra.mxu0 %v2341
        %2740 = vmatpush.bf16.msra.mxu0 %v2325
        %2741 = vmatpush.bf16.msra.mxu0 %v2309
        %2742 = vmatmul.bf16.gmra.mxu0 %v1747
        %v2743 = vpop.f32.mrf.mxu0
        %v2744 = vadd.f32 %v1893, %v2743
        %v2745 = vpop.f32.mrf.mxu0
        %v2746 = vadd.f32 %v1893, %v2745
        %2747 = vdwg.mxu0
        %2748 = vmatpush.bf16.msra.mxu0 %v2422
        %2749 = vmatpush.bf16.msra.mxu0 %v2406
        %2750 = vmatpush.bf16.msra.mxu0 %v2390
        %2751 = vmatpush.bf16.msra.mxu0 %v2374
        %2752 = vmatpush.bf16.msra.mxu0 %v2358
        %2753 = vmatpush.bf16.msra.mxu0 %v2342
        %2754 = vmatpush.bf16.msra.mxu0 %v2326
        %2755 = vmatpush.bf16.msra.mxu0 %v2310
        %2756 = vmatmul.bf16.gmra.mxu0 %v1747
        %v2757 = vpop.f32.mrf.mxu0
        %v2758 = vadd.f32 %v1894, %v2757
        %v2759 = vpop.f32.mrf.mxu0
        %v2760 = vadd.f32 %v1894, %v2759
        %2761 = vdwg.mxu0
        %2762 = vmatpush.bf16.msra.mxu0 %v2423
        %2763 = vmatpush.bf16.msra.mxu0 %v2407
        %2764 = vmatpush.bf16.msra.mxu0 %v2391
        %2765 = vmatpush.bf16.msra.mxu0 %v2375
        %2766 = vmatpush.bf16.msra.mxu0 %v2359
        %2767 = vmatpush.bf16.msra.mxu0 %v2343
        %2768 = vmatpush.bf16.msra.mxu0 %v2327
        %2769 = vmatpush.bf16.msra.mxu0 %v2311
        %2770 = vmatmul.bf16.gmra.mxu0 %v1747
        %v2771 = vpop.f32.mrf.mxu0
        %v2772 = vadd.f32 %v1895, %v2771
        %v2773 = vpop.f32.mrf.mxu0
        %v2774 = vadd.f32 %v1895, %v2773
        %2775 = vdwg.mxu0
        %v2776 = vmax.f32 %v2562, 0.0
        %v2777 = vmax.f32 %v2576, 0.0
        %v2778 = vmax.f32 %v2590, 0.0
        %v2779 = vmax.f32 %v2604, 0.0
        %v2780 = vmax.f32 %v2618, 0.0
        %v2781 = vmax.f32 %v2632, 0.0
        %v2782 = vmax.f32 %v2646, 0.0
        %v2783 = vmax.f32 %v2660, 0.0
        %v2784 = vmax.f32 %v2674, 0.0
        %v2785 = vmax.f32 %v2688, 0.0
        %v2786 = vmax.f32 %v2702, 0.0
        %v2787 = vmax.f32 %v2716, 0.0
        %v2788 = vmax.f32 %v2730, 0.0
        %v2789 = vmax.f32 %v2744, 0.0
        %v2790 = vmax.f32 %v2758, 0.0
        %v2791 = vmax.f32 %v2772, 0.0
        %v2792 = vmax.f32 %v2564, 0.0
        %v2793 = vmax.f32 %v2578, 0.0
        %v2794 = vmax.f32 %v2592, 0.0
        %v2795 = vmax.f32 %v2606, 0.0
        %v2796 = vmax.f32 %v2620, 0.0
        %v2797 = vmax.f32 %v2634, 0.0
        %v2798 = vmax.f32 %v2648, 0.0
        %v2799 = vmax.f32 %v2662, 0.0
        %v2800 = vmax.f32 %v2676, 0.0
        %v2801 = vmax.f32 %v2690, 0.0
        %v2802 = vmax.f32 %v2704, 0.0
        %v2803 = vmax.f32 %v2718, 0.0
        %v2804 = vmax.f32 %v2732, 0.0
        %v2805 = vmax.f32 %v2746, 0.0
        %v2806 = vmax.f32 %v2760, 0.0
        %v2807 = vmax.f32 %v2774, 0.0
        %v2808 = vpack.c.bf16 %v2792, %v2776
        %v2809 = vpack.c.bf16 %v2793, %v2777
        %v2810 = vpack.c.bf16 %v2794, %v2778
        %v2811 = vpack.c.bf16 %v2795, %v2779
        %v2812 = vpack.c.bf16 %v2796, %v2780
        %v2813 = vpack.c.bf16 %v2797, %v2781
        %v2814 = vpack.c.bf16 %v2798, %v2782
        %v2815 = vpack.c.bf16 %v2799, %v2783
        %v2816 = vpack.c.bf16 %v2800, %v2784
        %v2817 = vpack.c.bf16 %v2801, %v2785
        %v2818 = vpack.c.bf16 %v2802, %v2786
        %v2819 = vpack.c.bf16 %v2803, %v2787
        %v2820 = vpack.c.bf16 %v2804, %v2788
        %v2821 = vpack.c.bf16 %v2805, %v2789
        %v2822 = vpack.c.bf16 %v2806, %v2790
        %v2823 = vpack.c.bf16 %v2807, %v2791
        %v2824 = vld [vmem:[%s723] sm:$0xf]
        %v2825 = vld [vmem:[%s723 + $0x4] sm:$0xf]
        %v2826 = vld [vmem:[%s723 + $0x8] sm:$0xf]
        %v2827 = vld [vmem:[%s723 + $0xc] sm:$0xf]
        %v2828 = vld [vmem:[%s723 + $0x10] sm:$0xf]
        %v2829 = vld [vmem:[%s723 + $0x14] sm:$0xf]
        %v2830 = vld [vmem:[%s723 + $0x18] sm:$0xf]
        %v2831 = vld [vmem:[%s723 + $0x1c] sm:$0xf]
        %v2832 = vld [vmem:[%s723 + $0x20] sm:$0xf]
        %v2833 = vld [vmem:[%s723 + $0x24] sm:$0xf]
        %v2834 = vld [vmem:[%s723 + $0x28] sm:$0xf]
        %v2835 = vld [vmem:[%s723 + $0x2c] sm:$0xf]
        %v2836 = vld [vmem:[%s723 + $0x30] sm:$0xf]
        %v2837 = vld [vmem:[%s723 + $0x34] sm:$0xf]
        %v2838 = vld [vmem:[%s723 + $0x38] sm:$0xf]
        %v2839 = vld [vmem:[%s723 + $0x3c] sm:$0xf]
        %v2840 = vld [vmem:[%s723 + $0x40] sm:$0xf]
        %v2841 = vld [vmem:[%s723 + $0x44] sm:$0xf]
        %v2842 = vld [vmem:[%s723 + $0x48] sm:$0xf]
        %v2843 = vld [vmem:[%s723 + $0x4c] sm:$0xf]
        %v2844 = vld [vmem:[%s723 + $0x50] sm:$0xf]
        %v2845 = vld [vmem:[%s723 + $0x54] sm:$0xf]
        %v2846 = vld [vmem:[%s723 + $0x58] sm:$0xf]
        %v2847 = vld [vmem:[%s723 + $0x5c] sm:$0xf]
        %v2848 = vld [vmem:[%s723 + $0x60] sm:$0xf]
        %v2849 = vld [vmem:[%s723 + $0x64] sm:$0xf]
        %v2850 = vld [vmem:[%s723 + $0x68] sm:$0xf]
        %v2851 = vld [vmem:[%s723 + $0x6c] sm:$0xf]
        %v2852 = vld [vmem:[%s723 + $0x70] sm:$0xf]
        %v2853 = vld [vmem:[%s723 + $0x74] sm:$0xf]
        %v2854 = vld [vmem:[%s723 + $0x78] sm:$0xf]
        %v2855 = vld [vmem:[%s723 + $0x7c] sm:$0xf]
        %v2856 = vld [vmem:[%s723 + $0x80] sm:$0xf]
        %v2857 = vld [vmem:[%s723 + $0x84] sm:$0xf]
        %v2858 = vld [vmem:[%s723 + $0x88] sm:$0xf]
        %v2859 = vld [vmem:[%s723 + $0x8c] sm:$0xf]
        %v2860 = vld [vmem:[%s723 + $0x90] sm:$0xf]
        %v2861 = vld [vmem:[%s723 + $0x94] sm:$0xf]
        %v2862 = vld [vmem:[%s723 + $0x98] sm:$0xf]
        %v2863 = vld [vmem:[%s723 + $0x9c] sm:$0xf]
        %v2864 = vld [vmem:[%s723 + $0xa0] sm:$0xf]
        %v2865 = vld [vmem:[%s723 + $0xa4] sm:$0xf]
        %v2866 = vld [vmem:[%s723 + $0xa8] sm:$0xf]
        %v2867 = vld [vmem:[%s723 + $0xac] sm:$0xf]
        %v2868 = vld [vmem:[%s723 + $0xb0] sm:$0xf]
        %v2869 = vld [vmem:[%s723 + $0xb4] sm:$0xf]
        %v2870 = vld [vmem:[%s723 + $0xb8] sm:$0xf]
        %v2871 = vld [vmem:[%s723 + $0xbc] sm:$0xf]
        %v2872 = vld [vmem:[%s723 + $0xc0] sm:$0xf]
        %v2873 = vld [vmem:[%s723 + $0xc4] sm:$0xf]
        %v2874 = vld [vmem:[%s723 + $0xc8] sm:$0xf]
        %v2875 = vld [vmem:[%s723 + $0xcc] sm:$0xf]
        %v2876 = vld [vmem:[%s723 + $0xd0] sm:$0xf]
        %v2877 = vld [vmem:[%s723 + $0xd4] sm:$0xf]
        %v2878 = vld [vmem:[%s723 + $0xd8] sm:$0xf]
        %v2879 = vld [vmem:[%s723 + $0xdc] sm:$0xf]
        %v2880 = vld [vmem:[%s723 + $0xe0] sm:$0xf]
        %v2881 = vld [vmem:[%s723 + $0xe4] sm:$0xf]
        %v2882 = vld [vmem:[%s723 + $0xe8] sm:$0xf]
        %v2883 = vld [vmem:[%s723 + $0xec] sm:$0xf]
        %v2884 = vld [vmem:[%s723 + $0xf0] sm:$0xf]
        %v2885 = vld [vmem:[%s723 + $0xf4] sm:$0xf]
        %v2886 = vld [vmem:[%s723 + $0xf8] sm:$0xf]
        %v2887 = vld [vmem:[%s723 + $0xfc] sm:$0xf]
        %v2888 = vld [vmem:[%s723 + $0x100] sm:$0xf]
        %v2889 = vld [vmem:[%s723 + $0x104] sm:$0xf]
        %v2890 = vld [vmem:[%s723 + $0x108] sm:$0xf]
        %v2891 = vld [vmem:[%s723 + $0x10c] sm:$0xf]
        %v2892 = vld [vmem:[%s723 + $0x110] sm:$0xf]
        %v2893 = vld [vmem:[%s723 + $0x114] sm:$0xf]
        %v2894 = vld [vmem:[%s723 + $0x118] sm:$0xf]
        %v2895 = vld [vmem:[%s723 + $0x11c] sm:$0xf]
        %v2896 = vld [vmem:[%s723 + $0x120] sm:$0xf]
        %v2897 = vld [vmem:[%s723 + $0x124] sm:$0xf]
        %v2898 = vld [vmem:[%s723 + $0x128] sm:$0xf]
        %v2899 = vld [vmem:[%s723 + $0x12c] sm:$0xf]
        %v2900 = vld [vmem:[%s723 + $0x130] sm:$0xf]
        %v2901 = vld [vmem:[%s723 + $0x134] sm:$0xf]
        %v2902 = vld [vmem:[%s723 + $0x138] sm:$0xf]
        %v2903 = vld [vmem:[%s723 + $0x13c] sm:$0xf]
        %v2904 = vld [vmem:[%s723 + $0x140] sm:$0xf]
        %v2905 = vld [vmem:[%s723 + $0x144] sm:$0xf]
        %v2906 = vld [vmem:[%s723 + $0x148] sm:$0xf]
        %v2907 = vld [vmem:[%s723 + $0x14c] sm:$0xf]
        %v2908 = vld [vmem:[%s723 + $0x150] sm:$0xf]
        %v2909 = vld [vmem:[%s723 + $0x154] sm:$0xf]
        %v2910 = vld [vmem:[%s723 + $0x158] sm:$0xf]
        %v2911 = vld [vmem:[%s723 + $0x15c] sm:$0xf]
        %v2912 = vld [vmem:[%s723 + $0x160] sm:$0xf]
        %v2913 = vld [vmem:[%s723 + $0x164] sm:$0xf]
        %v2914 = vld [vmem:[%s723 + $0x168] sm:$0xf]
        %v2915 = vld [vmem:[%s723 + $0x16c] sm:$0xf]
        %v2916 = vld [vmem:[%s723 + $0x170] sm:$0xf]
        %v2917 = vld [vmem:[%s723 + $0x174] sm:$0xf]
        %v2918 = vld [vmem:[%s723 + $0x178] sm:$0xf]
        %v2919 = vld [vmem:[%s723 + $0x17c] sm:$0xf]
        %v2920 = vld [vmem:[%s723 + $0x180] sm:$0xf]
        %v2921 = vld [vmem:[%s723 + $0x184] sm:$0xf]
        %v2922 = vld [vmem:[%s723 + $0x188] sm:$0xf]
        %v2923 = vld [vmem:[%s723 + $0x18c] sm:$0xf]
        %v2924 = vld [vmem:[%s723 + $0x190] sm:$0xf]
        %v2925 = vld [vmem:[%s723 + $0x194] sm:$0xf]
        %v2926 = vld [vmem:[%s723 + $0x198] sm:$0xf]
        %v2927 = vld [vmem:[%s723 + $0x19c] sm:$0xf]
        %v2928 = vld [vmem:[%s723 + $0x1a0] sm:$0xf]
        %v2929 = vld [vmem:[%s723 + $0x1a4] sm:$0xf]
        %v2930 = vld [vmem:[%s723 + $0x1a8] sm:$0xf]
        %v2931 = vld [vmem:[%s723 + $0x1ac] sm:$0xf]
        %v2932 = vld [vmem:[%s723 + $0x1b0] sm:$0xf]
        %v2933 = vld [vmem:[%s723 + $0x1b4] sm:$0xf]
        %v2934 = vld [vmem:[%s723 + $0x1b8] sm:$0xf]
        %v2935 = vld [vmem:[%s723 + $0x1bc] sm:$0xf]
        %v2936 = vld [vmem:[%s723 + $0x1c0] sm:$0xf]
        %v2937 = vld [vmem:[%s723 + $0x1c4] sm:$0xf]
        %v2938 = vld [vmem:[%s723 + $0x1c8] sm:$0xf]
        %v2939 = vld [vmem:[%s723 + $0x1cc] sm:$0xf]
        %v2940 = vld [vmem:[%s723 + $0x1d0] sm:$0xf]
        %v2941 = vld [vmem:[%s723 + $0x1d4] sm:$0xf]
        %v2942 = vld [vmem:[%s723 + $0x1d8] sm:$0xf]
        %v2943 = vld [vmem:[%s723 + $0x1dc] sm:$0xf]
        %v2944 = vld [vmem:[%s723 + $0x1e0] sm:$0xf]
        %v2945 = vld [vmem:[%s723 + $0x1e4] sm:$0xf]
        %v2946 = vld [vmem:[%s723 + $0x1e8] sm:$0xf]
        %v2947 = vld [vmem:[%s723 + $0x1ec] sm:$0xf]
        %v2948 = vld [vmem:[%s723 + $0x1f0] sm:$0xf]
        %v2949 = vld [vmem:[%s723 + $0x1f4] sm:$0xf]
        %v2950 = vld [vmem:[%s723 + $0x1f8] sm:$0xf]
        %v2951 = vld [vmem:[%s723 + $0x1fc] sm:$0xf]
        %v2952 = vld [vmem:[%s723 + $0x200] sm:$0xf]
        %v2953 = vld [vmem:[%s723 + $0x204] sm:$0xf]
        %v2954 = vld [vmem:[%s723 + $0x208] sm:$0xf]
        %v2955 = vld [vmem:[%s723 + $0x20c] sm:$0xf]
        %v2956 = vld [vmem:[%s723 + $0x210] sm:$0xf]
        %v2957 = vld [vmem:[%s723 + $0x214] sm:$0xf]
        %v2958 = vld [vmem:[%s723 + $0x218] sm:$0xf]
        %v2959 = vld [vmem:[%s723 + $0x21c] sm:$0xf]
        %v2960 = vld [vmem:[%s723 + $0x220] sm:$0xf]
        %v2961 = vld [vmem:[%s723 + $0x224] sm:$0xf]
        %v2962 = vld [vmem:[%s723 + $0x228] sm:$0xf]
        %v2963 = vld [vmem:[%s723 + $0x22c] sm:$0xf]
        %v2964 = vld [vmem:[%s723 + $0x230] sm:$0xf]
        %v2965 = vld [vmem:[%s723 + $0x234] sm:$0xf]
        %v2966 = vld [vmem:[%s723 + $0x238] sm:$0xf]
        %v2967 = vld [vmem:[%s723 + $0x23c] sm:$0xf]
        %v2968 = vld [vmem:[%s723 + $0x240] sm:$0xf]
        %v2969 = vld [vmem:[%s723 + $0x244] sm:$0xf]
        %v2970 = vld [vmem:[%s723 + $0x248] sm:$0xf]
        %v2971 = vld [vmem:[%s723 + $0x24c] sm:$0xf]
        %v2972 = vld [vmem:[%s723 + $0x250] sm:$0xf]
        %v2973 = vld [vmem:[%s723 + $0x254] sm:$0xf]
        %v2974 = vld [vmem:[%s723 + $0x258] sm:$0xf]
        %v2975 = vld [vmem:[%s723 + $0x25c] sm:$0xf]
        %v2976 = vld [vmem:[%s723 + $0x260] sm:$0xf]
        %v2977 = vld [vmem:[%s723 + $0x264] sm:$0xf]
        %v2978 = vld [vmem:[%s723 + $0x268] sm:$0xf]
        %v2979 = vld [vmem:[%s723 + $0x26c] sm:$0xf]
        %v2980 = vld [vmem:[%s723 + $0x270] sm:$0xf]
        %v2981 = vld [vmem:[%s723 + $0x274] sm:$0xf]
        %v2982 = vld [vmem:[%s723 + $0x278] sm:$0xf]
        %v2983 = vld [vmem:[%s723 + $0x27c] sm:$0xf]
        %v2984 = vld [vmem:[%s723 + $0x280] sm:$0xf]
        %v2985 = vld [vmem:[%s723 + $0x284] sm:$0xf]
        %v2986 = vld [vmem:[%s723 + $0x288] sm:$0xf]
        %v2987 = vld [vmem:[%s723 + $0x28c] sm:$0xf]
        %v2988 = vld [vmem:[%s723 + $0x290] sm:$0xf]
        %v2989 = vld [vmem:[%s723 + $0x294] sm:$0xf]
        %v2990 = vld [vmem:[%s723 + $0x298] sm:$0xf]
        %v2991 = vld [vmem:[%s723 + $0x29c] sm:$0xf]
        %v2992 = vld [vmem:[%s723 + $0x2a0] sm:$0xf]
        %v2993 = vld [vmem:[%s723 + $0x2a4] sm:$0xf]
        %v2994 = vld [vmem:[%s723 + $0x2a8] sm:$0xf]
        %v2995 = vld [vmem:[%s723 + $0x2ac] sm:$0xf]
        %v2996 = vld [vmem:[%s723 + $0x2b0] sm:$0xf]
        %v2997 = vld [vmem:[%s723 + $0x2b4] sm:$0xf]
        %v2998 = vld [vmem:[%s723 + $0x2b8] sm:$0xf]
        %v2999 = vld [vmem:[%s723 + $0x2bc] sm:$0xf]
        %v3000 = vld [vmem:[%s723 + $0x2c0] sm:$0xf]
        %v3001 = vld [vmem:[%s723 + $0x2c4] sm:$0xf]
        %v3002 = vld [vmem:[%s723 + $0x2c8] sm:$0xf]
        %v3003 = vld [vmem:[%s723 + $0x2cc] sm:$0xf]
        %v3004 = vld [vmem:[%s723 + $0x2d0] sm:$0xf]
        %v3005 = vld [vmem:[%s723 + $0x2d4] sm:$0xf]
        %v3006 = vld [vmem:[%s723 + $0x2d8] sm:$0xf]
        %v3007 = vld [vmem:[%s723 + $0x2dc] sm:$0xf]
        %v3008 = vld [vmem:[%s723 + $0x2e0] sm:$0xf]
        %v3009 = vld [vmem:[%s723 + $0x2e4] sm:$0xf]
        %v3010 = vld [vmem:[%s723 + $0x2e8] sm:$0xf]
        %v3011 = vld [vmem:[%s723 + $0x2ec] sm:$0xf]
        %v3012 = vld [vmem:[%s723 + $0x2f0] sm:$0xf]
        %v3013 = vld [vmem:[%s723 + $0x2f4] sm:$0xf]
        %v3014 = vld [vmem:[%s723 + $0x2f8] sm:$0xf]
        %v3015 = vld [vmem:[%s723 + $0x2fc] sm:$0xf]
        %v3016 = vld [vmem:[%s723 + $0x300] sm:$0xf]
        %v3017 = vld [vmem:[%s723 + $0x304] sm:$0xf]
        %v3018 = vld [vmem:[%s723 + $0x308] sm:$0xf]
        %v3019 = vld [vmem:[%s723 + $0x30c] sm:$0xf]
        %v3020 = vld [vmem:[%s723 + $0x310] sm:$0xf]
        %v3021 = vld [vmem:[%s723 + $0x314] sm:$0xf]
        %v3022 = vld [vmem:[%s723 + $0x318] sm:$0xf]
        %v3023 = vld [vmem:[%s723 + $0x31c] sm:$0xf]
        %v3024 = vld [vmem:[%s723 + $0x320] sm:$0xf]
        %v3025 = vld [vmem:[%s723 + $0x324] sm:$0xf]
        %v3026 = vld [vmem:[%s723 + $0x328] sm:$0xf]
        %v3027 = vld [vmem:[%s723 + $0x32c] sm:$0xf]
        %v3028 = vld [vmem:[%s723 + $0x330] sm:$0xf]
        %v3029 = vld [vmem:[%s723 + $0x334] sm:$0xf]
        %v3030 = vld [vmem:[%s723 + $0x338] sm:$0xf]
        %v3031 = vld [vmem:[%s723 + $0x33c] sm:$0xf]
        %v3032 = vld [vmem:[%s723 + $0x340] sm:$0xf]
        %v3033 = vld [vmem:[%s723 + $0x344] sm:$0xf]
        %v3034 = vld [vmem:[%s723 + $0x348] sm:$0xf]
        %v3035 = vld [vmem:[%s723 + $0x34c] sm:$0xf]
        %v3036 = vld [vmem:[%s723 + $0x350] sm:$0xf]
        %v3037 = vld [vmem:[%s723 + $0x354] sm:$0xf]
        %v3038 = vld [vmem:[%s723 + $0x358] sm:$0xf]
        %v3039 = vld [vmem:[%s723 + $0x35c] sm:$0xf]
        %v3040 = vld [vmem:[%s723 + $0x360] sm:$0xf]
        %v3041 = vld [vmem:[%s723 + $0x364] sm:$0xf]
        %v3042 = vld [vmem:[%s723 + $0x368] sm:$0xf]
        %v3043 = vld [vmem:[%s723 + $0x36c] sm:$0xf]
        %v3044 = vld [vmem:[%s723 + $0x370] sm:$0xf]
        %v3045 = vld [vmem:[%s723 + $0x374] sm:$0xf]
        %v3046 = vld [vmem:[%s723 + $0x378] sm:$0xf]
        %v3047 = vld [vmem:[%s723 + $0x37c] sm:$0xf]
        %v3048 = vld [vmem:[%s723 + $0x380] sm:$0xf]
        %v3049 = vld [vmem:[%s723 + $0x384] sm:$0xf]
        %v3050 = vld [vmem:[%s723 + $0x388] sm:$0xf]
        %v3051 = vld [vmem:[%s723 + $0x38c] sm:$0xf]
        %v3052 = vld [vmem:[%s723 + $0x390] sm:$0xf]
        %v3053 = vld [vmem:[%s723 + $0x394] sm:$0xf]
        %v3054 = vld [vmem:[%s723 + $0x398] sm:$0xf]
        %v3055 = vld [vmem:[%s723 + $0x39c] sm:$0xf]
        %v3056 = vld [vmem:[%s723 + $0x3a0] sm:$0xf]
        %v3057 = vld [vmem:[%s723 + $0x3a4] sm:$0xf]
        %v3058 = vld [vmem:[%s723 + $0x3a8] sm:$0xf]
        %v3059 = vld [vmem:[%s723 + $0x3ac] sm:$0xf]
        %v3060 = vld [vmem:[%s723 + $0x3b0] sm:$0xf]
        %v3061 = vld [vmem:[%s723 + $0x3b4] sm:$0xf]
        %v3062 = vld [vmem:[%s723 + $0x3b8] sm:$0xf]
        %v3063 = vld [vmem:[%s723 + $0x3bc] sm:$0xf]
        %v3064 = vld [vmem:[%s723 + $0x3c0] sm:$0xf]
        %v3065 = vld [vmem:[%s723 + $0x3c4] sm:$0xf]
        %v3066 = vld [vmem:[%s723 + $0x3c8] sm:$0xf]
        %v3067 = vld [vmem:[%s723 + $0x3cc] sm:$0xf]
        %v3068 = vld [vmem:[%s723 + $0x3d0] sm:$0xf]
        %v3069 = vld [vmem:[%s723 + $0x3d4] sm:$0xf]
        %v3070 = vld [vmem:[%s723 + $0x3d8] sm:$0xf]
        %v3071 = vld [vmem:[%s723 + $0x3dc] sm:$0xf]
        %v3072 = vld [vmem:[%s723 + $0x3e0] sm:$0xf]
        %v3073 = vld [vmem:[%s723 + $0x3e4] sm:$0xf]
        %v3074 = vld [vmem:[%s723 + $0x3e8] sm:$0xf]
        %v3075 = vld [vmem:[%s723 + $0x3ec] sm:$0xf]
        %v3076 = vld [vmem:[%s723 + $0x3f0] sm:$0xf]
        %v3077 = vld [vmem:[%s723 + $0x3f4] sm:$0xf]
        %v3078 = vld [vmem:[%s723 + $0x3f8] sm:$0xf]
        %v3079 = vld [vmem:[%s723 + $0x3fc] sm:$0xf]
        %v3080 = vld [vmem:[%s831] sm:$0x1]
        %v3082 = vperm.slane %v3080, 0
        %v3340 = vunpack.c.l.b16 %v2824
        %v3341 = vunpack.c.l.b16 %v2825
        %v3342 = vunpack.c.l.b16 %v2826
        %v3343 = vunpack.c.l.b16 %v2827
        %v3344 = vunpack.c.l.b16 %v2828
        %v3345 = vunpack.c.l.b16 %v2829
        %v3346 = vunpack.c.l.b16 %v2830
        %v3347 = vunpack.c.l.b16 %v2831
        %v3348 = vunpack.c.l.b16 %v2832
        %v3349 = vunpack.c.l.b16 %v2833
        %v3350 = vunpack.c.l.b16 %v2834
        %v3351 = vunpack.c.l.b16 %v2835
        %v3352 = vunpack.c.l.b16 %v2836
        %v3353 = vunpack.c.l.b16 %v2837
        %v3354 = vunpack.c.l.b16 %v2838
        %v3355 = vunpack.c.l.b16 %v2839
        %v3356 = vunpack.c.l.b16 %v2840
        %v3357 = vunpack.c.l.b16 %v2841
        %v3358 = vunpack.c.l.b16 %v2842
        %v3359 = vunpack.c.l.b16 %v2843
        %v3360 = vunpack.c.l.b16 %v2844
        %v3361 = vunpack.c.l.b16 %v2845
        %v3362 = vunpack.c.l.b16 %v2846
        %v3363 = vunpack.c.l.b16 %v2847
        %v3364 = vunpack.c.l.b16 %v2848
        %v3365 = vunpack.c.l.b16 %v2849
        %v3366 = vunpack.c.l.b16 %v2850
        %v3367 = vunpack.c.l.b16 %v2851
        %v3368 = vunpack.c.l.b16 %v2852
        %v3369 = vunpack.c.l.b16 %v2853
        %v3370 = vunpack.c.l.b16 %v2854
        %v3371 = vunpack.c.l.b16 %v2855
        %v3372 = vunpack.c.l.b16 %v2856
        %v3373 = vunpack.c.l.b16 %v2857
        %v3374 = vunpack.c.l.b16 %v2858
        %v3375 = vunpack.c.l.b16 %v2859
        %v3376 = vunpack.c.l.b16 %v2860
        %v3377 = vunpack.c.l.b16 %v2861
        %v3378 = vunpack.c.l.b16 %v2862
        %v3379 = vunpack.c.l.b16 %v2863
        %v3380 = vunpack.c.l.b16 %v2864
        %v3381 = vunpack.c.l.b16 %v2865
        %v3382 = vunpack.c.l.b16 %v2866
        %v3383 = vunpack.c.l.b16 %v2867
        %v3384 = vunpack.c.l.b16 %v2868
        %v3385 = vunpack.c.l.b16 %v2869
        %v3386 = vunpack.c.l.b16 %v2870
        %v3387 = vunpack.c.l.b16 %v2871
        %v3388 = vunpack.c.l.b16 %v2872
        %v3389 = vunpack.c.l.b16 %v2873
        %v3390 = vunpack.c.l.b16 %v2874
        %v3391 = vunpack.c.l.b16 %v2875
        %v3392 = vunpack.c.l.b16 %v2876
        %v3393 = vunpack.c.l.b16 %v2877
        %v3394 = vunpack.c.l.b16 %v2878
        %v3395 = vunpack.c.l.b16 %v2879
        %v3396 = vunpack.c.l.b16 %v2880
        %v3397 = vunpack.c.l.b16 %v2881
        %v3398 = vunpack.c.l.b16 %v2882
        %v3399 = vunpack.c.l.b16 %v2883
        %v3400 = vunpack.c.l.b16 %v2884
        %v3401 = vunpack.c.l.b16 %v2885
        %v3402 = vunpack.c.l.b16 %v2886
        %v3403 = vunpack.c.l.b16 %v2887
        %v3404 = vunpack.c.l.b16 %v2888
        %v3405 = vunpack.c.l.b16 %v2889
        %v3406 = vunpack.c.l.b16 %v2890
        %v3407 = vunpack.c.l.b16 %v2891
        %v3408 = vunpack.c.l.b16 %v2892
        %v3409 = vunpack.c.l.b16 %v2893
        %v3410 = vunpack.c.l.b16 %v2894
        %v3411 = vunpack.c.l.b16 %v2895
        %v3412 = vunpack.c.l.b16 %v2896
        %v3413 = vunpack.c.l.b16 %v2897
        %v3414 = vunpack.c.l.b16 %v2898
        %v3415 = vunpack.c.l.b16 %v2899
        %v3416 = vunpack.c.l.b16 %v2900
        %v3417 = vunpack.c.l.b16 %v2901
        %v3418 = vunpack.c.l.b16 %v2902
        %v3419 = vunpack.c.l.b16 %v2903
        %v3420 = vunpack.c.l.b16 %v2904
        %v3421 = vunpack.c.l.b16 %v2905
        %v3422 = vunpack.c.l.b16 %v2906
        %v3423 = vunpack.c.l.b16 %v2907
        %v3424 = vunpack.c.l.b16 %v2908
        %v3425 = vunpack.c.l.b16 %v2909
        %v3426 = vunpack.c.l.b16 %v2910
        %v3427 = vunpack.c.l.b16 %v2911
        %v3428 = vunpack.c.l.b16 %v2912
        %v3429 = vunpack.c.l.b16 %v2913
        %v3430 = vunpack.c.l.b16 %v2914
        %v3431 = vunpack.c.l.b16 %v2915
        %v3432 = vunpack.c.l.b16 %v2916
        %v3433 = vunpack.c.l.b16 %v2917
        %v3434 = vunpack.c.l.b16 %v2918
        %v3435 = vunpack.c.l.b16 %v2919
        %v3436 = vunpack.c.l.b16 %v2920
        %v3437 = vunpack.c.l.b16 %v2921
        %v3438 = vunpack.c.l.b16 %v2922
        %v3439 = vunpack.c.l.b16 %v2923
        %v3440 = vunpack.c.l.b16 %v2924
        %v3441 = vunpack.c.l.b16 %v2925
        %v3442 = vunpack.c.l.b16 %v2926
        %v3443 = vunpack.c.l.b16 %v2927
        %v3444 = vunpack.c.l.b16 %v2928
        %v3445 = vunpack.c.l.b16 %v2929
        %v3446 = vunpack.c.l.b16 %v2930
        %v3447 = vunpack.c.l.b16 %v2931
        %v3448 = vunpack.c.l.b16 %v2932
        %v3449 = vunpack.c.l.b16 %v2933
        %v3450 = vunpack.c.l.b16 %v2934
        %v3451 = vunpack.c.l.b16 %v2935
        %v3452 = vunpack.c.l.b16 %v2936
        %v3453 = vunpack.c.l.b16 %v2937
        %v3454 = vunpack.c.l.b16 %v2938
        %v3455 = vunpack.c.l.b16 %v2939
        %v3456 = vunpack.c.l.b16 %v2940
        %v3457 = vunpack.c.l.b16 %v2941
        %v3458 = vunpack.c.l.b16 %v2942
        %v3459 = vunpack.c.l.b16 %v2943
        %v3460 = vunpack.c.l.b16 %v2944
        %v3461 = vunpack.c.l.b16 %v2945
        %v3462 = vunpack.c.l.b16 %v2946
        %v3463 = vunpack.c.l.b16 %v2947
        %v3464 = vunpack.c.l.b16 %v2948
        %v3465 = vunpack.c.l.b16 %v2949
        %v3466 = vunpack.c.l.b16 %v2950
        %v3467 = vunpack.c.l.b16 %v2951
        %v3468 = vunpack.c.l.b16 %v2952
        %v3469 = vunpack.c.l.b16 %v2953
        %v3470 = vunpack.c.l.b16 %v2954
        %v3471 = vunpack.c.l.b16 %v2955
        %v3472 = vunpack.c.l.b16 %v2956
        %v3473 = vunpack.c.l.b16 %v2957
        %v3474 = vunpack.c.l.b16 %v2958
        %v3475 = vunpack.c.l.b16 %v2959
        %v3476 = vunpack.c.l.b16 %v2960
        %v3477 = vunpack.c.l.b16 %v2961
        %v3478 = vunpack.c.l.b16 %v2962
        %v3479 = vunpack.c.l.b16 %v2963
        %v3480 = vunpack.c.l.b16 %v2964
        %v3481 = vunpack.c.l.b16 %v2965
        %v3482 = vunpack.c.l.b16 %v2966
        %v3483 = vunpack.c.l.b16 %v2967
        %v3484 = vunpack.c.l.b16 %v2968
        %v3485 = vunpack.c.l.b16 %v2969
        %v3486 = vunpack.c.l.b16 %v2970
        %v3487 = vunpack.c.l.b16 %v2971
        %v3488 = vunpack.c.l.b16 %v2972
        %v3489 = vunpack.c.l.b16 %v2973
        %v3490 = vunpack.c.l.b16 %v2974
        %v3491 = vunpack.c.l.b16 %v2975
        %v3492 = vunpack.c.l.b16 %v2976
        %v3493 = vunpack.c.l.b16 %v2977
        %v3494 = vunpack.c.l.b16 %v2978
        %v3495 = vunpack.c.l.b16 %v2979
        %v3496 = vunpack.c.l.b16 %v2980
        %v3497 = vunpack.c.l.b16 %v2981
        %v3498 = vunpack.c.l.b16 %v2982
        %v3499 = vunpack.c.l.b16 %v2983
        %v3500 = vunpack.c.l.b16 %v2984
        %v3501 = vunpack.c.l.b16 %v2985
        %v3502 = vunpack.c.l.b16 %v2986
        %v3503 = vunpack.c.l.b16 %v2987
        %v3504 = vunpack.c.l.b16 %v2988
        %v3505 = vunpack.c.l.b16 %v2989
        %v3506 = vunpack.c.l.b16 %v2990
        %v3507 = vunpack.c.l.b16 %v2991
        %v3508 = vunpack.c.l.b16 %v2992
        %v3509 = vunpack.c.l.b16 %v2993
        %v3510 = vunpack.c.l.b16 %v2994
        %v3511 = vunpack.c.l.b16 %v2995
        %v3512 = vunpack.c.l.b16 %v2996
        %v3513 = vunpack.c.l.b16 %v2997
        %v3514 = vunpack.c.l.b16 %v2998
        %v3515 = vunpack.c.l.b16 %v2999
        %v3516 = vunpack.c.l.b16 %v3000
        %v3517 = vunpack.c.l.b16 %v3001
        %v3518 = vunpack.c.l.b16 %v3002
        %v3519 = vunpack.c.l.b16 %v3003
        %v3520 = vunpack.c.l.b16 %v3004
        %v3521 = vunpack.c.l.b16 %v3005
        %v3522 = vunpack.c.l.b16 %v3006
        %v3523 = vunpack.c.l.b16 %v3007
        %v3524 = vunpack.c.l.b16 %v3008
        %v3525 = vunpack.c.l.b16 %v3009
        %v3526 = vunpack.c.l.b16 %v3010
        %v3527 = vunpack.c.l.b16 %v3011
        %v3528 = vunpack.c.l.b16 %v3012
        %v3529 = vunpack.c.l.b16 %v3013
        %v3530 = vunpack.c.l.b16 %v3014
        %v3531 = vunpack.c.l.b16 %v3015
        %v3532 = vunpack.c.l.b16 %v3016
        %v3533 = vunpack.c.l.b16 %v3017
        %v3534 = vunpack.c.l.b16 %v3018
        %v3535 = vunpack.c.l.b16 %v3019
        %v3536 = vunpack.c.l.b16 %v3020
        %v3537 = vunpack.c.l.b16 %v3021
        %v3538 = vunpack.c.l.b16 %v3022
        %v3539 = vunpack.c.l.b16 %v3023
        %v3540 = vunpack.c.l.b16 %v3024
        %v3541 = vunpack.c.l.b16 %v3025
        %v3542 = vunpack.c.l.b16 %v3026
        %v3543 = vunpack.c.l.b16 %v3027
        %v3544 = vunpack.c.l.b16 %v3028
        %v3545 = vunpack.c.l.b16 %v3029
        %v3546 = vunpack.c.l.b16 %v3030
        %v3547 = vunpack.c.l.b16 %v3031
        %v3548 = vunpack.c.l.b16 %v3032
        %v3549 = vunpack.c.l.b16 %v3033
        %v3550 = vunpack.c.l.b16 %v3034
        %v3551 = vunpack.c.l.b16 %v3035
        %v3552 = vunpack.c.l.b16 %v3036
        %v3553 = vunpack.c.l.b16 %v3037
        %v3554 = vunpack.c.l.b16 %v3038
        %v3555 = vunpack.c.l.b16 %v3039
        %v3556 = vunpack.c.l.b16 %v3040
        %v3557 = vunpack.c.l.b16 %v3041
        %v3558 = vunpack.c.l.b16 %v3042
        %v3559 = vunpack.c.l.b16 %v3043
        %v3560 = vunpack.c.l.b16 %v3044
        %v3561 = vunpack.c.l.b16 %v3045
        %v3562 = vunpack.c.l.b16 %v3046
        %v3563 = vunpack.c.l.b16 %v3047
        %v3564 = vunpack.c.l.b16 %v3048
        %v3565 = vunpack.c.l.b16 %v3049
        %v3566 = vunpack.c.l.b16 %v3050
        %v3567 = vunpack.c.l.b16 %v3051
        %v3568 = vunpack.c.l.b16 %v3052
        %v3569 = vunpack.c.l.b16 %v3053
        %v3570 = vunpack.c.l.b16 %v3054
        %v3571 = vunpack.c.l.b16 %v3055
        %v3572 = vunpack.c.l.b16 %v3056
        %v3573 = vunpack.c.l.b16 %v3057
        %v3574 = vunpack.c.l.b16 %v3058
        %v3575 = vunpack.c.l.b16 %v3059
        %v3576 = vunpack.c.l.b16 %v3060
        %v3577 = vunpack.c.l.b16 %v3061
        %v3578 = vunpack.c.l.b16 %v3062
        %v3579 = vunpack.c.l.b16 %v3063
        %v3580 = vunpack.c.l.b16 %v3064
        %v3581 = vunpack.c.l.b16 %v3065
        %v3582 = vunpack.c.l.b16 %v3066
        %v3583 = vunpack.c.l.b16 %v3067
        %v3584 = vunpack.c.l.b16 %v3068
        %v3585 = vunpack.c.l.b16 %v3069
        %v3586 = vunpack.c.l.b16 %v3070
        %v3587 = vunpack.c.l.b16 %v3071
        %v3588 = vunpack.c.l.b16 %v3072
        %v3589 = vunpack.c.l.b16 %v3073
        %v3590 = vunpack.c.l.b16 %v3074
        %v3591 = vunpack.c.l.b16 %v3075
        %v3592 = vunpack.c.l.b16 %v3076
        %v3593 = vunpack.c.l.b16 %v3077
        %v3594 = vunpack.c.l.b16 %v3078
        %v3595 = vunpack.c.l.b16 %v3079
        %v3596 = vpack.c.b16 %v3341, %v3340
        %v3597 = vpack.c.b16 %v3343, %v3342
        %v3598 = vpack.c.b16 %v3345, %v3344
        %v3599 = vpack.c.b16 %v3347, %v3346
        %v3600 = vpack.c.b16 %v3349, %v3348
        %v3601 = vpack.c.b16 %v3351, %v3350
        %v3602 = vpack.c.b16 %v3353, %v3352
        %v3603 = vpack.c.b16 %v3355, %v3354
        %v3604 = vpack.c.b16 %v3357, %v3356
        %v3605 = vpack.c.b16 %v3359, %v3358
        %v3606 = vpack.c.b16 %v3361, %v3360
        %v3607 = vpack.c.b16 %v3363, %v3362
        %v3608 = vpack.c.b16 %v3365, %v3364
        %v3609 = vpack.c.b16 %v3367, %v3366
        %v3610 = vpack.c.b16 %v3369, %v3368
        %v3611 = vpack.c.b16 %v3371, %v3370
        %v3612 = vpack.c.b16 %v3373, %v3372
        %v3613 = vpack.c.b16 %v3375, %v3374
        %v3614 = vpack.c.b16 %v3377, %v3376
        %v3615 = vpack.c.b16 %v3379, %v3378
        %v3616 = vpack.c.b16 %v3381, %v3380
        %v3617 = vpack.c.b16 %v3383, %v3382
        %v3618 = vpack.c.b16 %v3385, %v3384
        %v3619 = vpack.c.b16 %v3387, %v3386
        %v3620 = vpack.c.b16 %v3389, %v3388
        %v3621 = vpack.c.b16 %v3391, %v3390
        %v3622 = vpack.c.b16 %v3393, %v3392
        %v3623 = vpack.c.b16 %v3395, %v3394
        %v3624 = vpack.c.b16 %v3397, %v3396
        %v3625 = vpack.c.b16 %v3399, %v3398
        %v3626 = vpack.c.b16 %v3401, %v3400
        %v3627 = vpack.c.b16 %v3403, %v3402
        %v3628 = vpack.c.b16 %v3405, %v3404
        %v3629 = vpack.c.b16 %v3407, %v3406
        %v3630 = vpack.c.b16 %v3409, %v3408
        %v3631 = vpack.c.b16 %v3411, %v3410
        %v3632 = vpack.c.b16 %v3413, %v3412
        %v3633 = vpack.c.b16 %v3415, %v3414
        %v3634 = vpack.c.b16 %v3417, %v3416
        %v3635 = vpack.c.b16 %v3419, %v3418
        %v3636 = vpack.c.b16 %v3421, %v3420
        %v3637 = vpack.c.b16 %v3423, %v3422
        %v3638 = vpack.c.b16 %v3425, %v3424
        %v3639 = vpack.c.b16 %v3427, %v3426
        %v3640 = vpack.c.b16 %v3429, %v3428
        %v3641 = vpack.c.b16 %v3431, %v3430
        %v3642 = vpack.c.b16 %v3433, %v3432
        %v3643 = vpack.c.b16 %v3435, %v3434
        %v3644 = vpack.c.b16 %v3437, %v3436
        %v3645 = vpack.c.b16 %v3439, %v3438
        %v3646 = vpack.c.b16 %v3441, %v3440
        %v3647 = vpack.c.b16 %v3443, %v3442
        %v3648 = vpack.c.b16 %v3445, %v3444
        %v3649 = vpack.c.b16 %v3447, %v3446
        %v3650 = vpack.c.b16 %v3449, %v3448
        %v3651 = vpack.c.b16 %v3451, %v3450
        %v3652 = vpack.c.b16 %v3453, %v3452
        %v3653 = vpack.c.b16 %v3455, %v3454
        %v3654 = vpack.c.b16 %v3457, %v3456
        %v3655 = vpack.c.b16 %v3459, %v3458
        %v3656 = vpack.c.b16 %v3461, %v3460
        %v3657 = vpack.c.b16 %v3463, %v3462
        %v3658 = vpack.c.b16 %v3465, %v3464
        %v3659 = vpack.c.b16 %v3467, %v3466
        %v3660 = vpack.c.b16 %v3469, %v3468
        %v3661 = vpack.c.b16 %v3471, %v3470
        %v3662 = vpack.c.b16 %v3473, %v3472
        %v3663 = vpack.c.b16 %v3475, %v3474
        %v3664 = vpack.c.b16 %v3477, %v3476
        %v3665 = vpack.c.b16 %v3479, %v3478
        %v3666 = vpack.c.b16 %v3481, %v3480
        %v3667 = vpack.c.b16 %v3483, %v3482
        %v3668 = vpack.c.b16 %v3485, %v3484
        %v3669 = vpack.c.b16 %v3487, %v3486
        %v3670 = vpack.c.b16 %v3489, %v3488
        %v3671 = vpack.c.b16 %v3491, %v3490
        %v3672 = vpack.c.b16 %v3493, %v3492
        %v3673 = vpack.c.b16 %v3495, %v3494
        %v3674 = vpack.c.b16 %v3497, %v3496
        %v3675 = vpack.c.b16 %v3499, %v3498
        %v3676 = vpack.c.b16 %v3501, %v3500
        %v3677 = vpack.c.b16 %v3503, %v3502
        %v3678 = vpack.c.b16 %v3505, %v3504
        %v3679 = vpack.c.b16 %v3507, %v3506
        %v3680 = vpack.c.b16 %v3509, %v3508
        %v3681 = vpack.c.b16 %v3511, %v3510
        %v3682 = vpack.c.b16 %v3513, %v3512
        %v3683 = vpack.c.b16 %v3515, %v3514
        %v3684 = vpack.c.b16 %v3517, %v3516
        %v3685 = vpack.c.b16 %v3519, %v3518
        %v3686 = vpack.c.b16 %v3521, %v3520
        %v3687 = vpack.c.b16 %v3523, %v3522
        %v3688 = vpack.c.b16 %v3525, %v3524
        %v3689 = vpack.c.b16 %v3527, %v3526
        %v3690 = vpack.c.b16 %v3529, %v3528
        %v3691 = vpack.c.b16 %v3531, %v3530
        %v3692 = vpack.c.b16 %v3533, %v3532
        %v3693 = vpack.c.b16 %v3535, %v3534
        %v3694 = vpack.c.b16 %v3537, %v3536
        %v3695 = vpack.c.b16 %v3539, %v3538
        %v3696 = vpack.c.b16 %v3541, %v3540
        %v3697 = vpack.c.b16 %v3543, %v3542
        %v3698 = vpack.c.b16 %v3545, %v3544
        %v3699 = vpack.c.b16 %v3547, %v3546
        %v3700 = vpack.c.b16 %v3549, %v3548
        %v3701 = vpack.c.b16 %v3551, %v3550
        %v3702 = vpack.c.b16 %v3553, %v3552
        %v3703 = vpack.c.b16 %v3555, %v3554
        %v3704 = vpack.c.b16 %v3557, %v3556
        %v3705 = vpack.c.b16 %v3559, %v3558
        %v3706 = vpack.c.b16 %v3561, %v3560
        %v3707 = vpack.c.b16 %v3563, %v3562
        %v3708 = vpack.c.b16 %v3565, %v3564
        %v3709 = vpack.c.b16 %v3567, %v3566
        %v3710 = vpack.c.b16 %v3569, %v3568
        %v3711 = vpack.c.b16 %v3571, %v3570
        %v3712 = vpack.c.b16 %v3573, %v3572
        %v3713 = vpack.c.b16 %v3575, %v3574
        %v3714 = vpack.c.b16 %v3577, %v3576
        %v3715 = vpack.c.b16 %v3579, %v3578
        %v3716 = vpack.c.b16 %v3581, %v3580
        %v3717 = vpack.c.b16 %v3583, %v3582
        %v3718 = vpack.c.b16 %v3585, %v3584
        %v3719 = vpack.c.b16 %v3587, %v3586
        %v3720 = vpack.c.b16 %v3589, %v3588
        %v3721 = vpack.c.b16 %v3591, %v3590
        %v3722 = vpack.c.b16 %v3593, %v3592
        %v3723 = vpack.c.b16 %v3595, %v3594
        %3852 = vmatpush.bf16.msra.mxu0 %v3603
        %3853 = vmatpush.bf16.msra.mxu0 %v3602
        %3854 = vmatpush.bf16.msra.mxu0 %v3601
        %3855 = vmatpush.bf16.msra.mxu0 %v3600
        %3856 = vmatpush.bf16.msra.mxu0 %v3599
        %3857 = vmatpush.bf16.msra.mxu0 %v3598
        %3858 = vmatpush.bf16.msra.mxu0 %v3597
        %3859 = vmatpush.bf16.msra.mxu0 %v3596
        %3860 = vmatmul.bf16.gmra.mxu0 %v2808
        %v3861 = vpop.f32.mrf.mxu0
        %v3862 = vadd.f32 %v3082, %v3861
        %v3863 = vpop.f32.mrf.mxu0
        %v3864 = vadd.f32 %v3082, %v3863
        %3865 = vdwg.mxu0
        %3866 = vmatpush.bf16.msra.mxu0 %v3611
        %3867 = vmatpush.bf16.msra.mxu0 %v3610
        %3868 = vmatpush.bf16.msra.mxu0 %v3609
        %3869 = vmatpush.bf16.msra.mxu0 %v3608
        %3870 = vmatpush.bf16.msra.mxu0 %v3607
        %3871 = vmatpush.bf16.msra.mxu0 %v3606
        %3872 = vmatpush.bf16.msra.mxu0 %v3605
        %3873 = vmatpush.bf16.msra.mxu0 %v3604
        %3874 = vmatmul.bf16.gmra.mxu0 %v2809
        %v3875 = vpop.f32.mrf.mxu0
        %v3876 = vadd.f32 %v3862, %v3875
        %v3877 = vpop.f32.mrf.mxu0
        %v3878 = vadd.f32 %v3864, %v3877
        %3879 = vdwg.mxu0
        %3880 = vmatpush.bf16.msra.mxu0 %v3619
        %3881 = vmatpush.bf16.msra.mxu0 %v3618
        %3882 = vmatpush.bf16.msra.mxu0 %v3617
        %3883 = vmatpush.bf16.msra.mxu0 %v3616
        %3884 = vmatpush.bf16.msra.mxu0 %v3615
        %3885 = vmatpush.bf16.msra.mxu0 %v3614
        %3886 = vmatpush.bf16.msra.mxu0 %v3613
        %3887 = vmatpush.bf16.msra.mxu0 %v3612
        %3888 = vmatmul.bf16.gmra.mxu0 %v2810
        %v3889 = vpop.f32.mrf.mxu0
        %v3890 = vadd.f32 %v3876, %v3889
        %v3891 = vpop.f32.mrf.mxu0
        %v3892 = vadd.f32 %v3878, %v3891
        %3893 = vdwg.mxu0
        %3894 = vmatpush.bf16.msra.mxu0 %v3627
        %3895 = vmatpush.bf16.msra.mxu0 %v3626
        %3896 = vmatpush.bf16.msra.mxu0 %v3625
        %3897 = vmatpush.bf16.msra.mxu0 %v3624
        %3898 = vmatpush.bf16.msra.mxu0 %v3623
        %3899 = vmatpush.bf16.msra.mxu0 %v3622
        %3900 = vmatpush.bf16.msra.mxu0 %v3621
        %3901 = vmatpush.bf16.msra.mxu0 %v3620
        %3902 = vmatmul.bf16.gmra.mxu0 %v2811
        %v3903 = vpop.f32.mrf.mxu0
        %v3904 = vadd.f32 %v3890, %v3903
        %v3905 = vpop.f32.mrf.mxu0
        %v3906 = vadd.f32 %v3892, %v3905
        %3907 = vdwg.mxu0
        %3908 = vmatpush.bf16.msra.mxu0 %v3635
        %3909 = vmatpush.bf16.msra.mxu0 %v3634
        %3910 = vmatpush.bf16.msra.mxu0 %v3633
        %3911 = vmatpush.bf16.msra.mxu0 %v3632
        %3912 = vmatpush.bf16.msra.mxu0 %v3631
        %3913 = vmatpush.bf16.msra.mxu0 %v3630
        %3914 = vmatpush.bf16.msra.mxu0 %v3629
        %3915 = vmatpush.bf16.msra.mxu0 %v3628
        %3916 = vmatmul.bf16.gmra.mxu0 %v2812
        %v3917 = vpop.f32.mrf.mxu0
        %v3918 = vadd.f32 %v3904, %v3917
        %v3919 = vpop.f32.mrf.mxu0
        %v3920 = vadd.f32 %v3906, %v3919
        %3921 = vdwg.mxu0
        %3922 = vmatpush.bf16.msra.mxu0 %v3643
        %3923 = vmatpush.bf16.msra.mxu0 %v3642
        %3924 = vmatpush.bf16.msra.mxu0 %v3641
        %3925 = vmatpush.bf16.msra.mxu0 %v3640
        %3926 = vmatpush.bf16.msra.mxu0 %v3639
        %3927 = vmatpush.bf16.msra.mxu0 %v3638
        %3928 = vmatpush.bf16.msra.mxu0 %v3637
        %3929 = vmatpush.bf16.msra.mxu0 %v3636
        %3930 = vmatmul.bf16.gmra.mxu0 %v2813
        %v3931 = vpop.f32.mrf.mxu0
        %v3932 = vadd.f32 %v3918, %v3931
        %v3933 = vpop.f32.mrf.mxu0
        %v3934 = vadd.f32 %v3920, %v3933
        %3935 = vdwg.mxu0
        %3936 = vmatpush.bf16.msra.mxu0 %v3651
        %3937 = vmatpush.bf16.msra.mxu0 %v3650
        %3938 = vmatpush.bf16.msra.mxu0 %v3649
        %3939 = vmatpush.bf16.msra.mxu0 %v3648
        %3940 = vmatpush.bf16.msra.mxu0 %v3647
        %3941 = vmatpush.bf16.msra.mxu0 %v3646
        %3942 = vmatpush.bf16.msra.mxu0 %v3645
        %3943 = vmatpush.bf16.msra.mxu0 %v3644
        %3944 = vmatmul.bf16.gmra.mxu0 %v2814
        %v3945 = vpop.f32.mrf.mxu0
        %v3946 = vadd.f32 %v3932, %v3945
        %v3947 = vpop.f32.mrf.mxu0
        %v3948 = vadd.f32 %v3934, %v3947
        %3949 = vdwg.mxu0
        %3950 = vmatpush.bf16.msra.mxu0 %v3659
        %3951 = vmatpush.bf16.msra.mxu0 %v3658
        %3952 = vmatpush.bf16.msra.mxu0 %v3657
        %3953 = vmatpush.bf16.msra.mxu0 %v3656
        %3954 = vmatpush.bf16.msra.mxu0 %v3655
        %3955 = vmatpush.bf16.msra.mxu0 %v3654
        %3956 = vmatpush.bf16.msra.mxu0 %v3653
        %3957 = vmatpush.bf16.msra.mxu0 %v3652
        %3958 = vmatmul.bf16.gmra.mxu0 %v2815
        %v3959 = vpop.f32.mrf.mxu0
        %v3960 = vadd.f32 %v3946, %v3959
        %v3961 = vpop.f32.mrf.mxu0
        %v3962 = vadd.f32 %v3948, %v3961
        %3963 = vdwg.mxu0
        %3964 = vmatpush.bf16.msra.mxu0 %v3667
        %3965 = vmatpush.bf16.msra.mxu0 %v3666
        %3966 = vmatpush.bf16.msra.mxu0 %v3665
        %3967 = vmatpush.bf16.msra.mxu0 %v3664
        %3968 = vmatpush.bf16.msra.mxu0 %v3663
        %3969 = vmatpush.bf16.msra.mxu0 %v3662
        %3970 = vmatpush.bf16.msra.mxu0 %v3661
        %3971 = vmatpush.bf16.msra.mxu0 %v3660
        %3972 = vmatmul.bf16.gmra.mxu0 %v2816
        %v3973 = vpop.f32.mrf.mxu0
        %v3974 = vadd.f32 %v3960, %v3973
        %v3975 = vpop.f32.mrf.mxu0
        %v3976 = vadd.f32 %v3962, %v3975
        %3977 = vdwg.mxu0
        %3978 = vmatpush.bf16.msra.mxu0 %v3675
        %3979 = vmatpush.bf16.msra.mxu0 %v3674
        %3980 = vmatpush.bf16.msra.mxu0 %v3673
        %3981 = vmatpush.bf16.msra.mxu0 %v3672
        %3982 = vmatpush.bf16.msra.mxu0 %v3671
        %3983 = vmatpush.bf16.msra.mxu0 %v3670
        %3984 = vmatpush.bf16.msra.mxu0 %v3669
        %3985 = vmatpush.bf16.msra.mxu0 %v3668
        %3986 = vmatmul.bf16.gmra.mxu0 %v2817
        %v3987 = vpop.f32.mrf.mxu0
        %v3988 = vadd.f32 %v3974, %v3987
        %v3989 = vpop.f32.mrf.mxu0
        %v3990 = vadd.f32 %v3976, %v3989
        %3991 = vdwg.mxu0
        %3992 = vmatpush.bf16.msra.mxu0 %v3683
        %3993 = vmatpush.bf16.msra.mxu0 %v3682
        %3994 = vmatpush.bf16.msra.mxu0 %v3681
        %3995 = vmatpush.bf16.msra.mxu0 %v3680
        %3996 = vmatpush.bf16.msra.mxu0 %v3679
        %3997 = vmatpush.bf16.msra.mxu0 %v3678
        %3998 = vmatpush.bf16.msra.mxu0 %v3677
        %3999 = vmatpush.bf16.msra.mxu0 %v3676
        %4000 = vmatmul.bf16.gmra.mxu0 %v2818
        %v4001 = vpop.f32.mrf.mxu0
        %v4002 = vadd.f32 %v3988, %v4001
        %v4003 = vpop.f32.mrf.mxu0
        %v4004 = vadd.f32 %v3990, %v4003
        %4005 = vdwg.mxu0
        %4006 = vmatpush.bf16.msra.mxu0 %v3691
        %4007 = vmatpush.bf16.msra.mxu0 %v3690
        %4008 = vmatpush.bf16.msra.mxu0 %v3689
        %4009 = vmatpush.bf16.msra.mxu0 %v3688
        %4010 = vmatpush.bf16.msra.mxu0 %v3687
        %4011 = vmatpush.bf16.msra.mxu0 %v3686
        %4012 = vmatpush.bf16.msra.mxu0 %v3685
        %4013 = vmatpush.bf16.msra.mxu0 %v3684
        %4014 = vmatmul.bf16.gmra.mxu0 %v2819
        %v4015 = vpop.f32.mrf.mxu0
        %v4016 = vadd.f32 %v4002, %v4015
        %v4017 = vpop.f32.mrf.mxu0
        %v4018 = vadd.f32 %v4004, %v4017
        %4019 = vdwg.mxu0
        %4020 = vmatpush.bf16.msra.mxu0 %v3699
        %4021 = vmatpush.bf16.msra.mxu0 %v3698
        %4022 = vmatpush.bf16.msra.mxu0 %v3697
        %4023 = vmatpush.bf16.msra.mxu0 %v3696
        %4024 = vmatpush.bf16.msra.mxu0 %v3695
        %4025 = vmatpush.bf16.msra.mxu0 %v3694
        %4026 = vmatpush.bf16.msra.mxu0 %v3693
        %4027 = vmatpush.bf16.msra.mxu0 %v3692
        %4028 = vmatmul.bf16.gmra.mxu0 %v2820
        %v4029 = vpop.f32.mrf.mxu0
        %v4030 = vadd.f32 %v4016, %v4029
        %v4031 = vpop.f32.mrf.mxu0
        %v4032 = vadd.f32 %v4018, %v4031
        %4033 = vdwg.mxu0
        %4034 = vmatpush.bf16.msra.mxu0 %v3707
        %4035 = vmatpush.bf16.msra.mxu0 %v3706
        %4036 = vmatpush.bf16.msra.mxu0 %v3705
        %4037 = vmatpush.bf16.msra.mxu0 %v3704
        %4038 = vmatpush.bf16.msra.mxu0 %v3703
        %4039 = vmatpush.bf16.msra.mxu0 %v3702
        %4040 = vmatpush.bf16.msra.mxu0 %v3701
        %4041 = vmatpush.bf16.msra.mxu0 %v3700
        %4042 = vmatmul.bf16.gmra.mxu0 %v2821
        %v4043 = vpop.f32.mrf.mxu0
        %v4044 = vadd.f32 %v4030, %v4043
        %v4045 = vpop.f32.mrf.mxu0
        %v4046 = vadd.f32 %v4032, %v4045
        %4047 = vdwg.mxu0
        %4048 = vmatpush.bf16.msra.mxu0 %v3715
        %4049 = vmatpush.bf16.msra.mxu0 %v3714
        %4050 = vmatpush.bf16.msra.mxu0 %v3713
        %4051 = vmatpush.bf16.msra.mxu0 %v3712
        %4052 = vmatpush.bf16.msra.mxu0 %v3711
        %4053 = vmatpush.bf16.msra.mxu0 %v3710
        %4054 = vmatpush.bf16.msra.mxu0 %v3709
        %4055 = vmatpush.bf16.msra.mxu0 %v3708
        %4056 = vmatmul.bf16.gmra.mxu0 %v2822
        %v4057 = vpop.f32.mrf.mxu0
        %v4058 = vadd.f32 %v4044, %v4057
        %v4059 = vpop.f32.mrf.mxu0
        %v4060 = vadd.f32 %v4046, %v4059
        %4061 = vdwg.mxu0
        %4062 = vmatpush.bf16.msra.mxu0 %v3723
        %4063 = vmatpush.bf16.msra.mxu0 %v3722
        %4064 = vmatpush.bf16.msra.mxu0 %v3721
        %4065 = vmatpush.bf16.msra.mxu0 %v3720
        %4066 = vmatpush.bf16.msra.mxu0 %v3719
        %4067 = vmatpush.bf16.msra.mxu0 %v3718
        %4068 = vmatpush.bf16.msra.mxu0 %v3717
        %4069 = vmatpush.bf16.msra.mxu0 %v3716
        %4070 = vmatmul.bf16.gmra.mxu0 %v2823
        %v4071 = vpop.f32.mrf.mxu0
        %v4072 = vadd.f32 %v4058, %v4071
        %v4073 = vpop.f32.mrf.mxu0
        %v4074 = vadd.f32 %v4060, %v4073
        %4075 = vdwg.mxu0
        %v4076 = vadd.f32 %v1745, %v4072
        %v4077 = vadd.f32 %v1746, %v4074
        %v4078 = vld [vmem:[%s834] sm:$0x1]
        %v4079 = vld [vmem:[%s837] sm:$0x1]
        %4080 = vadd.xlane.f32.xlu0 %v4076
        %v4081 = vpop.xlane.xlu0 %4080
        %4082 = vadd.xlane.f32.xlu0 %v4077
        %v4083 = vpop.xlane.xlu0 %4082
        %v4084 = vmul.f32 %v4081, %v1700
        %v4085 = vmul.f32 %v4083, %v1700
        %v4086 = vsub.f32 %v4076, %v4084
        %v4087 = vsub.f32 %v4077, %v4085
        %v4088 = vmul.f32 %v4086, %v4086
        %v4089 = vmul.f32 %v4087, %v4087
        %4090 = vadd.xlane.f32.xlu0 %v4088
        %v4091 = vpop.xlane.xlu0 %4090
        %4092 = vadd.xlane.f32.xlu0 %v4089
        %v4093 = vpop.xlane.xlu0 %4092
        %v4094 = vmul.f32 %v4091, %v1700
        %v4095 = vmul.f32 %v4093, %v1700
        %v4096 = vadd.f32 %v4094, 1e-05
        %v4097 = vadd.f32 %v4095, 1e-05
        %v4098 = vrsqrt.pop %v4096
        %v4099 = vmul.f32 %v4098, %v4096
        %v4100 = vmul.f32 %v4099, %v4098
        %v4101 = vmul.f32 0.5, %v4100
        %v4102 = vsub.f32 1.5, %v4101
        %v4103 = vmul.f32 %v4098, %v4102
        %vm4104 = vweird.f32 %v4096
        %vm4105 = vweird.f32 %v4098
        %vm4106 = vmor %vm4104, %vm4105
        %v4107 = vsel %vm4106, %v4098, %v4103
        %v4108 = vrsqrt.pop %v4097
        %v4109 = vmul.f32 %v4108, %v4097
        %v4110 = vmul.f32 %v4109, %v4108
        %v4111 = vmul.f32 0.5, %v4110
        %v4112 = vsub.f32 1.5, %v4111
        %v4113 = vmul.f32 %v4108, %v4112
        %vm4114 = vweird.f32 %v4097
        %vm4115 = vweird.f32 %v4108
        %vm4116 = vmor %vm4114, %vm4115
        %v4117 = vsel %vm4116, %v4108, %v4113
        %v4118 = vmul.f32 %v4086, %v4107
        %v4119 = vmul.f32 %v4087, %v4117
        %v4121 = vperm.slane %v4078, 0
        %v4123 = vmul.f32 %v4118, %v4121
        %v4124 = vmul.f32 %v4119, %v4121
        %v4126 = vperm.slane %v4079, 0
        %v4128 = vadd.f32 %v4123, %v4126
        %v4129 = vadd.f32 %v4124, %v4126
        %4130 = vst [vmem:[#allocation2] sm:$0xff] %v4128
        %4131 = vst [vmem:[#allocation2 + $0x8] sm:$0xff] %v4129
        %p4132 = scmp.eq.s32.totalorder %s47, 1
        // Predicated region
        $region121: #{tiny_transformer_forward.1} parent=79 // pred_check
          %p4133 = pneg %p4132
        $region122: #{tiny_transformer_forward.1} parent=79 // pred_check_branch
          %4135 = sbr.rel (%p4133) target = $region124
        $region123: #{tiny_transformer_forward.1} parent=79 // pred_region
          %v4136 = vpack.c.bf16 %v4129, %v4128
          %v4137 = vld [vmem:[#allocation17] sm:$0xf]
          %v4138 = vld [vmem:[#allocation17 + $0x4] sm:$0xf]
          %v4139 = vld [vmem:[#allocation17 + $0x8] sm:$0xf]
          %v4140 = vld [vmem:[#allocation17 + $0xc] sm:$0xf]
          %v4141 = vld [vmem:[#allocation17 + $0x10] sm:$0xf]
          %v4142 = vld [vmem:[#allocation17 + $0x14] sm:$0xf]
          %v4143 = vld [vmem:[#allocation17 + $0x18] sm:$0xf]
          %v4144 = vld [vmem:[#allocation17 + $0x1c] sm:$0xf]
          %v4145 = vld [vmem:[#allocation17 + $0x20] sm:$0xf]
          %v4146 = vld [vmem:[#allocation17 + $0x24] sm:$0xf]
          %v4147 = vld [vmem:[#allocation17 + $0x28] sm:$0xf]
          %v4148 = vld [vmem:[#allocation17 + $0x2c] sm:$0xf]
          %v4149 = vld [vmem:[#allocation17 + $0x30] sm:$0xf]
          %v4150 = vld [vmem:[#allocation17 + $0x34] sm:$0xf]
          %v4151 = vld [vmem:[#allocation17 + $0x38] sm:$0xf]
          %v4152 = vld [vmem:[#allocation17 + $0x3c] sm:$0xf]
          %v4153 = vld [vmem:[#allocation19] sm:$0x1]
          %v4155 = vperm.slane %v4153, 0
          %v4173 = vunpack.c.l.b16 %v4137
          %v4174 = vunpack.c.l.b16 %v4138
          %v4175 = vunpack.c.l.b16 %v4139
          %v4176 = vunpack.c.l.b16 %v4140
          %v4177 = vunpack.c.l.b16 %v4141
          %v4178 = vunpack.c.l.b16 %v4142
          %v4179 = vunpack.c.l.b16 %v4143
          %v4180 = vunpack.c.l.b16 %v4144
          %v4181 = vunpack.c.l.b16 %v4145
          %v4182 = vunpack.c.l.b16 %v4146
          %v4183 = vunpack.c.l.b16 %v4147
          %v4184 = vunpack.c.l.b16 %v4148
          %v4185 = vunpack.c.l.b16 %v4149
          %v4186 = vunpack.c.l.b16 %v4150
          %v4187 = vunpack.c.l.b16 %v4151
          %v4188 = vunpack.c.l.b16 %v4152
          %v4189 = vpack.c.b16 %v4174, %v4173
          %v4190 = vpack.c.b16 %v4176, %v4175
          %v4191 = vpack.c.b16 %v4178, %v4177
          %v4192 = vpack.c.b16 %v4180, %v4179
          %v4193 = vpack.c.b16 %v4182, %v4181
          %v4194 = vpack.c.b16 %v4184, %v4183
          %v4195 = vpack.c.b16 %v4186, %v4185
          %v4196 = vpack.c.b16 %v4188, %v4187
          %4205 = vmatpush.bf16.msra.mxu0 %v4196
          %4206 = vmatpush.bf16.msra.mxu0 %v4195
          %4207 = vmatpush.bf16.msra.mxu0 %v4194
          %4208 = vmatpush.bf16.msra.mxu0 %v4193
          %4209 = vmatpush.bf16.msra.mxu0 %v4192
          %4210 = vmatpush.bf16.msra.mxu0 %v4191
          %4211 = vmatpush.bf16.msra.mxu0 %v4190
          %4212 = vmatpush.bf16.msra.mxu0 %v4189
          %4213 = vmatmul.bf16.gmra.mxu0 %v4136
          %v4214 = vpop.f32.mrf.mxu0
          %v4215 = vadd.f32 %v4155, %v4214
          %v4216 = vpop.f32.mrf.mxu0
          %v4217 = vadd.f32 %v4155, %v4216
          %4218 = vdwg.mxu0
          %4219 = vst [vmem:[#allocation20] sm:$0xff] %v4215
          %4220 = vst [vmem:[#allocation20 + $0x8] sm:$0xff] %v4217
        $region124: #{tiny_transformer_forward.1} parent=79 // pred_fallthru
          _
        // Predicated region
        $region125: #{tiny_transformer_forward.1} parent=79 // pred_check
          %p4221 = pneg %p435
        $region126: #{tiny_transformer_forward.1} parent=79 // pred_check_branch
          %4223 = sbr.rel (%p4221) target = $region128
        $region127: #{tiny_transformer_forward.1} parent=79 // pred_region
          %4225 = vsyncadd [#allocation7], 0
          %s4226 = sshll.u32 [#allocation20], 4
          %s4227 = int_to_ptr.vmem [resolvable:$true] %s4226
          %s4228 = sshll.u32 %s16, 4
          %s4229 = int_to_ptr.hbm [resolvable:$true] %s4228
          %4234 = dma.vmem_to_hbm [thread:$0]  %s4227, 256, %s4229, [#allocation7], 128, 128, 8
        $region128: #{tiny_transformer_forward.1} parent=79 // pred_fallthru
          _
        // Predicated region
        $region129: #{tiny_transformer_forward.1} parent=79 // pred_check
          %p4235 = pneg %p435
        $region130: #{tiny_transformer_forward.1} parent=79 // pred_check_branch
          %4237 = sbr.rel (%p4235) target = $region132
        $region131: #{tiny_transformer_forward.1} parent=79 // pred_region
          %4239 = dma.done [#allocation7], 256
        $region132: #{tiny_transformer_forward.1} parent=79 // pred_fallthru
          _
      $region80: #{tiny_transformer_forward.1} parent=5 // pred_fallthru
        _
      %p4240 = scmp.le.s32.totalorder 2, %s42
      // Predicated region
      $region133: #{tiny_transformer_forward.1} parent=5 // pred_check
        %p4241 = pneg %p4240
      $region134: #{tiny_transformer_forward.1} parent=5 // pred_check_branch
        %4243 = sbr.rel (%p4241) target = $region136
      $region135: #{tiny_transformer_forward.1} parent=5 // pred_region
        %s4244 = ssub.s32 %s42, 2
      $region136: #{tiny_transformer_forward.1} parent=5 // pred_fallthru
        _
    $region6: #{tiny_transformer_forward.1} parent=1 // loop_footer
      %s46 = sadd.s32 1, %s42
    $region7: #{tiny_transformer_forward.1} parent=1 // loop_footer_branch
      %41 = sbr.rel target = $region3
    $region8: #{tiny_transformer_forward.1} parent=1 // loop_exit
      _
    %4245 = vsyncpa [#allocation6], 1
    %s4246 = scalar_lea.sflag [#allocation6], 1
    %4247 = vsyncpa %s4246, 1
    %4248 = vsyncpa [#allocation9], 1
    %s4249 = scalar_lea.sflag [#allocation9], 1
    %4250 = vsyncpa %s4249, 1
    %4251 = vsyncpa [#allocation12], 1
    %s4252 = scalar_lea.sflag [#allocation12], 1
    %4253 = vsyncpa %s4252, 1
    %4254 = vsyncpa [#allocation15], 1
    %s4255 = scalar_lea.sflag [#allocation15], 1
    %4256 = vsyncpa %s4255, 1
    %4257 = vsyncpa [#allocation18], 1
    %4258 = vsyncpa [#allocation7], 1
    %s4259 = scalar_lea.sflag [#allocation7], 1
    %4260 = vsyncpa %s4259, 1

</llo_original>
